<compile_context>
chip_gen: v5e
topology: v5e:2x2
jax: 0.10.0
libtpu: 0.0.40
codegen_flags: <defaults>
</compile_context>

<pallas_src>
import functools

import jax
import jax.numpy as jnp
from jax import lax
from jax.experimental import pallas as pl
from jax.experimental.pallas import tpu as pltpu


_TOPK_HI_BITS = 0x7F800001                   # just above the bit pattern of +inf
_TOPK_ITERS = _TOPK_HI_BITS.bit_length()     # 31 bisection steps reach hi == lo+1


def _per_scale_col(vals, dtype):
    """(n_scales, 1) column of per-scale compile-time constants.

    Built purely from staged ops (jnp.full / concatenate), never from a
    concrete Python-list array, so the kernel captures no array constants.
    """
    cols = [jnp.full((1, 1), v, dtype=dtype) for v in vals]
    return cols[0] if len(cols) == 1 else jnp.concatenate(cols, axis=0)


def _devnet_kernel(x_ref, w1_ref, b1_ref, w2_ref, b2_ref, out_ref, *,
                   hw_list, hw_pad_list, hw_max, k_list, cmid, chunk, topk_on):
    """Fused _DevNet forward for ONE sample (the grid is over the batch).

    x_ref  : (1, Cin, NS)  per-sample pyramid, scales packed along positions
                           (each scale zero-padded to a multiple of 128 lanes).
    w1_ref : (Cmid, Cin)   backbone stand-in 1x1-conv weight.
    b1_ref : (Cmid, 1)     backbone stand-in bias.
    w2_ref : (1, Cmid)     scoring conv weight (nn.Conv2d(512, 1, 1)) as a row.
    b2_ref : (1, 1)        scoring conv bias.
    out_ref: (1, 1, 128)   per-sample score, broadcast across 128 lanes.
    """
    n_scales = len(hw_list)
    x = x_ref[0]                                        # (Cin, NS), lane-dense

    # Backbone stand-in (1x1 conv + ReLU) fused with the 512->1 scoring head,
    # chunked over Cmid so the (Cmid, NS) feature map never materializes.
    # Both matmuls run on the MXU with f32 accumulation.
    srow = None
    for c0 in range(0, cmid, chunk):
        w1c = w1_ref[pl.ds(c0, chunk), :]               # (chunk, Cin)
        b1c = b1_ref[pl.ds(c0, chunk), :]               # (chunk, 1)
        feat = jnp.maximum(
            jnp.dot(w1c, x, preferred_element_type=jnp.float32) + b1c, 0.0)
        part = jnp.dot(w2_ref[:, pl.ds(c0, chunk)], feat,
                       preferred_element_type=jnp.float32)      # (1, NS)
        srow = part if srow is None else srow + part
    srow = srow + b2_ref[0, 0]                          # (1, NS) scores

    # One score row per scale, lane-padded to hw_max (padding is masked below,
    # so its value is irrelevant).  All slices start at multiples of 128.
    rows, off = [], 0
    for s in range(n_scales):
        hp = hw_pad_list[s]
        r = srow[:, off:off + hp]
        if hp < hw_max:
            r = jnp.concatenate(
                [r, jnp.zeros((1, hw_max - hp), jnp.float32)], axis=1)
        rows.append(r)
        off += hp
    S = rows[0] if n_scales == 1 else jnp.concatenate(rows, axis=0)  # (n_scales, hw_max)

    lane = lax.broadcasted_iota(jnp.int32, (n_scales, hw_max), 1)
    hw_col = _per_scale_col(hw_list, jnp.int32)          # true (unpadded) hw per scale
    valid = lane < hw_col

    if topk_on:
        # Exact mean of the top-k |scores| per scale via threshold bisection on
        # the f32 bit pattern (order-isomorphic to the value for non-negative
        # floats): _TOPK_ITERS iterations x ONE batched lane reduction each.
        k_f = _per_scale_col([float(k) for k in k_list], jnp.float32)
        a = jnp.where(valid, jnp.abs(S), -1.0)           # invalid lanes < any |score|
        a_bits = lax.bitcast_convert_type(a, jnp.int32)

        lo0 = jnp.zeros((n_scales, 1), jnp.int32)        # bits of +0.0
        hi0 = jnp.full((n_scales, 1), _TOPK_HI_BITS, jnp.int32)

        def body(_, carry):
            lo, hi = carry
            mid = lo + ((hi - lo) >> 1)
            cnt = jnp.sum(jnp.where(a_bits >= mid, 1.0, 0.0),
                          axis=-1, keepdims=True)        # |{a >= mid}| per scale
            take = cnt >= k_f                            # kth largest is >= mid
            return jnp.where(take, mid, lo), jnp.where(take, hi, mid)

        lo, _ = lax.fori_loop(0, _TOPK_ITERS, body, (lo0, hi0), unroll=True)
        thr = lax.bitcast_convert_type(lo, jnp.float32)  # kth largest |score|
        gt = a > thr
        cnt_gt = jnp.sum(jnp.where(gt, 1.0, 0.0), axis=-1, keepdims=True)
        sum_gt = jnp.sum(jnp.where(gt, a, 0.0), axis=-1, keepdims=True)
        per_scale = (sum_gt + (k_f - cnt_gt) * thr) / k_f        # (n_scales, 1)
    else:
        hw_f = _per_scale_col([float(h) for h in hw_list], jnp.float32)
        per_scale = jnp.sum(jnp.where(valid, S, 0.0),
                            axis=-1, keepdims=True) / hw_f

    # Mean over scales -> one scalar for this sample, stored lane-broadcast.
    score = jnp.sum(per_scale, axis=0, keepdims=True) * jnp.float32(1.0 / n_scales)
    out_ref[...] = jnp.broadcast_to(score.reshape(1, 1, 1), (1, 1, 128))


def _round_up(n, m):
    return ((n + m - 1) // m) * m


def _nearest_resize_nchw(img, out_size):
    """F.interpolate(img, size=out_size) with default mode='nearest' (NCHW)."""
    _, _, H, W = img.shape
    if H % out_size == 0 and W % out_size == 0:
        # Power-of-2 (or integer) downscale: cheap strided slice, no gathers.
        return img[:, :, ::H // out_size, ::W // out_size]
    ih = (jnp.arange(out_size) * H) // out_size
    iw = (jnp.arange(out_size) * W) // out_size
    return img[:, :, ih, :][:, :, :, iw]


def devnet_forward(image_nchw, params, *, n_scales, img_size, topk_frac):
    """Mirror of _DevNet.forward as one fused pallas_call, gridded over batch."""
    if n_scales == 0:
        raise ValueError
    w1, b1, w2, b2 = params
    B, C, H, W = image_nchw.shape
    Cmid = w1.shape[1]

    # Per-scale images packed channel-major into one lane-aligned slab per
    # sample: (B, Cin, NS) with NS = sum_s round_up(hw_s, 128).
    parts, hw_list, hw_pad_list = [], [], []
    for s in range(n_scales):
        img_s = image_nchw if s == 0 else _nearest_resize_nchw(
            image_nchw, img_size // (2 ** s))
        hw = img_s.shape[2] * img_s.shape[3]
        hw_pad = _round_up(hw, 128)
        xs = img_s.reshape(B, C, hw).astype(jnp.float32)
        if hw_pad > hw:
            xs = jnp.pad(xs, ((0, 0), (0, 0), (0, hw_pad - hw)))
        parts.append(xs)
        hw_list.append(hw)
        hw_pad_list.append(hw_pad)
    x_packed = parts[0] if n_scales == 1 else jnp.concatenate(parts, axis=2)
    ns_cols = x_packed.shape[2]
    hw_max = max(hw_pad_list)

    w1_t = jnp.asarray(w1, jnp.float32).T               # (Cmid, Cin)
    b1_c = jnp.asarray(b1, jnp.float32).reshape(Cmid, 1)
    w2_r = jnp.asarray(w2, jnp.float32).reshape(1, Cmid)
    b2_s = jnp.asarray(b2, jnp.float32).reshape(1, 1)

    topk_on = topk_frac > 0
    # Same k as torch (max(int(hw*topk), 1)), clamped to hw for robustness.
    k_list = ([min(max(int(hw * topk_frac), 1), hw) for hw in hw_list]
              if topk_on else [0] * n_scales)
    chunk = 128 if Cmid % 128 == 0 else Cmid

    kernel = functools.partial(
        _devnet_kernel, hw_list=tuple(hw_list), hw_pad_list=tuple(hw_pad_list),
        hw_max=hw_max, k_list=tuple(k_list), cmid=Cmid, chunk=chunk,
        topk_on=topk_on)

    out = pl.pallas_call(
        kernel,
        out_shape=jax.ShapeDtypeStruct((B, 1, 128), jnp.float32),
        grid=(B,),
        in_specs=[
            pl.BlockSpec((1, C, ns_cols), lambda b: (b, 0, 0)),   # per-sample slab
            pl.BlockSpec((Cmid, C), lambda b: (0, 0)),            # resident weights
            pl.BlockSpec((Cmid, 1), lambda b: (0, 0)),
            pl.BlockSpec((1, Cmid), lambda b: (0, 0)),
            pl.BlockSpec((1, 1), lambda b: (0, 0)),
        ],
        out_specs=pl.BlockSpec((1, 1, 128), lambda b: (b, 0, 0)),
        compiler_params=pltpu.CompilerParams(
            dimension_semantics=("parallel",)),     # v7x: 2 TCs split the batch
    )(x_packed, w1_t, b1_c, w2_r, b2_s)
    return out[:, 0, :1]                            # (B, 1)


def _devnet_reference(image_nchw, params, *, n_scales, img_size, topk_frac):
    """Pure-JAX reference of the same forward pass (correctness check)."""
    w1, b1, w2, b2 = params
    B = image_nchw.shape[0]
    per_scale = []
    for s in range(n_scales):
        img_s = image_nchw if s == 0 else _nearest_resize_nchw(
            image_nchw, img_size // (2 ** s))
        x = jnp.transpose(img_s, (0, 2, 3, 1))                   # NHWC
        feat = jnp.maximum(
            jnp.einsum('bhwc,cm->bhwm', x, w1,
                       precision=jax.lax.Precision.HIGHEST)
            + b1.reshape(1, 1, 1, -1), 0.0)
        sc = jnp.einsum('bhwm,mo->bhwo', feat, w2,
                        precision=jax.lax.Precision.HIGHEST) + b2[0, 0]
        sc = sc.reshape(B, -1)
        hw = sc.shape[1]
        if topk_frac > 0:
            k = max(int(hw * topk_frac), 1)
            vals, _ = jax.lax.top_k(jnp.abs(sc), k)
            per_scale.append(jnp.mean(vals, axis=1, keepdims=True))
        else:
            per_scale.append(jnp.mean(sc, axis=1, keepdims=True))
    scores = jnp.concatenate(per_scale, axis=1)
    return jnp.mean(scores, axis=1, keepdims=True)


if __name__ == "__main__":
    # args: _n_scales=2, _img_size=16, _topk=0.1
    B, Cin, H = 2, 4, 16
    Cmid = 512
    n_scales, img_size, topk_frac = 2, 16, 0.1

    key = jax.random.PRNGKey(0)
    k_img, k_w1, k_b1, k_w2, k_b2 = jax.random.split(key, 5)
    image = jax.random.normal(k_img, (B, Cin, H, H), dtype=jnp.float32)

    # Deterministic synthetic parameters.
    w1 = jax.random.normal(k_w1, (Cin, Cmid), dtype=jnp.float32) * 0.1   # backbone stand-in
    b1 = jax.random.normal(k_b1, (1, Cmid), dtype=jnp.float32) * 0.1
    w2 = jax.random.normal(k_w2, (Cmid, 1), dtype=jnp.float32) * 0.05    # Conv2d(512,1,1) weight
    b2 = jax.random.normal(k_b2, (1, 1), dtype=jnp.float32) * 0.05       # Conv2d(512,1,1) bias
    params = (w1, b1, w2, b2)

    out = devnet_forward(image, params, n_scales=n_scales,
                         img_size=img_size, topk_frac=topk_frac)
    out = jax.block_until_ready(out)
    assert out.shape == (B, 1) and out.dtype == jnp.float32

    ref = _devnet_reference(image, params, n_scales=n_scales,
                            img_size=img_size, topk_frac=topk_frac)
    ref = jax.block_until_ready(ref)
    # Tolerance covers the in-kernel MXU f32 matmul (hardware-default precision)
    # vs the HIGHEST-precision reference.
    assert jnp.allclose(out, ref, rtol=2e-3, atol=2e-3), (out, ref)
    print("KERNEL_OK")
</pallas_src>

<mosaic_0001>
module attributes {stable_mosaic.version = 11 : i64} {
  func.func @_devnet_kernel(%arg0: i32, %arg1: memref<1x4x384xf32, #tpu.memory_space<vmem>>, %arg2: memref<512x4xf32, #tpu.memory_space<vmem>>, %arg3: memref<512x1xf32, #tpu.memory_space<vmem>>, %arg4: memref<1x512xf32, #tpu.memory_space<vmem>>, %arg5: memref<1x1xf32, #tpu.memory_space<vmem>>, %arg6: memref<1x1x128xf32, #tpu.memory_space<vmem>>) attributes {dimension_semantics = [#tpu.dimension_semantics<parallel>], iteration_bounds = array<i64: 2>, scalar_prefetch = 0 : i64, scratch_operands = 0 : i64, tpu.core_type = #tpu.core_type<tc>, window_params = [{transform_indices = @transform_0, window_bounds = array<i64: 1, 4, 384>}, {pipeline_mode = #tpu.pipeline_mode<synchronous>, transform_indices = @transform_1, window_bounds = array<i64: 512, 4>}, {pipeline_mode = #tpu.pipeline_mode<synchronous>, transform_indices = @transform_2, window_bounds = array<i64: 512, 1>}, {pipeline_mode = #tpu.pipeline_mode<synchronous>, transform_indices = @transform_3, window_bounds = array<i64: 1, 512>}, {pipeline_mode = #tpu.pipeline_mode<synchronous>, transform_indices = @transform_4, window_bounds = array<i64: 1, 1>}, {transform_indices = @transform_5, window_bounds = array<i64: 1, 1, 128>}]} {
    %c0 = arith.constant 0 : index
    %c0_0 = arith.constant 0 : index
    %c0_1 = arith.constant 0 : index
    %0 = vector.load %arg1[%c0, %c0_0, %c0_1] : memref<1x4x384xf32, #tpu.memory_space<vmem>>, vector<1x4x384xf32>
    %1 = vector.shape_cast %0 : vector<1x4x384xf32> to vector<4x384xf32>
    %c0_2 = arith.constant 0 : index
    %c0_3 = arith.constant 0 : index
    %2 = vector.load %arg2[%c0_2, %c0_3] : memref<512x4xf32, #tpu.memory_space<vmem>>, vector<128x4xf32>
    %c0_4 = arith.constant 0 : index
    %c0_5 = arith.constant 0 : index
    %3 = vector.load %arg3[%c0_4, %c0_5] : memref<512x1xf32, #tpu.memory_space<vmem>>, vector<128x1xf32>
    %cst = arith.constant dense<0.000000e+00> : vector<128x384xf32>
    %4 = tpu.matmul %2, %1, %cst {dimension_numbers = #tpu.dot_dimension_numbers<[1], [0], [0], [1], [0, 0, 1, 1], [], []>} : vector<128x4xf32>, vector<4x384xf32>, vector<128x384xf32> -> vector<128x384xf32>
    %5 = vector.broadcast %3 : vector<128x1xf32> to vector<128x384xf32>
    %6 = arith.addf %4, %5 : vector<128x384xf32>
    %cst_6 = arith.constant 0.000000e+00 : f32
    %7 = vector.broadcast %cst_6 : f32 to vector<128x384xf32>
    %8 = arith.maximumf %6, %7 : vector<128x384xf32>
    %c0_7 = arith.constant 0 : index
    %c0_8 = arith.constant 0 : index
    %9 = vector.load %arg4[%c0_7, %c0_8] : memref<1x512xf32, #tpu.memory_space<vmem>>, vector<1x128xf32>
    %cst_9 = arith.constant dense<0.000000e+00> : vector<1x384xf32>
    %10 = tpu.matmul %9, %8, %cst_9 {dimension_numbers = #tpu.dot_dimension_numbers<[1], [0], [0], [1], [0, 0, 1, 1], [], []>} : vector<1x128xf32>, vector<128x384xf32>, vector<1x384xf32> -> vector<1x384xf32>
    %c128 = arith.constant 128 : index
    %c0_10 = arith.constant 0 : index
    %11 = vector.load %arg2[%c128, %c0_10] : memref<512x4xf32, #tpu.memory_space<vmem>>, vector<128x4xf32>
    %c128_11 = arith.constant 128 : index
    %c0_12 = arith.constant 0 : index
    %12 = vector.load %arg3[%c128_11, %c0_12] : memref<512x1xf32, #tpu.memory_space<vmem>>, vector<128x1xf32>
    %cst_13 = arith.constant dense<0.000000e+00> : vector<128x384xf32>
    %13 = tpu.matmul %11, %1, %cst_13 {dimension_numbers = #tpu.dot_dimension_numbers<[1], [0], [0], [1], [0, 0, 1, 1], [], []>} : vector<128x4xf32>, vector<4x384xf32>, vector<128x384xf32> -> vector<128x384xf32>
    %14 = vector.broadcast %12 : vector<128x1xf32> to vector<128x384xf32>
    %15 = arith.addf %13, %14 : vector<128x384xf32>
    %cst_14 = arith.constant 0.000000e+00 : f32
    %16 = vector.broadcast %cst_14 : f32 to vector<128x384xf32>
    %17 = arith.maximumf %15, %16 : vector<128x384xf32>
    %c0_15 = arith.constant 0 : index
    %c128_16 = arith.constant 128 : index
    %18 = vector.load %arg4[%c0_15, %c128_16] : memref<1x512xf32, #tpu.memory_space<vmem>>, vector<1x128xf32>
    %cst_17 = arith.constant dense<0.000000e+00> : vector<1x384xf32>
    %19 = tpu.matmul %18, %17, %cst_17 {dimension_numbers = #tpu.dot_dimension_numbers<[1], [0], [0], [1], [0, 0, 1, 1], [], []>} : vector<1x128xf32>, vector<128x384xf32>, vector<1x384xf32> -> vector<1x384xf32>
    %20 = arith.addf %10, %19 : vector<1x384xf32>
    %c256 = arith.constant 256 : index
    %c0_18 = arith.constant 0 : index
    %21 = vector.load %arg2[%c256, %c0_18] : memref<512x4xf32, #tpu.memory_space<vmem>>, vector<128x4xf32>
    %c256_19 = arith.constant 256 : index
    %c0_20 = arith.constant 0 : index
    %22 = vector.load %arg3[%c256_19, %c0_20] : memref<512x1xf32, #tpu.memory_space<vmem>>, vector<128x1xf32>
    %cst_21 = arith.constant dense<0.000000e+00> : vector<128x384xf32>
    %23 = tpu.matmul %21, %1, %cst_21 {dimension_numbers = #tpu.dot_dimension_numbers<[1], [0], [0], [1], [0, 0, 1, 1], [], []>} : vector<128x4xf32>, vector<4x384xf32>, vector<128x384xf32> -> vector<128x384xf32>
    %24 = vector.broadcast %22 : vector<128x1xf32> to vector<128x384xf32>
    %25 = arith.addf %23, %24 : vector<128x384xf32>
    %cst_22 = arith.constant 0.000000e+00 : f32
    %26 = vector.broadcast %cst_22 : f32 to vector<128x384xf32>
    %27 = arith.maximumf %25, %26 : vector<128x384xf32>
    %c0_23 = arith.constant 0 : index
    %c256_24 = arith.constant 256 : index
    %28 = vector.load %arg4[%c0_23, %c256_24] : memref<1x512xf32, #tpu.memory_space<vmem>>, vector<1x128xf32>
    %cst_25 = arith.constant dense<0.000000e+00> : vector<1x384xf32>
    %29 = tpu.matmul %28, %27, %cst_25 {dimension_numbers = #tpu.dot_dimension_numbers<[1], [0], [0], [1], [0, 0, 1, 1], [], []>} : vector<1x128xf32>, vector<128x384xf32>, vector<1x384xf32> -> vector<1x384xf32>
    %30 = arith.addf %20, %29 : vector<1x384xf32>
    %c384 = arith.constant 384 : index
    %c0_26 = arith.constant 0 : index
    %31 = vector.load %arg2[%c384, %c0_26] : memref<512x4xf32, #tpu.memory_space<vmem>>, vector<128x4xf32>
    %c384_27 = arith.constant 384 : index
    %c0_28 = arith.constant 0 : index
    %32 = vector.load %arg3[%c384_27, %c0_28] : memref<512x1xf32, #tpu.memory_space<vmem>>, vector<128x1xf32>
    %cst_29 = arith.constant dense<0.000000e+00> : vector<128x384xf32>
    %33 = tpu.matmul %31, %1, %cst_29 {dimension_numbers = #tpu.dot_dimension_numbers<[1], [0], [0], [1], [0, 0, 1, 1], [], []>} : vector<128x4xf32>, vector<4x384xf32>, vector<128x384xf32> -> vector<128x384xf32>
    %34 = vector.broadcast %32 : vector<128x1xf32> to vector<128x384xf32>
    %35 = arith.addf %33, %34 : vector<128x384xf32>
    %cst_30 = arith.constant 0.000000e+00 : f32
    %36 = vector.broadcast %cst_30 : f32 to vector<128x384xf32>
    %37 = arith.maximumf %35, %36 : vector<128x384xf32>
    %c0_31 = arith.constant 0 : index
    %c384_32 = arith.constant 384 : index
    %38 = vector.load %arg4[%c0_31, %c384_32] : memref<1x512xf32, #tpu.memory_space<vmem>>, vector<1x128xf32>
    %cst_33 = arith.constant dense<0.000000e+00> : vector<1x384xf32>
    %39 = tpu.matmul %38, %37, %cst_33 {dimension_numbers = #tpu.dot_dimension_numbers<[1], [0], [0], [1], [0, 0, 1, 1], [], []>} : vector<1x128xf32>, vector<128x384xf32>, vector<1x384xf32> -> vector<1x384xf32>
    %40 = arith.addf %30, %39 : vector<1x384xf32>
    %c0_34 = arith.constant 0 : index
    %c0_35 = arith.constant 0 : index
    %41 = vector.load %arg5[%c0_34, %c0_35] : memref<1x1xf32, #tpu.memory_space<vmem>>, vector<1x1xf32>
    %42 = vector.extract %41[0, 0] : f32 from vector<1x1xf32>
    %43 = vector.broadcast %42 : f32 to vector<1x384xf32>
    %44 = arith.addf %40, %43 : vector<1x384xf32>
    %45 = vector.extract_strided_slice %44 {offsets = [0, 0], sizes = [1, 256], strides = [1, 1]} : vector<1x384xf32> to vector<1x256xf32>
    %46 = vector.extract_strided_slice %44 {offsets = [0, 256], sizes = [1, 128], strides = [1, 1]} : vector<1x384xf32> to vector<1x128xf32>
    %cst_36 = arith.constant 0.000000e+00 : f32
    %47 = vector.broadcast %cst_36 : f32 to vector<1x128xf32>
    %48 = tpu.concatenate %46, %47 in 1 : vector<1x128xf32>, vector<1x128xf32> -> vector<1x256xf32>
    %49 = tpu.concatenate %45, %48 in 0 : vector<1x256xf32>, vector<1x256xf32> -> vector<2x256xf32>
    %50 = tpu.iota {dimensions = array<i32: 1>} : vector<2x256xi32>
    %c256_i32 = arith.constant 256 : i32
    %51 = vector.broadcast %c256_i32 : i32 to vector<1x1xi32>
    %c64_i32 = arith.constant 64 : i32
    %52 = vector.broadcast %c64_i32 : i32 to vector<1x1xi32>
    %53 = tpu.concatenate %51, %52 in 0 : vector<1x1xi32>, vector<1x1xi32> -> vector<2x1xi32>
    %54 = vector.broadcast %53 : vector<2x1xi32> to vector<2x256xi32>
    %55 = arith.cmpi slt, %50, %54 : vector<2x256xi32>
    %cst_37 = arith.constant 2.500000e+01 : f32
    %56 = vector.broadcast %cst_37 : f32 to vector<1x1xf32>
    %cst_38 = arith.constant 6.000000e+00 : f32
    %57 = vector.broadcast %cst_38 : f32 to vector<1x1xf32>
    %58 = tpu.concatenate %56, %57 in 0 : vector<1x1xf32>, vector<1x1xf32> -> vector<2x1xf32>
    %59 = math.absf %49 : vector<2x256xf32>
    %cst_39 = arith.constant -1.000000e+00 : f32
    %60 = vector.broadcast %cst_39 : f32 to vector<2x256xf32>
    %61 = arith.select %55, %59, %60 : vector<2x256xi1>, vector<2x256xf32>
    %62 = tpu.bitcast %61 : vector<2x256xf32> -> vector<2x256xi32>
    %c0_i32 = arith.constant 0 : i32
    %63 = vector.broadcast %c0_i32 : i32 to vector<2x1xi32>
    %c2139095041_i32 = arith.constant 2139095041 : i32
    %64 = vector.broadcast %c2139095041_i32 : i32 to vector<2x1xi32>
    %c0_i32_40 = arith.constant 0 : i32
    %65 = arith.subi %64, %63 : vector<2x1xi32>
    %c1_i32 = arith.constant 1 : i32
    %66 = vector.broadcast %c1_i32 : i32 to vector<2x1xi32>
    %67 = arith.shrsi %65, %66 : vector<2x1xi32>
    %68 = arith.addi %63, %67 : vector<2x1xi32>
    %69 = vector.broadcast %68 : vector<2x1xi32> to vector<2x256xi32>
    %70 = arith.cmpi sge, %62, %69 : vector<2x256xi32>
    %cst_41 = arith.constant 1.000000e+00 : f32
    %cst_42 = arith.constant 0.000000e+00 : f32
    %71 = vector.broadcast %cst_41 : f32 to vector<2x256xf32>
    %72 = vector.broadcast %cst_42 : f32 to vector<2x256xf32>
    %73 = arith.select %70, %71, %72 : vector<2x256xi1>, vector<2x256xf32>
    %cst_43 = arith.constant dense<0.000000e+00> : vector<2xf32>
    %74 = vector.multi_reduction <add>, %73, %cst_43 [1] : vector<2x256xf32> to vector<2xf32>
    %75 = vector.shape_cast %74 : vector<2xf32> to vector<2x1xf32>
    %76 = arith.cmpf oge, %75, %58 : vector<2x1xf32>
    %77 = arith.select %76, %68, %63 : vector<2x1xi1>, vector<2x1xi32>
    %78 = arith.select %76, %64, %68 : vector<2x1xi1>, vector<2x1xi32>
    %c1_i32_44 = arith.constant 1 : i32
    %79 = arith.subi %78, %77 : vector<2x1xi32>
    %c1_i32_45 = arith.constant 1 : i32
    %80 = vector.broadcast %c1_i32_45 : i32 to vector<2x1xi32>
    %81 = arith.shrsi %79, %80 : vector<2x1xi32>
    %82 = arith.addi %77, %81 : vector<2x1xi32>
    %83 = vector.broadcast %82 : vector<2x1xi32> to vector<2x256xi32>
    %84 = arith.cmpi sge, %62, %83 : vector<2x256xi32>
    %cst_46 = arith.constant 1.000000e+00 : f32
    %cst_47 = arith.constant 0.000000e+00 : f32
    %85 = vector.broadcast %cst_46 : f32 to vector<2x256xf32>
    %86 = vector.broadcast %cst_47 : f32 to vector<2x256xf32>
    %87 = arith.select %84, %85, %86 : vector<2x256xi1>, vector<2x256xf32>
    %cst_48 = arith.constant dense<0.000000e+00> : vector<2xf32>
    %88 = vector.multi_reduction <add>, %87, %cst_48 [1] : vector<2x256xf32> to vector<2xf32>
    %89 = vector.shape_cast %88 : vector<2xf32> to vector<2x1xf32>
    %90 = arith.cmpf oge, %89, %58 : vector<2x1xf32>
    %91 = arith.select %90, %82, %77 : vector<2x1xi1>, vector<2x1xi32>
    %92 = arith.select %90, %78, %82 : vector<2x1xi1>, vector<2x1xi32>
    %c2_i32 = arith.constant 2 : i32
    %93 = arith.subi %92, %91 : vector<2x1xi32>
    %c1_i32_49 = arith.constant 1 : i32
    %94 = vector.broadcast %c1_i32_49 : i32 to vector<2x1xi32>
    %95 = arith.shrsi %93, %94 : vector<2x1xi32>
    %96 = arith.addi %91, %95 : vector<2x1xi32>
    %97 = vector.broadcast %96 : vector<2x1xi32> to vector<2x256xi32>
    %98 = arith.cmpi sge, %62, %97 : vector<2x256xi32>
    %cst_50 = arith.constant 1.000000e+00 : f32
    %cst_51 = arith.constant 0.000000e+00 : f32
    %99 = vector.broadcast %cst_50 : f32 to vector<2x256xf32>
    %100 = vector.broadcast %cst_51 : f32 to vector<2x256xf32>
    %101 = arith.select %98, %99, %100 : vector<2x256xi1>, vector<2x256xf32>
    %cst_52 = arith.constant dense<0.000000e+00> : vector<2xf32>
    %102 = vector.multi_reduction <add>, %101, %cst_52 [1] : vector<2x256xf32> to vector<2xf32>
    %103 = vector.shape_cast %102 : vector<2xf32> to vector<2x1xf32>
    %104 = arith.cmpf oge, %103, %58 : vector<2x1xf32>
    %105 = arith.select %104, %96, %91 : vector<2x1xi1>, vector<2x1xi32>
    %106 = arith.select %104, %92, %96 : vector<2x1xi1>, vector<2x1xi32>
    %c3_i32 = arith.constant 3 : i32
    %107 = arith.subi %106, %105 : vector<2x1xi32>
    %c1_i32_53 = arith.constant 1 : i32
    %108 = vector.broadcast %c1_i32_53 : i32 to vector<2x1xi32>
    %109 = arith.shrsi %107, %108 : vector<2x1xi32>
    %110 = arith.addi %105, %109 : vector<2x1xi32>
    %111 = vector.broadcast %110 : vector<2x1xi32> to vector<2x256xi32>
    %112 = arith.cmpi sge, %62, %111 : vector<2x256xi32>
    %cst_54 = arith.constant 1.000000e+00 : f32
    %cst_55 = arith.constant 0.000000e+00 : f32
    %113 = vector.broadcast %cst_54 : f32 to vector<2x256xf32>
    %114 = vector.broadcast %cst_55 : f32 to vector<2x256xf32>
    %115 = arith.select %112, %113, %114 : vector<2x256xi1>, vector<2x256xf32>
    %cst_56 = arith.constant dense<0.000000e+00> : vector<2xf32>
    %116 = vector.multi_reduction <add>, %115, %cst_56 [1] : vector<2x256xf32> to vector<2xf32>
    %117 = vector.shape_cast %116 : vector<2xf32> to vector<2x1xf32>
    %118 = arith.cmpf oge, %117, %58 : vector<2x1xf32>
    %119 = arith.select %118, %110, %105 : vector<2x1xi1>, vector<2x1xi32>
    %120 = arith.select %118, %106, %110 : vector<2x1xi1>, vector<2x1xi32>
    %c4_i32 = arith.constant 4 : i32
    %121 = arith.subi %120, %119 : vector<2x1xi32>
    %c1_i32_57 = arith.constant 1 : i32
    %122 = vector.broadcast %c1_i32_57 : i32 to vector<2x1xi32>
    %123 = arith.shrsi %121, %122 : vector<2x1xi32>
    %124 = arith.addi %119, %123 : vector<2x1xi32>
    %125 = vector.broadcast %124 : vector<2x1xi32> to vector<2x256xi32>
    %126 = arith.cmpi sge, %62, %125 : vector<2x256xi32>
    %cst_58 = arith.constant 1.000000e+00 : f32
    %cst_59 = arith.constant 0.000000e+00 : f32
    %127 = vector.broadcast %cst_58 : f32 to vector<2x256xf32>
    %128 = vector.broadcast %cst_59 : f32 to vector<2x256xf32>
    %129 = arith.select %126, %127, %128 : vector<2x256xi1>, vector<2x256xf32>
    %cst_60 = arith.constant dense<0.000000e+00> : vector<2xf32>
    %130 = vector.multi_reduction <add>, %129, %cst_60 [1] : vector<2x256xf32> to vector<2xf32>
    %131 = vector.shape_cast %130 : vector<2xf32> to vector<2x1xf32>
    %132 = arith.cmpf oge, %131, %58 : vector<2x1xf32>
    %133 = arith.select %132, %124, %119 : vector<2x1xi1>, vector<2x1xi32>
    %134 = arith.select %132, %120, %124 : vector<2x1xi1>, vector<2x1xi32>
    %c5_i32 = arith.constant 5 : i32
    %135 = arith.subi %134, %133 : vector<2x1xi32>
    %c1_i32_61 = arith.constant 1 : i32
    %136 = vector.broadcast %c1_i32_61 : i32 to vector<2x1xi32>
    %137 = arith.shrsi %135, %136 : vector<2x1xi32>
    %138 = arith.addi %133, %137 : vector<2x1xi32>
    %139 = vector.broadcast %138 : vector<2x1xi32> to vector<2x256xi32>
    %140 = arith.cmpi sge, %62, %139 : vector<2x256xi32>
    %cst_62 = arith.constant 1.000000e+00 : f32
    %cst_63 = arith.constant 0.000000e+00 : f32
    %141 = vector.broadcast %cst_62 : f32 to vector<2x256xf32>
    %142 = vector.broadcast %cst_63 : f32 to vector<2x256xf32>
    %143 = arith.select %140, %141, %142 : vector<2x256xi1>, vector<2x256xf32>
    %cst_64 = arith.constant dense<0.000000e+00> : vector<2xf32>
    %144 = vector.multi_reduction <add>, %143, %cst_64 [1] : vector<2x256xf32> to vector<2xf32>
    %145 = vector.shape_cast %144 : vector<2xf32> to vector<2x1xf32>
    %146 = arith.cmpf oge, %145, %58 : vector<2x1xf32>
    %147 = arith.select %146, %138, %133 : vector<2x1xi1>, vector<2x1xi32>
    %148 = arith.select %146, %134, %138 : vector<2x1xi1>, vector<2x1xi32>
    %c6_i32 = arith.constant 6 : i32
    %149 = arith.subi %148, %147 : vector<2x1xi32>
    %c1_i32_65 = arith.constant 1 : i32
    %150 = vector.broadcast %c1_i32_65 : i32 to vector<2x1xi32>
    %151 = arith.shrsi %149, %150 : vector<2x1xi32>
    %152 = arith.addi %147, %151 : vector<2x1xi32>
    %153 = vector.broadcast %152 : vector<2x1xi32> to vector<2x256xi32>
    %154 = arith.cmpi sge, %62, %153 : vector<2x256xi32>
    %cst_66 = arith.constant 1.000000e+00 : f32
    %cst_67 = arith.constant 0.000000e+00 : f32
    %155 = vector.broadcast %cst_66 : f32 to vector<2x256xf32>
    %156 = vector.broadcast %cst_67 : f32 to vector<2x256xf32>
    %157 = arith.select %154, %155, %156 : vector<2x256xi1>, vector<2x256xf32>
    %cst_68 = arith.constant dense<0.000000e+00> : vector<2xf32>
    %158 = vector.multi_reduction <add>, %157, %cst_68 [1] : vector<2x256xf32> to vector<2xf32>
    %159 = vector.shape_cast %158 : vector<2xf32> to vector<2x1xf32>
    %160 = arith.cmpf oge, %159, %58 : vector<2x1xf32>
    %161 = arith.select %160, %152, %147 : vector<2x1xi1>, vector<2x1xi32>
    %162 = arith.select %160, %148, %152 : vector<2x1xi1>, vector<2x1xi32>
    %c7_i32 = arith.constant 7 : i32
    %163 = arith.subi %162, %161 : vector<2x1xi32>
    %c1_i32_69 = arith.constant 1 : i32
    %164 = vector.broadcast %c1_i32_69 : i32 to vector<2x1xi32>
    %165 = arith.shrsi %163, %164 : vector<2x1xi32>
    %166 = arith.addi %161, %165 : vector<2x1xi32>
    %167 = vector.broadcast %166 : vector<2x1xi32> to vector<2x256xi32>
    %168 = arith.cmpi sge, %62, %167 : vector<2x256xi32>
    %cst_70 = arith.constant 1.000000e+00 : f32
    %cst_71 = arith.constant 0.000000e+00 : f32
    %169 = vector.broadcast %cst_70 : f32 to vector<2x256xf32>
    %170 = vector.broadcast %cst_71 : f32 to vector<2x256xf32>
    %171 = arith.select %168, %169, %170 : vector<2x256xi1>, vector<2x256xf32>
    %cst_72 = arith.constant dense<0.000000e+00> : vector<2xf32>
    %172 = vector.multi_reduction <add>, %171, %cst_72 [1] : vector<2x256xf32> to vector<2xf32>
    %173 = vector.shape_cast %172 : vector<2xf32> to vector<2x1xf32>
    %174 = arith.cmpf oge, %173, %58 : vector<2x1xf32>
    %175 = arith.select %174, %166, %161 : vector<2x1xi1>, vector<2x1xi32>
    %176 = arith.select %174, %162, %166 : vector<2x1xi1>, vector<2x1xi32>
    %c8_i32 = arith.constant 8 : i32
    %177 = arith.subi %176, %175 : vector<2x1xi32>
    %c1_i32_73 = arith.constant 1 : i32
    %178 = vector.broadcast %c1_i32_73 : i32 to vector<2x1xi32>
    %179 = arith.shrsi %177, %178 : vector<2x1xi32>
    %180 = arith.addi %175, %179 : vector<2x1xi32>
    %181 = vector.broadcast %180 : vector<2x1xi32> to vector<2x256xi32>
    %182 = arith.cmpi sge, %62, %181 : vector<2x256xi32>
    %cst_74 = arith.constant 1.000000e+00 : f32
    %cst_75 = arith.constant 0.000000e+00 : f32
    %183 = vector.broadcast %cst_74 : f32 to vector<2x256xf32>
    %184 = vector.broadcast %cst_75 : f32 to vector<2x256xf32>
    %185 = arith.select %182, %183, %184 : vector<2x256xi1>, vector<2x256xf32>
    %cst_76 = arith.constant dense<0.000000e+00> : vector<2xf32>
    %186 = vector.multi_reduction <add>, %185, %cst_76 [1] : vector<2x256xf32> to vector<2xf32>
    %187 = vector.shape_cast %186 : vector<2xf32> to vector<2x1xf32>
    %188 = arith.cmpf oge, %187, %58 : vector<2x1xf32>
    %189 = arith.select %188, %180, %175 : vector<2x1xi1>, vector<2x1xi32>
    %190 = arith.select %188, %176, %180 : vector<2x1xi1>, vector<2x1xi32>
    %c9_i32 = arith.constant 9 : i32
    %191 = arith.subi %190, %189 : vector<2x1xi32>
    %c1_i32_77 = arith.constant 1 : i32
    %192 = vector.broadcast %c1_i32_77 : i32 to vector<2x1xi32>
    %193 = arith.shrsi %191, %192 : vector<2x1xi32>
    %194 = arith.addi %189, %193 : vector<2x1xi32>
    %195 = vector.broadcast %194 : vector<2x1xi32> to vector<2x256xi32>
    %196 = arith.cmpi sge, %62, %195 : vector<2x256xi32>
    %cst_78 = arith.constant 1.000000e+00 : f32
    %cst_79 = arith.constant 0.000000e+00 : f32
    %197 = vector.broadcast %cst_78 : f32 to vector<2x256xf32>
    %198 = vector.broadcast %cst_79 : f32 to vector<2x256xf32>
    %199 = arith.select %196, %197, %198 : vector<2x256xi1>, vector<2x256xf32>
    %cst_80 = arith.constant dense<0.000000e+00> : vector<2xf32>
    %200 = vector.multi_reduction <add>, %199, %cst_80 [1] : vector<2x256xf32> to vector<2xf32>
    %201 = vector.shape_cast %200 : vector<2xf32> to vector<2x1xf32>
    %202 = arith.cmpf oge, %201, %58 : vector<2x1xf32>
    %203 = arith.select %202, %194, %189 : vector<2x1xi1>, vector<2x1xi32>
    %204 = arith.select %202, %190, %194 : vector<2x1xi1>, vector<2x1xi32>
    %c10_i32 = arith.constant 10 : i32
    %205 = arith.subi %204, %203 : vector<2x1xi32>
    %c1_i32_81 = arith.constant 1 : i32
    %206 = vector.broadcast %c1_i32_81 : i32 to vector<2x1xi32>
    %207 = arith.shrsi %205, %206 : vector<2x1xi32>
    %208 = arith.addi %203, %207 : vector<2x1xi32>
    %209 = vector.broadcast %208 : vector<2x1xi32> to vector<2x256xi32>
    %210 = arith.cmpi sge, %62, %209 : vector<2x256xi32>
    %cst_82 = arith.constant 1.000000e+00 : f32
    %cst_83 = arith.constant 0.000000e+00 : f32
    %211 = vector.broadcast %cst_82 : f32 to vector<2x256xf32>
    %212 = vector.broadcast %cst_83 : f32 to vector<2x256xf32>
    %213 = arith.select %210, %211, %212 : vector<2x256xi1>, vector<2x256xf32>
    %cst_84 = arith.constant dense<0.000000e+00> : vector<2xf32>
    %214 = vector.multi_reduction <add>, %213, %cst_84 [1] : vector<2x256xf32> to vector<2xf32>
    %215 = vector.shape_cast %214 : vector<2xf32> to vector<2x1xf32>
    %216 = arith.cmpf oge, %215, %58 : vector<2x1xf32>
    %217 = arith.select %216, %208, %203 : vector<2x1xi1>, vector<2x1xi32>
    %218 = arith.select %216, %204, %208 : vector<2x1xi1>, vector<2x1xi32>
    %c11_i32 = arith.constant 11 : i32
    %219 = arith.subi %218, %217 : vector<2x1xi32>
    %c1_i32_85 = arith.constant 1 : i32
    %220 = vector.broadcast %c1_i32_85 : i32 to vector<2x1xi32>
    %221 = arith.shrsi %219, %220 : vector<2x1xi32>
    %222 = arith.addi %217, %221 : vector<2x1xi32>
    %223 = vector.broadcast %222 : vector<2x1xi32> to vector<2x256xi32>
    %224 = arith.cmpi sge, %62, %223 : vector<2x256xi32>
    %cst_86 = arith.constant 1.000000e+00 : f32
    %cst_87 = arith.constant 0.000000e+00 : f32
    %225 = vector.broadcast %cst_86 : f32 to vector<2x256xf32>
    %226 = vector.broadcast %cst_87 : f32 to vector<2x256xf32>
    %227 = arith.select %224, %225, %226 : vector<2x256xi1>, vector<2x256xf32>
    %cst_88 = arith.constant dense<0.000000e+00> : vector<2xf32>
    %228 = vector.multi_reduction <add>, %227, %cst_88 [1] : vector<2x256xf32> to vector<2xf32>
    %229 = vector.shape_cast %228 : vector<2xf32> to vector<2x1xf32>
    %230 = arith.cmpf oge, %229, %58 : vector<2x1xf32>
    %231 = arith.select %230, %222, %217 : vector<2x1xi1>, vector<2x1xi32>
    %232 = arith.select %230, %218, %222 : vector<2x1xi1>, vector<2x1xi32>
    %c12_i32 = arith.constant 12 : i32
    %233 = arith.subi %232, %231 : vector<2x1xi32>
    %c1_i32_89 = arith.constant 1 : i32
    %234 = vector.broadcast %c1_i32_89 : i32 to vector<2x1xi32>
    %235 = arith.shrsi %233, %234 : vector<2x1xi32>
    %236 = arith.addi %231, %235 : vector<2x1xi32>
    %237 = vector.broadcast %236 : vector<2x1xi32> to vector<2x256xi32>
    %238 = arith.cmpi sge, %62, %237 : vector<2x256xi32>
    %cst_90 = arith.constant 1.000000e+00 : f32
    %cst_91 = arith.constant 0.000000e+00 : f32
    %239 = vector.broadcast %cst_90 : f32 to vector<2x256xf32>
    %240 = vector.broadcast %cst_91 : f32 to vector<2x256xf32>
    %241 = arith.select %238, %239, %240 : vector<2x256xi1>, vector<2x256xf32>
    %cst_92 = arith.constant dense<0.000000e+00> : vector<2xf32>
    %242 = vector.multi_reduction <add>, %241, %cst_92 [1] : vector<2x256xf32> to vector<2xf32>
    %243 = vector.shape_cast %242 : vector<2xf32> to vector<2x1xf32>
    %244 = arith.cmpf oge, %243, %58 : vector<2x1xf32>
    %245 = arith.select %244, %236, %231 : vector<2x1xi1>, vector<2x1xi32>
    %246 = arith.select %244, %232, %236 : vector<2x1xi1>, vector<2x1xi32>
    %c13_i32 = arith.constant 13 : i32
    %247 = arith.subi %246, %245 : vector<2x1xi32>
    %c1_i32_93 = arith.constant 1 : i32
    %248 = vector.broadcast %c1_i32_93 : i32 to vector<2x1xi32>
    %249 = arith.shrsi %247, %248 : vector<2x1xi32>
    %250 = arith.addi %245, %249 : vector<2x1xi32>
    %251 = vector.broadcast %250 : vector<2x1xi32> to vector<2x256xi32>
    %252 = arith.cmpi sge, %62, %251 : vector<2x256xi32>
    %cst_94 = arith.constant 1.000000e+00 : f32
    %cst_95 = arith.constant 0.000000e+00 : f32
    %253 = vector.broadcast %cst_94 : f32 to vector<2x256xf32>
    %254 = vector.broadcast %cst_95 : f32 to vector<2x256xf32>
    %255 = arith.select %252, %253, %254 : vector<2x256xi1>, vector<2x256xf32>
    %cst_96 = arith.constant dense<0.000000e+00> : vector<2xf32>
    %256 = vector.multi_reduction <add>, %255, %cst_96 [1] : vector<2x256xf32> to vector<2xf32>
    %257 = vector.shape_cast %256 : vector<2xf32> to vector<2x1xf32>
    %258 = arith.cmpf oge, %257, %58 : vector<2x1xf32>
    %259 = arith.select %258, %250, %245 : vector<2x1xi1>, vector<2x1xi32>
    %260 = arith.select %258, %246, %250 : vector<2x1xi1>, vector<2x1xi32>
    %c14_i32 = arith.constant 14 : i32
    %261 = arith.subi %260, %259 : vector<2x1xi32>
    %c1_i32_97 = arith.constant 1 : i32
    %262 = vector.broadcast %c1_i32_97 : i32 to vector<2x1xi32>
    %263 = arith.shrsi %261, %262 : vector<2x1xi32>
    %264 = arith.addi %259, %263 : vector<2x1xi32>
    %265 = vector.broadcast %264 : vector<2x1xi32> to vector<2x256xi32>
    %266 = arith.cmpi sge, %62, %265 : vector<2x256xi32>
    %cst_98 = arith.constant 1.000000e+00 : f32
    %cst_99 = arith.constant 0.000000e+00 : f32
    %267 = vector.broadcast %cst_98 : f32 to vector<2x256xf32>
    %268 = vector.broadcast %cst_99 : f32 to vector<2x256xf32>
    %269 = arith.select %266, %267, %268 : vector<2x256xi1>, vector<2x256xf32>
    %cst_100 = arith.constant dense<0.000000e+00> : vector<2xf32>
    %270 = vector.multi_reduction <add>, %269, %cst_100 [1] : vector<2x256xf32> to vector<2xf32>
    %271 = vector.shape_cast %270 : vector<2xf32> to vector<2x1xf32>
    %272 = arith.cmpf oge, %271, %58 : vector<2x1xf32>
    %273 = arith.select %272, %264, %259 : vector<2x1xi1>, vector<2x1xi32>
    %274 = arith.select %272, %260, %264 : vector<2x1xi1>, vector<2x1xi32>
    %c15_i32 = arith.constant 15 : i32
    %275 = arith.subi %274, %273 : vector<2x1xi32>
    %c1_i32_101 = arith.constant 1 : i32
    %276 = vector.broadcast %c1_i32_101 : i32 to vector<2x1xi32>
    %277 = arith.shrsi %275, %276 : vector<2x1xi32>
    %278 = arith.addi %273, %277 : vector<2x1xi32>
    %279 = vector.broadcast %278 : vector<2x1xi32> to vector<2x256xi32>
    %280 = arith.cmpi sge, %62, %279 : vector<2x256xi32>
    %cst_102 = arith.constant 1.000000e+00 : f32
    %cst_103 = arith.constant 0.000000e+00 : f32
    %281 = vector.broadcast %cst_102 : f32 to vector<2x256xf32>
    %282 = vector.broadcast %cst_103 : f32 to vector<2x256xf32>
    %283 = arith.select %280, %281, %282 : vector<2x256xi1>, vector<2x256xf32>
    %cst_104 = arith.constant dense<0.000000e+00> : vector<2xf32>
    %284 = vector.multi_reduction <add>, %283, %cst_104 [1] : vector<2x256xf32> to vector<2xf32>
    %285 = vector.shape_cast %284 : vector<2xf32> to vector<2x1xf32>
    %286 = arith.cmpf oge, %285, %58 : vector<2x1xf32>
    %287 = arith.select %286, %278, %273 : vector<2x1xi1>, vector<2x1xi32>
    %288 = arith.select %286, %274, %278 : vector<2x1xi1>, vector<2x1xi32>
    %c16_i32 = arith.constant 16 : i32
    %289 = arith.subi %288, %287 : vector<2x1xi32>
    %c1_i32_105 = arith.constant 1 : i32
    %290 = vector.broadcast %c1_i32_105 : i32 to vector<2x1xi32>
    %291 = arith.shrsi %289, %290 : vector<2x1xi32>
    %292 = arith.addi %287, %291 : vector<2x1xi32>
    %293 = vector.broadcast %292 : vector<2x1xi32> to vector<2x256xi32>
    %294 = arith.cmpi sge, %62, %293 : vector<2x256xi32>
    %cst_106 = arith.constant 1.000000e+00 : f32
    %cst_107 = arith.constant 0.000000e+00 : f32
    %295 = vector.broadcast %cst_106 : f32 to vector<2x256xf32>
    %296 = vector.broadcast %cst_107 : f32 to vector<2x256xf32>
    %297 = arith.select %294, %295, %296 : vector<2x256xi1>, vector<2x256xf32>
    %cst_108 = arith.constant dense<0.000000e+00> : vector<2xf32>
    %298 = vector.multi_reduction <add>, %297, %cst_108 [1] : vector<2x256xf32> to vector<2xf32>
    %299 = vector.shape_cast %298 : vector<2xf32> to vector<2x1xf32>
    %300 = arith.cmpf oge, %299, %58 : vector<2x1xf32>
    %301 = arith.select %300, %292, %287 : vector<2x1xi1>, vector<2x1xi32>
    %302 = arith.select %300, %288, %292 : vector<2x1xi1>, vector<2x1xi32>
    %c17_i32 = arith.constant 17 : i32
    %303 = arith.subi %302, %301 : vector<2x1xi32>
    %c1_i32_109 = arith.constant 1 : i32
    %304 = vector.broadcast %c1_i32_109 : i32 to vector<2x1xi32>
    %305 = arith.shrsi %303, %304 : vector<2x1xi32>
    %306 = arith.addi %301, %305 : vector<2x1xi32>
    %307 = vector.broadcast %306 : vector<2x1xi32> to vector<2x256xi32>
    %308 = arith.cmpi sge, %62, %307 : vector<2x256xi32>
    %cst_110 = arith.constant 1.000000e+00 : f32
    %cst_111 = arith.constant 0.000000e+00 : f32
    %309 = vector.broadcast %cst_110 : f32 to vector<2x256xf32>
    %310 = vector.broadcast %cst_111 : f32 to vector<2x256xf32>
    %311 = arith.select %308, %309, %310 : vector<2x256xi1>, vector<2x256xf32>
    %cst_112 = arith.constant dense<0.000000e+00> : vector<2xf32>
    %312 = vector.multi_reduction <add>, %311, %cst_112 [1] : vector<2x256xf32> to vector<2xf32>
    %313 = vector.shape_cast %312 : vector<2xf32> to vector<2x1xf32>
    %314 = arith.cmpf oge, %313, %58 : vector<2x1xf32>
    %315 = arith.select %314, %306, %301 : vector<2x1xi1>, vector<2x1xi32>
    %316 = arith.select %314, %302, %306 : vector<2x1xi1>, vector<2x1xi32>
    %c18_i32 = arith.constant 18 : i32
    %317 = arith.subi %316, %315 : vector<2x1xi32>
    %c1_i32_113 = arith.constant 1 : i32
    %318 = vector.broadcast %c1_i32_113 : i32 to vector<2x1xi32>
    %319 = arith.shrsi %317, %318 : vector<2x1xi32>
    %320 = arith.addi %315, %319 : vector<2x1xi32>
    %321 = vector.broadcast %320 : vector<2x1xi32> to vector<2x256xi32>
    %322 = arith.cmpi sge, %62, %321 : vector<2x256xi32>
    %cst_114 = arith.constant 1.000000e+00 : f32
    %cst_115 = arith.constant 0.000000e+00 : f32
    %323 = vector.broadcast %cst_114 : f32 to vector<2x256xf32>
    %324 = vector.broadcast %cst_115 : f32 to vector<2x256xf32>
    %325 = arith.select %322, %323, %324 : vector<2x256xi1>, vector<2x256xf32>
    %cst_116 = arith.constant dense<0.000000e+00> : vector<2xf32>
    %326 = vector.multi_reduction <add>, %325, %cst_116 [1] : vector<2x256xf32> to vector<2xf32>
    %327 = vector.shape_cast %326 : vector<2xf32> to vector<2x1xf32>
    %328 = arith.cmpf oge, %327, %58 : vector<2x1xf32>
    %329 = arith.select %328, %320, %315 : vector<2x1xi1>, vector<2x1xi32>
    %330 = arith.select %328, %316, %320 : vector<2x1xi1>, vector<2x1xi32>
    %c19_i32 = arith.constant 19 : i32
    %331 = arith.subi %330, %329 : vector<2x1xi32>
    %c1_i32_117 = arith.constant 1 : i32
    %332 = vector.broadcast %c1_i32_117 : i32 to vector<2x1xi32>
    %333 = arith.shrsi %331, %332 : vector<2x1xi32>
    %334 = arith.addi %329, %333 : vector<2x1xi32>
    %335 = vector.broadcast %334 : vector<2x1xi32> to vector<2x256xi32>
    %336 = arith.cmpi sge, %62, %335 : vector<2x256xi32>
    %cst_118 = arith.constant 1.000000e+00 : f32
    %cst_119 = arith.constant 0.000000e+00 : f32
    %337 = vector.broadcast %cst_118 : f32 to vector<2x256xf32>
    %338 = vector.broadcast %cst_119 : f32 to vector<2x256xf32>
    %339 = arith.select %336, %337, %338 : vector<2x256xi1>, vector<2x256xf32>
    %cst_120 = arith.constant dense<0.000000e+00> : vector<2xf32>
    %340 = vector.multi_reduction <add>, %339, %cst_120 [1] : vector<2x256xf32> to vector<2xf32>
    %341 = vector.shape_cast %340 : vector<2xf32> to vector<2x1xf32>
    %342 = arith.cmpf oge, %341, %58 : vector<2x1xf32>
    %343 = arith.select %342, %334, %329 : vector<2x1xi1>, vector<2x1xi32>
    %344 = arith.select %342, %330, %334 : vector<2x1xi1>, vector<2x1xi32>
    %c20_i32 = arith.constant 20 : i32
    %345 = arith.subi %344, %343 : vector<2x1xi32>
    %c1_i32_121 = arith.constant 1 : i32
    %346 = vector.broadcast %c1_i32_121 : i32 to vector<2x1xi32>
    %347 = arith.shrsi %345, %346 : vector<2x1xi32>
    %348 = arith.addi %343, %347 : vector<2x1xi32>
    %349 = vector.broadcast %348 : vector<2x1xi32> to vector<2x256xi32>
    %350 = arith.cmpi sge, %62, %349 : vector<2x256xi32>
    %cst_122 = arith.constant 1.000000e+00 : f32
    %cst_123 = arith.constant 0.000000e+00 : f32
    %351 = vector.broadcast %cst_122 : f32 to vector<2x256xf32>
    %352 = vector.broadcast %cst_123 : f32 to vector<2x256xf32>
    %353 = arith.select %350, %351, %352 : vector<2x256xi1>, vector<2x256xf32>
    %cst_124 = arith.constant dense<0.000000e+00> : vector<2xf32>
    %354 = vector.multi_reduction <add>, %353, %cst_124 [1] : vector<2x256xf32> to vector<2xf32>
    %355 = vector.shape_cast %354 : vector<2xf32> to vector<2x1xf32>
    %356 = arith.cmpf oge, %355, %58 : vector<2x1xf32>
    %357 = arith.select %356, %348, %343 : vector<2x1xi1>, vector<2x1xi32>
    %358 = arith.select %356, %344, %348 : vector<2x1xi1>, vector<2x1xi32>
    %c21_i32 = arith.constant 21 : i32
    %359 = arith.subi %358, %357 : vector<2x1xi32>
    %c1_i32_125 = arith.constant 1 : i32
    %360 = vector.broadcast %c1_i32_125 : i32 to vector<2x1xi32>
    %361 = arith.shrsi %359, %360 : vector<2x1xi32>
    %362 = arith.addi %357, %361 : vector<2x1xi32>
    %363 = vector.broadcast %362 : vector<2x1xi32> to vector<2x256xi32>
    %364 = arith.cmpi sge, %62, %363 : vector<2x256xi32>
    %cst_126 = arith.constant 1.000000e+00 : f32
    %cst_127 = arith.constant 0.000000e+00 : f32
    %365 = vector.broadcast %cst_126 : f32 to vector<2x256xf32>
    %366 = vector.broadcast %cst_127 : f32 to vector<2x256xf32>
    %367 = arith.select %364, %365, %366 : vector<2x256xi1>, vector<2x256xf32>
    %cst_128 = arith.constant dense<0.000000e+00> : vector<2xf32>
    %368 = vector.multi_reduction <add>, %367, %cst_128 [1] : vector<2x256xf32> to vector<2xf32>
    %369 = vector.shape_cast %368 : vector<2xf32> to vector<2x1xf32>
    %370 = arith.cmpf oge, %369, %58 : vector<2x1xf32>
    %371 = arith.select %370, %362, %357 : vector<2x1xi1>, vector<2x1xi32>
    %372 = arith.select %370, %358, %362 : vector<2x1xi1>, vector<2x1xi32>
    %c22_i32 = arith.constant 22 : i32
    %373 = arith.subi %372, %371 : vector<2x1xi32>
    %c1_i32_129 = arith.constant 1 : i32
    %374 = vector.broadcast %c1_i32_129 : i32 to vector<2x1xi32>
    %375 = arith.shrsi %373, %374 : vector<2x1xi32>
    %376 = arith.addi %371, %375 : vector<2x1xi32>
    %377 = vector.broadcast %376 : vector<2x1xi32> to vector<2x256xi32>
    %378 = arith.cmpi sge, %62, %377 : vector<2x256xi32>
    %cst_130 = arith.constant 1.000000e+00 : f32
    %cst_131 = arith.constant 0.000000e+00 : f32
    %379 = vector.broadcast %cst_130 : f32 to vector<2x256xf32>
    %380 = vector.broadcast %cst_131 : f32 to vector<2x256xf32>
    %381 = arith.select %378, %379, %380 : vector<2x256xi1>, vector<2x256xf32>
    %cst_132 = arith.constant dense<0.000000e+00> : vector<2xf32>
    %382 = vector.multi_reduction <add>, %381, %cst_132 [1] : vector<2x256xf32> to vector<2xf32>
    %383 = vector.shape_cast %382 : vector<2xf32> to vector<2x1xf32>
    %384 = arith.cmpf oge, %383, %58 : vector<2x1xf32>
    %385 = arith.select %384, %376, %371 : vector<2x1xi1>, vector<2x1xi32>
    %386 = arith.select %384, %372, %376 : vector<2x1xi1>, vector<2x1xi32>
    %c23_i32 = arith.constant 23 : i32
    %387 = arith.subi %386, %385 : vector<2x1xi32>
    %c1_i32_133 = arith.constant 1 : i32
    %388 = vector.broadcast %c1_i32_133 : i32 to vector<2x1xi32>
    %389 = arith.shrsi %387, %388 : vector<2x1xi32>
    %390 = arith.addi %385, %389 : vector<2x1xi32>
    %391 = vector.broadcast %390 : vector<2x1xi32> to vector<2x256xi32>
    %392 = arith.cmpi sge, %62, %391 : vector<2x256xi32>
    %cst_134 = arith.constant 1.000000e+00 : f32
    %cst_135 = arith.constant 0.000000e+00 : f32
    %393 = vector.broadcast %cst_134 : f32 to vector<2x256xf32>
    %394 = vector.broadcast %cst_135 : f32 to vector<2x256xf32>
    %395 = arith.select %392, %393, %394 : vector<2x256xi1>, vector<2x256xf32>
    %cst_136 = arith.constant dense<0.000000e+00> : vector<2xf32>
    %396 = vector.multi_reduction <add>, %395, %cst_136 [1] : vector<2x256xf32> to vector<2xf32>
    %397 = vector.shape_cast %396 : vector<2xf32> to vector<2x1xf32>
    %398 = arith.cmpf oge, %397, %58 : vector<2x1xf32>
    %399 = arith.select %398, %390, %385 : vector<2x1xi1>, vector<2x1xi32>
    %400 = arith.select %398, %386, %390 : vector<2x1xi1>, vector<2x1xi32>
    %c24_i32 = arith.constant 24 : i32
    %401 = arith.subi %400, %399 : vector<2x1xi32>
    %c1_i32_137 = arith.constant 1 : i32
    %402 = vector.broadcast %c1_i32_137 : i32 to vector<2x1xi32>
    %403 = arith.shrsi %401, %402 : vector<2x1xi32>
    %404 = arith.addi %399, %403 : vector<2x1xi32>
    %405 = vector.broadcast %404 : vector<2x1xi32> to vector<2x256xi32>
    %406 = arith.cmpi sge, %62, %405 : vector<2x256xi32>
    %cst_138 = arith.constant 1.000000e+00 : f32
    %cst_139 = arith.constant 0.000000e+00 : f32
    %407 = vector.broadcast %cst_138 : f32 to vector<2x256xf32>
    %408 = vector.broadcast %cst_139 : f32 to vector<2x256xf32>
    %409 = arith.select %406, %407, %408 : vector<2x256xi1>, vector<2x256xf32>
    %cst_140 = arith.constant dense<0.000000e+00> : vector<2xf32>
    %410 = vector.multi_reduction <add>, %409, %cst_140 [1] : vector<2x256xf32> to vector<2xf32>
    %411 = vector.shape_cast %410 : vector<2xf32> to vector<2x1xf32>
    %412 = arith.cmpf oge, %411, %58 : vector<2x1xf32>
    %413 = arith.select %412, %404, %399 : vector<2x1xi1>, vector<2x1xi32>
    %414 = arith.select %412, %400, %404 : vector<2x1xi1>, vector<2x1xi32>
    %c25_i32 = arith.constant 25 : i32
    %415 = arith.subi %414, %413 : vector<2x1xi32>
    %c1_i32_141 = arith.constant 1 : i32
    %416 = vector.broadcast %c1_i32_141 : i32 to vector<2x1xi32>
    %417 = arith.shrsi %415, %416 : vector<2x1xi32>
    %418 = arith.addi %413, %417 : vector<2x1xi32>
    %419 = vector.broadcast %418 : vector<2x1xi32> to vector<2x256xi32>
    %420 = arith.cmpi sge, %62, %419 : vector<2x256xi32>
    %cst_142 = arith.constant 1.000000e+00 : f32
    %cst_143 = arith.constant 0.000000e+00 : f32
    %421 = vector.broadcast %cst_142 : f32 to vector<2x256xf32>
    %422 = vector.broadcast %cst_143 : f32 to vector<2x256xf32>
    %423 = arith.select %420, %421, %422 : vector<2x256xi1>, vector<2x256xf32>
    %cst_144 = arith.constant dense<0.000000e+00> : vector<2xf32>
    %424 = vector.multi_reduction <add>, %423, %cst_144 [1] : vector<2x256xf32> to vector<2xf32>
    %425 = vector.shape_cast %424 : vector<2xf32> to vector<2x1xf32>
    %426 = arith.cmpf oge, %425, %58 : vector<2x1xf32>
    %427 = arith.select %426, %418, %413 : vector<2x1xi1>, vector<2x1xi32>
    %428 = arith.select %426, %414, %418 : vector<2x1xi1>, vector<2x1xi32>
    %c26_i32 = arith.constant 26 : i32
    %429 = arith.subi %428, %427 : vector<2x1xi32>
    %c1_i32_145 = arith.constant 1 : i32
    %430 = vector.broadcast %c1_i32_145 : i32 to vector<2x1xi32>
    %431 = arith.shrsi %429, %430 : vector<2x1xi32>
    %432 = arith.addi %427, %431 : vector<2x1xi32>
    %433 = vector.broadcast %432 : vector<2x1xi32> to vector<2x256xi32>
    %434 = arith.cmpi sge, %62, %433 : vector<2x256xi32>
    %cst_146 = arith.constant 1.000000e+00 : f32
    %cst_147 = arith.constant 0.000000e+00 : f32
    %435 = vector.broadcast %cst_146 : f32 to vector<2x256xf32>
    %436 = vector.broadcast %cst_147 : f32 to vector<2x256xf32>
    %437 = arith.select %434, %435, %436 : vector<2x256xi1>, vector<2x256xf32>
    %cst_148 = arith.constant dense<0.000000e+00> : vector<2xf32>
    %438 = vector.multi_reduction <add>, %437, %cst_148 [1] : vector<2x256xf32> to vector<2xf32>
    %439 = vector.shape_cast %438 : vector<2xf32> to vector<2x1xf32>
    %440 = arith.cmpf oge, %439, %58 : vector<2x1xf32>
    %441 = arith.select %440, %432, %427 : vector<2x1xi1>, vector<2x1xi32>
    %442 = arith.select %440, %428, %432 : vector<2x1xi1>, vector<2x1xi32>
    %c27_i32 = arith.constant 27 : i32
    %443 = arith.subi %442, %441 : vector<2x1xi32>
    %c1_i32_149 = arith.constant 1 : i32
    %444 = vector.broadcast %c1_i32_149 : i32 to vector<2x1xi32>
    %445 = arith.shrsi %443, %444 : vector<2x1xi32>
    %446 = arith.addi %441, %445 : vector<2x1xi32>
    %447 = vector.broadcast %446 : vector<2x1xi32> to vector<2x256xi32>
    %448 = arith.cmpi sge, %62, %447 : vector<2x256xi32>
    %cst_150 = arith.constant 1.000000e+00 : f32
    %cst_151 = arith.constant 0.000000e+00 : f32
    %449 = vector.broadcast %cst_150 : f32 to vector<2x256xf32>
    %450 = vector.broadcast %cst_151 : f32 to vector<2x256xf32>
    %451 = arith.select %448, %449, %450 : vector<2x256xi1>, vector<2x256xf32>
    %cst_152 = arith.constant dense<0.000000e+00> : vector<2xf32>
    %452 = vector.multi_reduction <add>, %451, %cst_152 [1] : vector<2x256xf32> to vector<2xf32>
    %453 = vector.shape_cast %452 : vector<2xf32> to vector<2x1xf32>
    %454 = arith.cmpf oge, %453, %58 : vector<2x1xf32>
    %455 = arith.select %454, %446, %441 : vector<2x1xi1>, vector<2x1xi32>
    %456 = arith.select %454, %442, %446 : vector<2x1xi1>, vector<2x1xi32>
    %c28_i32 = arith.constant 28 : i32
    %457 = arith.subi %456, %455 : vector<2x1xi32>
    %c1_i32_153 = arith.constant 1 : i32
    %458 = vector.broadcast %c1_i32_153 : i32 to vector<2x1xi32>
    %459 = arith.shrsi %457, %458 : vector<2x1xi32>
    %460 = arith.addi %455, %459 : vector<2x1xi32>
    %461 = vector.broadcast %460 : vector<2x1xi32> to vector<2x256xi32>
    %462 = arith.cmpi sge, %62, %461 : vector<2x256xi32>
    %cst_154 = arith.constant 1.000000e+00 : f32
    %cst_155 = arith.constant 0.000000e+00 : f32
    %463 = vector.broadcast %cst_154 : f32 to vector<2x256xf32>
    %464 = vector.broadcast %cst_155 : f32 to vector<2x256xf32>
    %465 = arith.select %462, %463, %464 : vector<2x256xi1>, vector<2x256xf32>
    %cst_156 = arith.constant dense<0.000000e+00> : vector<2xf32>
    %466 = vector.multi_reduction <add>, %465, %cst_156 [1] : vector<2x256xf32> to vector<2xf32>
    %467 = vector.shape_cast %466 : vector<2xf32> to vector<2x1xf32>
    %468 = arith.cmpf oge, %467, %58 : vector<2x1xf32>
    %469 = arith.select %468, %460, %455 : vector<2x1xi1>, vector<2x1xi32>
    %470 = arith.select %468, %456, %460 : vector<2x1xi1>, vector<2x1xi32>
    %c29_i32 = arith.constant 29 : i32
    %471 = arith.subi %470, %469 : vector<2x1xi32>
    %c1_i32_157 = arith.constant 1 : i32
    %472 = vector.broadcast %c1_i32_157 : i32 to vector<2x1xi32>
    %473 = arith.shrsi %471, %472 : vector<2x1xi32>
    %474 = arith.addi %469, %473 : vector<2x1xi32>
    %475 = vector.broadcast %474 : vector<2x1xi32> to vector<2x256xi32>
    %476 = arith.cmpi sge, %62, %475 : vector<2x256xi32>
    %cst_158 = arith.constant 1.000000e+00 : f32
    %cst_159 = arith.constant 0.000000e+00 : f32
    %477 = vector.broadcast %cst_158 : f32 to vector<2x256xf32>
    %478 = vector.broadcast %cst_159 : f32 to vector<2x256xf32>
    %479 = arith.select %476, %477, %478 : vector<2x256xi1>, vector<2x256xf32>
    %cst_160 = arith.constant dense<0.000000e+00> : vector<2xf32>
    %480 = vector.multi_reduction <add>, %479, %cst_160 [1] : vector<2x256xf32> to vector<2xf32>
    %481 = vector.shape_cast %480 : vector<2xf32> to vector<2x1xf32>
    %482 = arith.cmpf oge, %481, %58 : vector<2x1xf32>
    %483 = arith.select %482, %474, %469 : vector<2x1xi1>, vector<2x1xi32>
    %484 = arith.select %482, %470, %474 : vector<2x1xi1>, vector<2x1xi32>
    %c30_i32 = arith.constant 30 : i32
    %485 = arith.subi %484, %483 : vector<2x1xi32>
    %c1_i32_161 = arith.constant 1 : i32
    %486 = vector.broadcast %c1_i32_161 : i32 to vector<2x1xi32>
    %487 = arith.shrsi %485, %486 : vector<2x1xi32>
    %488 = arith.addi %483, %487 : vector<2x1xi32>
    %489 = vector.broadcast %488 : vector<2x1xi32> to vector<2x256xi32>
    %490 = arith.cmpi sge, %62, %489 : vector<2x256xi32>
    %cst_162 = arith.constant 1.000000e+00 : f32
    %cst_163 = arith.constant 0.000000e+00 : f32
    %491 = vector.broadcast %cst_162 : f32 to vector<2x256xf32>
    %492 = vector.broadcast %cst_163 : f32 to vector<2x256xf32>
    %493 = arith.select %490, %491, %492 : vector<2x256xi1>, vector<2x256xf32>
    %cst_164 = arith.constant dense<0.000000e+00> : vector<2xf32>
    %494 = vector.multi_reduction <add>, %493, %cst_164 [1] : vector<2x256xf32> to vector<2xf32>
    %495 = vector.shape_cast %494 : vector<2xf32> to vector<2x1xf32>
    %496 = arith.cmpf oge, %495, %58 : vector<2x1xf32>
    %497 = arith.select %496, %488, %483 : vector<2x1xi1>, vector<2x1xi32>
    %498 = arith.select %496, %484, %488 : vector<2x1xi1>, vector<2x1xi32>
    %499 = tpu.bitcast %497 : vector<2x1xi32> -> vector<2x1xf32>
    %500 = vector.broadcast %499 : vector<2x1xf32> to vector<2x256xf32>
    %501 = arith.cmpf ogt, %61, %500 : vector<2x256xf32>
    %cst_165 = arith.constant 1.000000e+00 : f32
    %cst_166 = arith.constant 0.000000e+00 : f32
    %502 = vector.broadcast %cst_165 : f32 to vector<2x256xf32>
    %503 = vector.broadcast %cst_166 : f32 to vector<2x256xf32>
    %504 = arith.select %501, %502, %503 : vector<2x256xi1>, vector<2x256xf32>
    %cst_167 = arith.constant dense<0.000000e+00> : vector<2xf32>
    %505 = vector.multi_reduction <add>, %504, %cst_167 [1] : vector<2x256xf32> to vector<2xf32>
    %506 = vector.shape_cast %505 : vector<2xf32> to vector<2x1xf32>
    %cst_168 = arith.constant 0.000000e+00 : f32
    %507 = vector.broadcast %cst_168 : f32 to vector<2x256xf32>
    %508 = arith.select %501, %61, %507 : vector<2x256xi1>, vector<2x256xf32>
    %cst_169 = arith.constant dense<0.000000e+00> : vector<2xf32>
    %509 = vector.multi_reduction <add>, %508, %cst_169 [1] : vector<2x256xf32> to vector<2xf32>
    %510 = vector.shape_cast %509 : vector<2xf32> to vector<2x1xf32>
    %511 = arith.subf %58, %506 : vector<2x1xf32>
    %512 = arith.mulf %511, %499 : vector<2x1xf32>
    %513 = arith.addf %510, %512 : vector<2x1xf32>
    %514 = arith.divf %513, %58 : vector<2x1xf32>
    %cst_170 = arith.constant dense<0.000000e+00> : vector<1xf32>
    %515 = vector.multi_reduction <add>, %514, %cst_170 [0] : vector<2x1xf32> to vector<1xf32>
    %516 = vector.shape_cast %515 : vector<1xf32> to vector<1x1xf32>
    %cst_171 = arith.constant 5.000000e-01 : f32
    %517 = vector.broadcast %cst_171 : f32 to vector<1x1xf32>
    %518 = arith.mulf %516, %517 : vector<1x1xf32>
    %519 = vector.shape_cast %518 : vector<1x1xf32> to vector<1x1x1xf32>
    %520 = vector.shape_cast %519 : vector<1x1x1xf32> to vector<1x1x1xf32>
    %521 = vector.broadcast %520 : vector<1x1x1xf32> to vector<1x1x128xf32>
    %c0_172 = arith.constant 0 : index
    %c0_173 = arith.constant 0 : index
    %c0_174 = arith.constant 0 : index
    %522 = vector.load %arg6[%c0_172, %c0_173, %c0_174] : memref<1x1x128xf32, #tpu.memory_space<vmem>>, vector<1x1x128xf32>
    tpu.vector_store %arg6[%c0_172, %c0_173, %c0_174], %521 {strides = array<i32>} : memref<1x1x128xf32, #tpu.memory_space<vmem>>, vector<1x1x128xf32>,
    return
  }
  func.func @transform_0(%arg0: i32) -> (i32, i32, i32) {
    %c0_i32 = arith.constant 0 : i32
    %c0_i32_0 = arith.constant 0 : i32
    %c0_i32_1 = arith.constant 0 : i32
    return %arg0, %c0_i32, %c0_i32_0 : i32, i32, i32
  }
  func.func @transform_1(%arg0: i32) -> (i32, i32) {
    %c0_i32 = arith.constant 0 : i32
    %c0_i32_0 = arith.constant 0 : i32
    %c0_i32_1 = arith.constant 0 : i32
    return %c0_i32, %c0_i32_0 : i32, i32
  }
  func.func @transform_2(%arg0: i32) -> (i32, i32) {
    %c0_i32 = arith.constant 0 : i32
    %c0_i32_0 = arith.constant 0 : i32
    %c0_i32_1 = arith.constant 0 : i32
    return %c0_i32, %c0_i32_0 : i32, i32
  }
  func.func @transform_3(%arg0: i32) -> (i32, i32) {
    %c0_i32 = arith.constant 0 : i32
    %c0_i32_0 = arith.constant 0 : i32
    %c0_i32_1 = arith.constant 0 : i32
    return %c0_i32, %c0_i32_0 : i32, i32
  }
  func.func @transform_4(%arg0: i32) -> (i32, i32) {
    %c0_i32 = arith.constant 0 : i32
    %c0_i32_0 = arith.constant 0 : i32
    %c0_i32_1 = arith.constant 0 : i32
    return %c0_i32, %c0_i32_0 : i32, i32
  }
  func.func @transform_5(%arg0: i32) -> (i32, i32, i32) {
    %c0_i32 = arith.constant 0 : i32
    %c0_i32_0 = arith.constant 0 : i32
    %c0_i32_1 = arith.constant 0 : i32
    return %arg0, %c0_i32, %c0_i32_0 : i32, i32, i32
  }
}

</mosaic_0001>

<llo_original>
// kernel: tpu_custom_call.1
$region0: #{tpu_custom_call.1}
  #allocation0 [shape = 'u32[]', space=smem, size = 0x4, offset = 0x4, fixed_abs, tag = 'smem constant byte address 0x4 - core index']
  #allocation1 [shape = 'u32[72,128]{1,0:T(1,128)}', space=vmem, size = 0x9000, scoped, tag = 'internal scratch']
  #allocation2 [shape = 'f32[1,1]{1,0:T(1,128)S(1)}', space=vmem, size = 0x200, scoped, tag = 'scoped memory for tpu_custom_call.1']
  %s0 = inlined_call_operand.vmem [shape: f32[2,4,384], index: 0, kind: input, shape index: {}]
  %s1 = inlined_call_operand.vmem [shape: f32[512,4], index: 1, kind: input, shape index: {}]
  %s2 = inlined_call_operand.vmem [shape: f32[512,1], index: 2, kind: input, shape index: {}]
  %s3 = inlined_call_operand.vmem [shape: f32[1,512], index: 3, kind: input, shape index: {}]
  %s4 = inlined_call_operand.<no memory space> [shape: f32[1,1], index: 4, kind: input, shape index: {}]
  %s5 = inlined_call_operand.hbm [shape: f32[2,1,128], index: 5, kind: output, shape index: {}]
  %s6 = sld [smem:[#allocation0]]
  $region53: #{tpu_custom_call.1} parent=0
    _
  %s8 = ssub.s32 1, %s6
  %s9 = scalar_select 0, %s8, %s6
  %v10 = vstv %s4
  %11 = vst [vmem:[#allocation2] sm:$0x1] %v10
  $region1: #{tpu_custom_call.1} parent=0
    #allocation3 [shape = 'u8[1024]{0}', space=vmem, size = 0x400, scoped, tag = 'output window, operand 0']
    #allocation4 [shape = 's32[2]{0}', space=sflag, size = 0x8, scoped, tag = 'scoped memory for tpu_custom_call.1']
    %12 = vsyncpa [#allocation4], 0
    %s13 = scalar_lea.sflag [#allocation4], 1
    %14 = vsyncpa %s13, 0
    loop: start=0, step=1, limit=4
    $region2: #{tpu_custom_call.1} parent=1 // loop_pre_header
      _
    $region3: #{tpu_custom_call.1} parent=1 // loop_header
      %s16 = sphi 0, %s20
      %p17 = scmp.ge.s32.totalorder %s16, 4
      %s26 = sphi 0, %s28
      %s29 = sphi 0, %s26
      %s30 = sphi 0, %s29
      %s46 = sphi 0, %s30
      %s50 = sphi 0, %s50
      %s52 = sphi 0, %s50
      %s53 = sphi 0, %s52
      %s67 = sphi 0, %s53
      %s71 = sphi 0, %s71
      %s73 = sphi 0, %s71
      %s74 = sphi 0, %s73
      %s88 = sphi 0, %s74
      %s92 = sphi 0, %s92
      %s94 = sphi 0, %s92
      %s95 = sphi 0, %s94
      %s109 = sphi 0, %s95
      %s113 = sphi 0, %s113
      %s115 = sphi 0, %s113
      %s116 = sphi 0, %s115
      %s130 = sphi 0, %s116
      %s136 = sphi 0, %s138
      %s139 = sphi 0, %s136
      %s140 = sphi 0, %s139
      %s156 = sphi 0, %s140
    $region4: #{tpu_custom_call.1} parent=1 // loop_header_branch
      %19 = sbr.rel (%p17) target = $region8
    $region5: #{tpu_custom_call.1} parent=1 // loop_body
      %s21 = ssub.s32 %s16, 1
      %s22 = ssub.s32 %s16, 2
      %s23 = sadd.s32 %s16, 1
      %s24 = ssub.s32 %s16, %s23
      %p25 = scmp.eq.s32.totalorder %s24, 0
      %s27 = sadd.s32 %s26, 1
      %s28 = scalar_select %p25, %s26, %s27
      %p31 = pneg %p25
      %p32 = scmp.eq.s32.totalorder %s16, 1
      %p33 = por %p31, %p32
      %p34 = scmp.ne.s32.totalorder %s26, %s29
      %p35 = scmp.eq.s32.totalorder %s16, 0
      %p36 = por %p34, %p35
      %p37 = scmp.ne.s32.totalorder %s26, %s29
      %p38 = scmp.eq.s32.totalorder %s21, 1
      %p39 = por %p37, %p38
      %p40 = scmp.ne.s32.totalorder %s29, %s30
      %p41 = scmp.eq.s32.totalorder %s21, 0
      %p42 = por %p40, %p41
      %p43 = scmp.ne.s32.totalorder %s29, %s30
      %p44 = scmp.eq.s32.totalorder %s22, 1
      %p45 = por %p43, %p44
      %p47 = scmp.ne.s32.totalorder %s30, %s46
      %p48 = scmp.eq.s32.totalorder %s22, 0
      %p49 = por %p47, %p48
      %s51 = sadd.s32 %s50, 1
      %p54 = scmp.eq.s32.totalorder %s16, 1
      %p55 = scmp.ne.s32.totalorder %s50, %s52
      %p56 = scmp.eq.s32.totalorder %s16, 0
      %p57 = por %p55, %p56
      %p58 = scmp.ne.s32.totalorder %s50, %s52
      %p59 = scmp.eq.s32.totalorder %s21, 1
      %p60 = por %p58, %p59
      %p61 = scmp.ne.s32.totalorder %s52, %s53
      %p62 = scmp.eq.s32.totalorder %s21, 0
      %p63 = por %p61, %p62
      %p64 = scmp.ne.s32.totalorder %s52, %s53
      %p65 = scmp.eq.s32.totalorder %s22, 1
      %p66 = por %p64, %p65
      %p68 = scmp.ne.s32.totalorder %s53, %s67
      %p69 = scmp.eq.s32.totalorder %s22, 0
      %p70 = por %p68, %p69
      %s72 = sadd.s32 %s71, 1
      %p75 = scmp.eq.s32.totalorder %s16, 1
      %p76 = scmp.ne.s32.totalorder %s71, %s73
      %p77 = scmp.eq.s32.totalorder %s16, 0
      %p78 = por %p76, %p77
      %p79 = scmp.ne.s32.totalorder %s71, %s73
      %p80 = scmp.eq.s32.totalorder %s21, 1
      %p81 = por %p79, %p80
      %p82 = scmp.ne.s32.totalorder %s73, %s74
      %p83 = scmp.eq.s32.totalorder %s21, 0
      %p84 = por %p82, %p83
      %p85 = scmp.ne.s32.totalorder %s73, %s74
      %p86 = scmp.eq.s32.totalorder %s22, 1
      %p87 = por %p85, %p86
      %p89 = scmp.ne.s32.totalorder %s74, %s88
      %p90 = scmp.eq.s32.totalorder %s22, 0
      %p91 = por %p89, %p90
      %s93 = sadd.s32 %s92, 1
      %p96 = scmp.eq.s32.totalorder %s16, 1
      %p97 = scmp.ne.s32.totalorder %s92, %s94
      %p98 = scmp.eq.s32.totalorder %s16, 0
      %p99 = por %p97, %p98
      %p100 = scmp.ne.s32.totalorder %s92, %s94
      %p101 = scmp.eq.s32.totalorder %s21, 1
      %p102 = por %p100, %p101
      %p103 = scmp.ne.s32.totalorder %s94, %s95
      %p104 = scmp.eq.s32.totalorder %s21, 0
      %p105 = por %p103, %p104
      %p106 = scmp.ne.s32.totalorder %s94, %s95
      %p107 = scmp.eq.s32.totalorder %s22, 1
      %p108 = por %p106, %p107
      %p110 = scmp.ne.s32.totalorder %s95, %s109
      %p111 = scmp.eq.s32.totalorder %s22, 0
      %p112 = por %p110, %p111
      %s114 = sadd.s32 %s113, 1
      %p117 = scmp.eq.s32.totalorder %s16, 1
      %p118 = scmp.ne.s32.totalorder %s113, %s115
      %p119 = scmp.eq.s32.totalorder %s16, 0
      %p120 = por %p118, %p119
      %p121 = scmp.ne.s32.totalorder %s113, %s115
      %p122 = scmp.eq.s32.totalorder %s21, 1
      %p123 = por %p121, %p122
      %p124 = scmp.ne.s32.totalorder %s115, %s116
      %p125 = scmp.eq.s32.totalorder %s21, 0
      %p126 = por %p124, %p125
      %p127 = scmp.ne.s32.totalorder %s115, %s116
      %p128 = scmp.eq.s32.totalorder %s22, 1
      %p129 = por %p127, %p128
      %p131 = scmp.ne.s32.totalorder %s116, %s130
      %p132 = scmp.eq.s32.totalorder %s22, 0
      %p133 = por %p131, %p132
      %s134 = ssub.s32 %s16, %s23
      %p135 = scmp.eq.s32.totalorder %s134, 0
      %s137 = sadd.s32 %s136, 1
      %s138 = scalar_select %p135, %s136, %s137
      %p141 = pneg %p135
      %p142 = scmp.eq.s32.totalorder %s16, 1
      %p143 = por %p141, %p142
      %p144 = scmp.ne.s32.totalorder %s136, %s139
      %p145 = scmp.eq.s32.totalorder %s16, 0
      %p146 = por %p144, %p145
      %p147 = scmp.ne.s32.totalorder %s136, %s139
      %p148 = scmp.eq.s32.totalorder %s21, 1
      %p149 = por %p147, %p148
      %p150 = scmp.ne.s32.totalorder %s139, %s140
      %p151 = scmp.eq.s32.totalorder %s21, 0
      %p152 = por %p150, %p151
      %p153 = scmp.ne.s32.totalorder %s139, %s140
      %p154 = scmp.eq.s32.totalorder %s22, 1
      %p155 = por %p153, %p154
      %p157 = scmp.ne.s32.totalorder %s140, %s156
      %p158 = scmp.eq.s32.totalorder %s22, 0
      %p159 = por %p157, %p158
      %p160 = scmp.le.s32.totalorder 1, %s16
      %p161 = scmp.lt.s32.totalorder %s16, 3
      %p162 = pnand %p160, %p161
      %p163 = pneg %p162
      // Predicated region
      $region9: #{tpu_custom_call.1} parent=5 // pred_check
        _
      $region10: #{tpu_custom_call.1} parent=5 // pred_check_branch
        %165 = sbr.rel (%p162) target = $region12
      $region11: #{tpu_custom_call.1} parent=5 // pred_region
        %s166 = ssub.s32 %s16, 1
        // Predicated region
        $region13: #{tpu_custom_call.1} parent=11 // pred_check
          %p167 = pneg %p63
        $region14: #{tpu_custom_call.1} parent=11 // pred_check_branch
          %169 = sbr.rel (%p167) target = $region16
        $region15: #{tpu_custom_call.1} parent=11 // pred_region
          _
        $region16: #{tpu_custom_call.1} parent=11 // pred_fallthru
          _
        // Predicated region
        $region17: #{tpu_custom_call.1} parent=11 // pred_check
          %p170 = pneg %p84
        $region18: #{tpu_custom_call.1} parent=11 // pred_check_branch
          %172 = sbr.rel (%p170) target = $region20
        $region19: #{tpu_custom_call.1} parent=11 // pred_region
          _
        $region20: #{tpu_custom_call.1} parent=11 // pred_fallthru
          _
        // Predicated region
        $region21: #{tpu_custom_call.1} parent=11 // pred_check
          %p173 = pneg %p105
        $region22: #{tpu_custom_call.1} parent=11 // pred_check_branch
          %175 = sbr.rel (%p173) target = $region24
        $region23: #{tpu_custom_call.1} parent=11 // pred_region
          _
        $region24: #{tpu_custom_call.1} parent=11 // pred_fallthru
          _
        // Predicated region
        $region25: #{tpu_custom_call.1} parent=11 // pred_check
          %p176 = pneg %p126
        $region26: #{tpu_custom_call.1} parent=11 // pred_check_branch
          %178 = sbr.rel (%p176) target = $region28
        $region27: #{tpu_custom_call.1} parent=11 // pred_region
          _
        $region28: #{tpu_custom_call.1} parent=11 // pred_fallthru
          _
      $region12: #{tpu_custom_call.1} parent=5 // pred_fallthru
        _
      %p179 = scmp.lt.s32.totalorder %s16, 2
      // Predicated region
      $region29: #{tpu_custom_call.1} parent=5 // pred_check
        %p180 = pneg %p179
      $region30: #{tpu_custom_call.1} parent=5 // pred_check_branch
        %182 = sbr.rel (%p180) target = $region32
      $region31: #{tpu_custom_call.1} parent=5 // pred_region
        // Predicated region
        $region33: #{tpu_custom_call.1} parent=31 // pred_check
          %p183 = pneg %p36
        $region34: #{tpu_custom_call.1} parent=31 // pred_check_branch
          %185 = sbr.rel (%p183) target = $region36
        $region35: #{tpu_custom_call.1} parent=31 // pred_region
          %p186 = scmp.lt.s32.totalorder %s16, 1
          %s187 = scalar_select %p186, %s16, 1
          %s188 = smul.addr %s187, 3
          %s189 = smul.addr %s188, 4
          %s190 = scalar_lea.vmem %s0, %s189
        $region36: #{tpu_custom_call.1} parent=31 // pred_fallthru
          _
      $region32: #{tpu_custom_call.1} parent=5 // pred_fallthru
        _
      %p191 = scmp.le.s32.totalorder 1, %s16
      %p192 = scmp.lt.s32.totalorder %s16, 3
      %p193 = pnand %p191, %p192
      %p194 = pneg %p193
      // Predicated region
      $region37: #{tpu_custom_call.1} parent=5 // pred_check
        _
      $region38: #{tpu_custom_call.1} parent=5 // pred_check_branch
        %196 = sbr.rel (%p193) target = $region40
      $region39: #{tpu_custom_call.1} parent=5 // pred_region
        %s197 = ssub.s32 %s16, 1
        %p198 = scmp.lt.s32.totalorder %s21, 1
        %s199 = scalar_select %p198, %s21, 1
        %s200 = smul.addr %s199, 3
        %s201 = smul.addr %s200, 4
        %s202 = scalar_lea.vmem %s0, %s201
        %p203 = pneg %p42
        %p204 = pneg %p39
        %p205 = pneg %p63
        %p206 = pneg %p60
        %p207 = pneg %p84
        %p208 = pneg %p81
        %p209 = pneg %p105
        %p210 = pneg %p102
        %p211 = pneg %p126
        %p212 = pneg %p123
        %p213 = pneg %p152
        %p214 = pneg %p149
        %s215 = sand.u32 %s139, 1
        %s216 = scalar_lea.sflag [#allocation4], %s215
        %s217 = sand.u32 %s139, 1
        %s218 = scalar_lea.vmem [#allocation3], %s217
        %p219 = scmp.lt.s32.totalorder %s21, 1
        %s220 = scalar_select %p219, %s21, 1
        %s221 = smul.addr %s220, 3
        %s222 = smul.addr %s221, 4
        %s223 = scalar_lea.vmem %s0, %s222
        %v224 = vld [vmem:[%s223] sm:$0xff]
        %v225 = vld [vmem:[%s223 + $0x8] sm:$0xf]
        %v226 = vld [vmem:[%s1] sm:$0xff]
        %v227 = vld [vmem:[%s1 + $0x8] sm:$0xff]
        %v228 = vld [vmem:[%s1 + $0x10] sm:$0xff]
        %v229 = vld [vmem:[%s1 + $0x18] sm:$0xff]
        %v230 = vld [vmem:[%s1 + $0x20] sm:$0xff]
        %v231 = vld [vmem:[%s1 + $0x28] sm:$0xff]
        %v232 = vld [vmem:[%s1 + $0x30] sm:$0xff]
        %v233 = vld [vmem:[%s1 + $0x38] sm:$0xff]
        %v234 = vld [vmem:[%s1 + $0x40] sm:$0xff]
        %v235 = vld [vmem:[%s1 + $0x48] sm:$0xff]
        %v236 = vld [vmem:[%s1 + $0x50] sm:$0xff]
        %v237 = vld [vmem:[%s1 + $0x58] sm:$0xff]
        %v238 = vld [vmem:[%s1 + $0x60] sm:$0xff]
        %v239 = vld [vmem:[%s1 + $0x68] sm:$0xff]
        %v240 = vld [vmem:[%s1 + $0x70] sm:$0xff]
        %v241 = vld [vmem:[%s1 + $0x78] sm:$0xff]
        %v242 = vld [vmem:[%s2] sm:$0xff]
        %v243 = vld [vmem:[%s2 + $0x8] sm:$0xff]
        %v244 = vld [vmem:[%s2 + $0x10] sm:$0xff]
        %v245 = vld [vmem:[%s2 + $0x18] sm:$0xff]
        %v246 = vld [vmem:[%s2 + $0x20] sm:$0xff]
        %v247 = vld [vmem:[%s2 + $0x28] sm:$0xff]
        %v248 = vld [vmem:[%s2 + $0x30] sm:$0xff]
        %v249 = vld [vmem:[%s2 + $0x38] sm:$0xff]
        %v250 = vld [vmem:[%s2 + $0x40] sm:$0xff]
        %v251 = vld [vmem:[%s2 + $0x48] sm:$0xff]
        %v252 = vld [vmem:[%s2 + $0x50] sm:$0xff]
        %v253 = vld [vmem:[%s2 + $0x58] sm:$0xff]
        %v254 = vld [vmem:[%s2 + $0x60] sm:$0xff]
        %v255 = vld [vmem:[%s2 + $0x68] sm:$0xff]
        %v256 = vld [vmem:[%s2 + $0x70] sm:$0xff]
        %v257 = vld [vmem:[%s2 + $0x78] sm:$0xff]
        %259 = vset.pattern.permute.xlu0 0
        %260 = vperm.xlu0 %259, %v242
        %v261 = vpop.permute.xlu0 %260
        %264 = vset.pattern.permute.xlu0 0
        %265 = vperm.xlu0 %264, %v243
        %v266 = vpop.permute.xlu0 %265
        %269 = vset.pattern.permute.xlu0 0
        %270 = vperm.xlu0 %269, %v244
        %v271 = vpop.permute.xlu0 %270
        %274 = vset.pattern.permute.xlu0 0
        %275 = vperm.xlu0 %274, %v245
        %v276 = vpop.permute.xlu0 %275
        %279 = vset.pattern.permute.xlu0 0
        %280 = vperm.xlu0 %279, %v246
        %v281 = vpop.permute.xlu0 %280
        %284 = vset.pattern.permute.xlu0 0
        %285 = vperm.xlu0 %284, %v247
        %v286 = vpop.permute.xlu0 %285
        %289 = vset.pattern.permute.xlu0 0
        %290 = vperm.xlu0 %289, %v248
        %v291 = vpop.permute.xlu0 %290
        %294 = vset.pattern.permute.xlu0 0
        %295 = vperm.xlu0 %294, %v249
        %v296 = vpop.permute.xlu0 %295
        %299 = vset.pattern.permute.xlu0 0
        %300 = vperm.xlu0 %299, %v250
        %v301 = vpop.permute.xlu0 %300
        %304 = vset.pattern.permute.xlu0 0
        %305 = vperm.xlu0 %304, %v251
        %v306 = vpop.permute.xlu0 %305
        %309 = vset.pattern.permute.xlu0 0
        %310 = vperm.xlu0 %309, %v252
        %v311 = vpop.permute.xlu0 %310
        %314 = vset.pattern.permute.xlu0 0
        %315 = vperm.xlu0 %314, %v253
        %v316 = vpop.permute.xlu0 %315
        %319 = vset.pattern.permute.xlu0 0
        %320 = vperm.xlu0 %319, %v254
        %v321 = vpop.permute.xlu0 %320
        %324 = vset.pattern.permute.xlu0 0
        %325 = vperm.xlu0 %324, %v255
        %v326 = vpop.permute.xlu0 %325
        %329 = vset.pattern.permute.xlu0 0
        %330 = vperm.xlu0 %329, %v256
        %v331 = vpop.permute.xlu0 %330
        %334 = vset.pattern.permute.xlu0 0
        %335 = vperm.xlu0 %334, %v257
        %v336 = vpop.permute.xlu0 %335
        %340 = vst [vmem:[#allocation1] ss:$2 sm:$0xff] %v224
        %s341 = scalar_lea.vmem [#allocation1], 16
        %342 = vst [vmem:[%s341] ss:$2 sm:$0xff] %v225
        %v343 = vld.sshfl [vmem:[#allocation1] sm:$0xff pattern:$0x75316420]
        %v344 = vld.sshfl [vmem:[#allocation1 + $0x8] sm:$0xff pattern:$0x75316420]
        %v345 = vld.sshfl [vmem:[#allocation1 + $0x10] sm:$0xff pattern:$0x75316420]
        %vm346 = vcmask 31744
        %v348 = vsel %vm346, %v226, 0
        %v351 = vsel %vm346, %v227, 0
        %v354 = vsel %vm346, %v228, 0
        %v357 = vsel %vm346, %v229, 0
        %v360 = vsel %vm346, %v230, 0
        %v363 = vsel %vm346, %v231, 0
        %v366 = vsel %vm346, %v232, 0
        %v369 = vsel %vm346, %v233, 0
        %v372 = vsel %vm346, %v234, 0
        %v375 = vsel %vm346, %v235, 0
        %v378 = vsel %vm346, %v236, 0
        %v381 = vsel %vm346, %v237, 0
        %v384 = vsel %vm346, %v238, 0
        %v387 = vsel %vm346, %v239, 0
        %v390 = vsel %vm346, %v240, 0
        %v393 = vsel %vm346, %v241, 0
        %vm395 = vcmask 1043456
        %v396 = vsel %vm395, %v343, 0
        %v398 = vsel %vm395, %v344, 0
        %v400 = vsel %vm395, %v345, 0
        %402 = vmatpush.msra.mxu0 0.0
        %403 = vmatpush.msra.mxu0 0.0
        %404 = vmatpush.msra.mxu0 0.0
        %405 = vmatpush.msra.mxu0 0.0
        %406 = vmatpush.msra.mxu0 0.0
        %407 = vmatpush.msra.mxu0 0.0
        %408 = vmatpush.msra.mxu0 0.0
        %409 = vmatpush.msra.mxu0 0.0
        %410 = vmatpush.msra.mxu0 0.0
        %411 = vmatpush.msra.mxu0 0.0
        %412 = vmatpush.msra.mxu0 0.0
        %413 = vmatpush.msra.mxu0 0.0
        %414 = vmatpush.msra.mxu0 0.0
        %415 = vmatpush.msra.mxu0 0.0
        %416 = vmatpush.msra.mxu0 0.0
        %417 = vmatpush.msra.mxu0 %v396
        %418 = vmatmul.f32.gmra.mxu0 %v348
        %v419 = vpop.f32.mrf.mxu0
        %v420 = vadd.f32 %v261, %v419
        %421 = vmatmul.f32.gmra.mxu0 %v351
        %v422 = vpop.f32.mrf.mxu0
        %v423 = vadd.f32 %v266, %v422
        %424 = vmatmul.f32.gmra.mxu0 %v354
        %v425 = vpop.f32.mrf.mxu0
        %v426 = vadd.f32 %v271, %v425
        %427 = vmatmul.f32.gmra.mxu0 %v357
        %v428 = vpop.f32.mrf.mxu0
        %v429 = vadd.f32 %v276, %v428
        %430 = vmatmul.f32.gmra.mxu0 %v360
        %v431 = vpop.f32.mrf.mxu0
        %v432 = vadd.f32 %v281, %v431
        %433 = vmatmul.f32.gmra.mxu0 %v363
        %v434 = vpop.f32.mrf.mxu0
        %v435 = vadd.f32 %v286, %v434
        %436 = vmatmul.f32.gmra.mxu0 %v366
        %v437 = vpop.f32.mrf.mxu0
        %v438 = vadd.f32 %v291, %v437
        %439 = vmatmul.f32.gmra.mxu0 %v369
        %v440 = vpop.f32.mrf.mxu0
        %v441 = vadd.f32 %v296, %v440
        %442 = vmatmul.f32.gmra.mxu0 %v372
        %v443 = vpop.f32.mrf.mxu0
        %v444 = vadd.f32 %v301, %v443
        %445 = vmatmul.f32.gmra.mxu0 %v375
        %v446 = vpop.f32.mrf.mxu0
        %v447 = vadd.f32 %v306, %v446
        %448 = vmatmul.f32.gmra.mxu0 %v378
        %v449 = vpop.f32.mrf.mxu0
        %v450 = vadd.f32 %v311, %v449
        %451 = vmatmul.f32.gmra.mxu0 %v381
        %v452 = vpop.f32.mrf.mxu0
        %v453 = vadd.f32 %v316, %v452
        %454 = vmatmul.f32.gmra.mxu0 %v384
        %v455 = vpop.f32.mrf.mxu0
        %v456 = vadd.f32 %v321, %v455
        %457 = vmatmul.f32.gmra.mxu0 %v387
        %v458 = vpop.f32.mrf.mxu0
        %v459 = vadd.f32 %v326, %v458
        %460 = vmatmul.f32.gmra.mxu0 %v390
        %v461 = vpop.f32.mrf.mxu0
        %v462 = vadd.f32 %v331, %v461
        %463 = vmatmul.f32.gmra.mxu0 %v393
        %v464 = vpop.f32.mrf.mxu0
        %v465 = vadd.f32 %v336, %v464
        %466 = vdwg.mxu0
        %467 = vmatpush.msra.mxu0 0.0
        %468 = vmatpush.msra.mxu0 0.0
        %469 = vmatpush.msra.mxu0 0.0
        %470 = vmatpush.msra.mxu0 0.0
        %471 = vmatpush.msra.mxu0 0.0
        %472 = vmatpush.msra.mxu0 0.0
        %473 = vmatpush.msra.mxu0 0.0
        %474 = vmatpush.msra.mxu0 0.0
        %475 = vmatpush.msra.mxu0 0.0
        %476 = vmatpush.msra.mxu0 0.0
        %477 = vmatpush.msra.mxu0 0.0
        %478 = vmatpush.msra.mxu0 0.0
        %479 = vmatpush.msra.mxu0 0.0
        %480 = vmatpush.msra.mxu0 0.0
        %481 = vmatpush.msra.mxu0 0.0
        %482 = vmatpush.msra.mxu0 %v398
        %483 = vmatmul.f32.gmra.mxu0 %v348
        %v484 = vpop.f32.mrf.mxu0
        %v485 = vadd.f32 %v261, %v484
        %486 = vmatmul.f32.gmra.mxu0 %v351
        %v487 = vpop.f32.mrf.mxu0
        %v488 = vadd.f32 %v266, %v487
        %489 = vmatmul.f32.gmra.mxu0 %v354
        %v490 = vpop.f32.mrf.mxu0
        %v491 = vadd.f32 %v271, %v490
        %492 = vmatmul.f32.gmra.mxu0 %v357
        %v493 = vpop.f32.mrf.mxu0
        %v494 = vadd.f32 %v276, %v493
        %495 = vmatmul.f32.gmra.mxu0 %v360
        %v496 = vpop.f32.mrf.mxu0
        %v497 = vadd.f32 %v281, %v496
        %498 = vmatmul.f32.gmra.mxu0 %v363
        %v499 = vpop.f32.mrf.mxu0
        %v500 = vadd.f32 %v286, %v499
        %501 = vmatmul.f32.gmra.mxu0 %v366
        %v502 = vpop.f32.mrf.mxu0
        %v503 = vadd.f32 %v291, %v502
        %504 = vmatmul.f32.gmra.mxu0 %v369
        %v505 = vpop.f32.mrf.mxu0
        %v506 = vadd.f32 %v296, %v505
        %507 = vmatmul.f32.gmra.mxu0 %v372
        %v508 = vpop.f32.mrf.mxu0
        %v509 = vadd.f32 %v301, %v508
        %510 = vmatmul.f32.gmra.mxu0 %v375
        %v511 = vpop.f32.mrf.mxu0
        %v512 = vadd.f32 %v306, %v511
        %513 = vmatmul.f32.gmra.mxu0 %v378
        %v514 = vpop.f32.mrf.mxu0
        %v515 = vadd.f32 %v311, %v514
        %516 = vmatmul.f32.gmra.mxu0 %v381
        %v517 = vpop.f32.mrf.mxu0
        %v518 = vadd.f32 %v316, %v517
        %519 = vmatmul.f32.gmra.mxu0 %v384
        %v520 = vpop.f32.mrf.mxu0
        %v521 = vadd.f32 %v321, %v520
        %522 = vmatmul.f32.gmra.mxu0 %v387
        %v523 = vpop.f32.mrf.mxu0
        %v524 = vadd.f32 %v326, %v523
        %525 = vmatmul.f32.gmra.mxu0 %v390
        %v526 = vpop.f32.mrf.mxu0
        %v527 = vadd.f32 %v331, %v526
        %528 = vmatmul.f32.gmra.mxu0 %v393
        %v529 = vpop.f32.mrf.mxu0
        %v530 = vadd.f32 %v336, %v529
        %531 = vdwg.mxu0
        %532 = vmatpush.msra.mxu0 0.0
        %533 = vmatpush.msra.mxu0 0.0
        %534 = vmatpush.msra.mxu0 0.0
        %535 = vmatpush.msra.mxu0 0.0
        %536 = vmatpush.msra.mxu0 0.0
        %537 = vmatpush.msra.mxu0 0.0
        %538 = vmatpush.msra.mxu0 0.0
        %539 = vmatpush.msra.mxu0 0.0
        %540 = vmatpush.msra.mxu0 0.0
        %541 = vmatpush.msra.mxu0 0.0
        %542 = vmatpush.msra.mxu0 0.0
        %543 = vmatpush.msra.mxu0 0.0
        %544 = vmatpush.msra.mxu0 0.0
        %545 = vmatpush.msra.mxu0 0.0
        %546 = vmatpush.msra.mxu0 0.0
        %547 = vmatpush.msra.mxu0 %v400
        %548 = vmatmul.f32.gmra.mxu0 %v348
        %v549 = vpop.f32.mrf.mxu0
        %v550 = vadd.f32 %v261, %v549
        %551 = vmatmul.f32.gmra.mxu0 %v351
        %v552 = vpop.f32.mrf.mxu0
        %v553 = vadd.f32 %v266, %v552
        %554 = vmatmul.f32.gmra.mxu0 %v354
        %v555 = vpop.f32.mrf.mxu0
        %v556 = vadd.f32 %v271, %v555
        %557 = vmatmul.f32.gmra.mxu0 %v357
        %v558 = vpop.f32.mrf.mxu0
        %v559 = vadd.f32 %v276, %v558
        %560 = vmatmul.f32.gmra.mxu0 %v360
        %v561 = vpop.f32.mrf.mxu0
        %v562 = vadd.f32 %v281, %v561
        %563 = vmatmul.f32.gmra.mxu0 %v363
        %v564 = vpop.f32.mrf.mxu0
        %v565 = vadd.f32 %v286, %v564
        %566 = vmatmul.f32.gmra.mxu0 %v366
        %v567 = vpop.f32.mrf.mxu0
        %v568 = vadd.f32 %v291, %v567
        %569 = vmatmul.f32.gmra.mxu0 %v369
        %v570 = vpop.f32.mrf.mxu0
        %v571 = vadd.f32 %v296, %v570
        %572 = vmatmul.f32.gmra.mxu0 %v372
        %v573 = vpop.f32.mrf.mxu0
        %v574 = vadd.f32 %v301, %v573
        %575 = vmatmul.f32.gmra.mxu0 %v375
        %v576 = vpop.f32.mrf.mxu0
        %v577 = vadd.f32 %v306, %v576
        %578 = vmatmul.f32.gmra.mxu0 %v378
        %v579 = vpop.f32.mrf.mxu0
        %v580 = vadd.f32 %v311, %v579
        %581 = vmatmul.f32.gmra.mxu0 %v381
        %v582 = vpop.f32.mrf.mxu0
        %v583 = vadd.f32 %v316, %v582
        %584 = vmatmul.f32.gmra.mxu0 %v384
        %v585 = vpop.f32.mrf.mxu0
        %v586 = vadd.f32 %v321, %v585
        %587 = vmatmul.f32.gmra.mxu0 %v387
        %v588 = vpop.f32.mrf.mxu0
        %v589 = vadd.f32 %v326, %v588
        %590 = vmatmul.f32.gmra.mxu0 %v390
        %v591 = vpop.f32.mrf.mxu0
        %v592 = vadd.f32 %v331, %v591
        %593 = vmatmul.f32.gmra.mxu0 %v393
        %v594 = vpop.f32.mrf.mxu0
        %v595 = vadd.f32 %v336, %v594
        %596 = vdwg.mxu0
        %v597 = vmax.f32 %v420, 0.0
        %v598 = vmax.f32 %v485, 0.0
        %v599 = vmax.f32 %v550, 0.0
        %v600 = vmax.f32 %v423, 0.0
        %v601 = vmax.f32 %v488, 0.0
        %v602 = vmax.f32 %v553, 0.0
        %v603 = vmax.f32 %v426, 0.0
        %v604 = vmax.f32 %v491, 0.0
        %v605 = vmax.f32 %v556, 0.0
        %v606 = vmax.f32 %v429, 0.0
        %v607 = vmax.f32 %v494, 0.0
        %v608 = vmax.f32 %v559, 0.0
        %v609 = vmax.f32 %v432, 0.0
        %v610 = vmax.f32 %v497, 0.0
        %v611 = vmax.f32 %v562, 0.0
        %v612 = vmax.f32 %v435, 0.0
        %v613 = vmax.f32 %v500, 0.0
        %v614 = vmax.f32 %v565, 0.0
        %v615 = vmax.f32 %v438, 0.0
        %v616 = vmax.f32 %v503, 0.0
        %v617 = vmax.f32 %v568, 0.0
        %v618 = vmax.f32 %v441, 0.0
        %v619 = vmax.f32 %v506, 0.0
        %v620 = vmax.f32 %v571, 0.0
        %v621 = vmax.f32 %v444, 0.0
        %v622 = vmax.f32 %v509, 0.0
        %v623 = vmax.f32 %v574, 0.0
        %v624 = vmax.f32 %v447, 0.0
        %v625 = vmax.f32 %v512, 0.0
        %v626 = vmax.f32 %v577, 0.0
        %v627 = vmax.f32 %v450, 0.0
        %v628 = vmax.f32 %v515, 0.0
        %v629 = vmax.f32 %v580, 0.0
        %v630 = vmax.f32 %v453, 0.0
        %v631 = vmax.f32 %v518, 0.0
        %v632 = vmax.f32 %v583, 0.0
        %v633 = vmax.f32 %v456, 0.0
        %v634 = vmax.f32 %v521, 0.0
        %v635 = vmax.f32 %v586, 0.0
        %v636 = vmax.f32 %v459, 0.0
        %v637 = vmax.f32 %v524, 0.0
        %v638 = vmax.f32 %v589, 0.0
        %v639 = vmax.f32 %v462, 0.0
        %v640 = vmax.f32 %v527, 0.0
        %v641 = vmax.f32 %v592, 0.0
        %v642 = vmax.f32 %v465, 0.0
        %v643 = vmax.f32 %v530, 0.0
        %v644 = vmax.f32 %v595, 0.0
        %v645 = vld [vmem:[%s3] sm:$0x1]
        %v646 = vld [vmem:[%s1 + $0x80] sm:$0xff]
        %v647 = vld [vmem:[%s1 + $0x88] sm:$0xff]
        %v648 = vld [vmem:[%s1 + $0x90] sm:$0xff]
        %v649 = vld [vmem:[%s1 + $0x98] sm:$0xff]
        %v650 = vld [vmem:[%s1 + $0xa0] sm:$0xff]
        %v651 = vld [vmem:[%s1 + $0xa8] sm:$0xff]
        %v652 = vld [vmem:[%s1 + $0xb0] sm:$0xff]
        %v653 = vld [vmem:[%s1 + $0xb8] sm:$0xff]
        %v654 = vld [vmem:[%s1 + $0xc0] sm:$0xff]
        %v655 = vld [vmem:[%s1 + $0xc8] sm:$0xff]
        %v656 = vld [vmem:[%s1 + $0xd0] sm:$0xff]
        %v657 = vld [vmem:[%s1 + $0xd8] sm:$0xff]
        %v658 = vld [vmem:[%s1 + $0xe0] sm:$0xff]
        %v659 = vld [vmem:[%s1 + $0xe8] sm:$0xff]
        %v660 = vld [vmem:[%s1 + $0xf0] sm:$0xff]
        %v661 = vld [vmem:[%s1 + $0xf8] sm:$0xff]
        %v662 = vld [vmem:[%s2 + $0x80] sm:$0xff]
        %v663 = vld [vmem:[%s2 + $0x88] sm:$0xff]
        %v664 = vld [vmem:[%s2 + $0x90] sm:$0xff]
        %v665 = vld [vmem:[%s2 + $0x98] sm:$0xff]
        %v666 = vld [vmem:[%s2 + $0xa0] sm:$0xff]
        %v667 = vld [vmem:[%s2 + $0xa8] sm:$0xff]
        %v668 = vld [vmem:[%s2 + $0xb0] sm:$0xff]
        %v669 = vld [vmem:[%s2 + $0xb8] sm:$0xff]
        %v670 = vld [vmem:[%s2 + $0xc0] sm:$0xff]
        %v671 = vld [vmem:[%s2 + $0xc8] sm:$0xff]
        %v672 = vld [vmem:[%s2 + $0xd0] sm:$0xff]
        %v673 = vld [vmem:[%s2 + $0xd8] sm:$0xff]
        %v674 = vld [vmem:[%s2 + $0xe0] sm:$0xff]
        %v675 = vld [vmem:[%s2 + $0xe8] sm:$0xff]
        %v676 = vld [vmem:[%s2 + $0xf0] sm:$0xff]
        %v677 = vld [vmem:[%s2 + $0xf8] sm:$0xff]
        %679 = vset.pattern.permute.xlu0 0
        %680 = vperm.xlu0 %679, %v662
        %v681 = vpop.permute.xlu0 %680
        %684 = vset.pattern.permute.xlu0 0
        %685 = vperm.xlu0 %684, %v663
        %v686 = vpop.permute.xlu0 %685
        %689 = vset.pattern.permute.xlu0 0
        %690 = vperm.xlu0 %689, %v664
        %v691 = vpop.permute.xlu0 %690
        %694 = vset.pattern.permute.xlu0 0
        %695 = vperm.xlu0 %694, %v665
        %v696 = vpop.permute.xlu0 %695
        %699 = vset.pattern.permute.xlu0 0
        %700 = vperm.xlu0 %699, %v666
        %v701 = vpop.permute.xlu0 %700
        %704 = vset.pattern.permute.xlu0 0
        %705 = vperm.xlu0 %704, %v667
        %v706 = vpop.permute.xlu0 %705
        %709 = vset.pattern.permute.xlu0 0
        %710 = vperm.xlu0 %709, %v668
        %v711 = vpop.permute.xlu0 %710
        %714 = vset.pattern.permute.xlu0 0
        %715 = vperm.xlu0 %714, %v669
        %v716 = vpop.permute.xlu0 %715
        %719 = vset.pattern.permute.xlu0 0
        %720 = vperm.xlu0 %719, %v670
        %v721 = vpop.permute.xlu0 %720
        %724 = vset.pattern.permute.xlu0 0
        %725 = vperm.xlu0 %724, %v671
        %v726 = vpop.permute.xlu0 %725
        %729 = vset.pattern.permute.xlu0 0
        %730 = vperm.xlu0 %729, %v672
        %v731 = vpop.permute.xlu0 %730
        %734 = vset.pattern.permute.xlu0 0
        %735 = vperm.xlu0 %734, %v673
        %v736 = vpop.permute.xlu0 %735
        %739 = vset.pattern.permute.xlu0 0
        %740 = vperm.xlu0 %739, %v674
        %v741 = vpop.permute.xlu0 %740
        %744 = vset.pattern.permute.xlu0 0
        %745 = vperm.xlu0 %744, %v675
        %v746 = vpop.permute.xlu0 %745
        %749 = vset.pattern.permute.xlu0 0
        %750 = vperm.xlu0 %749, %v676
        %v751 = vpop.permute.xlu0 %750
        %754 = vset.pattern.permute.xlu0 0
        %755 = vperm.xlu0 %754, %v677
        %v756 = vpop.permute.xlu0 %755
        %758 = vst [vmem:[#allocation1] ss:$2 sm:$0xff] %v224
        %s759 = scalar_lea.vmem [#allocation1], 16
        %760 = vst [vmem:[%s759] ss:$2 sm:$0xff] %v225
        %v761 = vld.sshfl [vmem:[#allocation1] sm:$0xff pattern:$0x75316420]
        %v762 = vld.sshfl [vmem:[#allocation1 + $0x8] sm:$0xff pattern:$0x75316420]
        %v763 = vld.sshfl [vmem:[#allocation1 + $0x10] sm:$0xff pattern:$0x75316420]
        %v765 = vsel %vm346, %v646, 0
        %v768 = vsel %vm346, %v647, 0
        %v771 = vsel %vm346, %v648, 0
        %v774 = vsel %vm346, %v649, 0
        %v777 = vsel %vm346, %v650, 0
        %v780 = vsel %vm346, %v651, 0
        %v783 = vsel %vm346, %v652, 0
        %v786 = vsel %vm346, %v653, 0
        %v789 = vsel %vm346, %v654, 0
        %v792 = vsel %vm346, %v655, 0
        %v795 = vsel %vm346, %v656, 0
        %v798 = vsel %vm346, %v657, 0
        %v801 = vsel %vm346, %v658, 0
        %v804 = vsel %vm346, %v659, 0
        %v807 = vsel %vm346, %v660, 0
        %v810 = vsel %vm346, %v661, 0
        %v812 = vsel %vm395, %v761, 0
        %v814 = vsel %vm395, %v762, 0
        %v816 = vsel %vm395, %v763, 0
        %818 = vmatpush.msra.mxu0 0.0
        %819 = vmatpush.msra.mxu0 0.0
        %820 = vmatpush.msra.mxu0 0.0
        %821 = vmatpush.msra.mxu0 0.0
        %822 = vmatpush.msra.mxu0 0.0
        %823 = vmatpush.msra.mxu0 0.0
        %824 = vmatpush.msra.mxu0 0.0
        %825 = vmatpush.msra.mxu0 0.0
        %826 = vmatpush.msra.mxu0 0.0
        %827 = vmatpush.msra.mxu0 0.0
        %828 = vmatpush.msra.mxu0 0.0
        %829 = vmatpush.msra.mxu0 0.0
        %830 = vmatpush.msra.mxu0 0.0
        %831 = vmatpush.msra.mxu0 0.0
        %832 = vmatpush.msra.mxu0 0.0
        %833 = vmatpush.msra.mxu0 %v812
        %834 = vmatmul.f32.gmra.mxu0 %v765
        %v835 = vpop.f32.mrf.mxu0
        %v836 = vadd.f32 %v681, %v835
        %837 = vmatmul.f32.gmra.mxu0 %v768
        %v838 = vpop.f32.mrf.mxu0
        %v839 = vadd.f32 %v686, %v838
        %840 = vmatmul.f32.gmra.mxu0 %v771
        %v841 = vpop.f32.mrf.mxu0
        %v842 = vadd.f32 %v691, %v841
        %843 = vmatmul.f32.gmra.mxu0 %v774
        %v844 = vpop.f32.mrf.mxu0
        %v845 = vadd.f32 %v696, %v844
        %846 = vmatmul.f32.gmra.mxu0 %v777
        %v847 = vpop.f32.mrf.mxu0
        %v848 = vadd.f32 %v701, %v847
        %849 = vmatmul.f32.gmra.mxu0 %v780
        %v850 = vpop.f32.mrf.mxu0
        %v851 = vadd.f32 %v706, %v850
        %852 = vmatmul.f32.gmra.mxu0 %v783
        %v853 = vpop.f32.mrf.mxu0
        %v854 = vadd.f32 %v711, %v853
        %855 = vmatmul.f32.gmra.mxu0 %v786
        %v856 = vpop.f32.mrf.mxu0
        %v857 = vadd.f32 %v716, %v856
        %858 = vmatmul.f32.gmra.mxu0 %v789
        %v859 = vpop.f32.mrf.mxu0
        %v860 = vadd.f32 %v721, %v859
        %861 = vmatmul.f32.gmra.mxu0 %v792
        %v862 = vpop.f32.mrf.mxu0
        %v863 = vadd.f32 %v726, %v862
        %864 = vmatmul.f32.gmra.mxu0 %v795
        %v865 = vpop.f32.mrf.mxu0
        %v866 = vadd.f32 %v731, %v865
        %867 = vmatmul.f32.gmra.mxu0 %v798
        %v868 = vpop.f32.mrf.mxu0
        %v869 = vadd.f32 %v736, %v868
        %870 = vmatmul.f32.gmra.mxu0 %v801
        %v871 = vpop.f32.mrf.mxu0
        %v872 = vadd.f32 %v741, %v871
        %873 = vmatmul.f32.gmra.mxu0 %v804
        %v874 = vpop.f32.mrf.mxu0
        %v875 = vadd.f32 %v746, %v874
        %876 = vmatmul.f32.gmra.mxu0 %v807
        %v877 = vpop.f32.mrf.mxu0
        %v878 = vadd.f32 %v751, %v877
        %879 = vmatmul.f32.gmra.mxu0 %v810
        %v880 = vpop.f32.mrf.mxu0
        %v881 = vadd.f32 %v756, %v880
        %882 = vdwg.mxu0
        %883 = vmatpush.msra.mxu0 0.0
        %884 = vmatpush.msra.mxu0 0.0
        %885 = vmatpush.msra.mxu0 0.0
        %886 = vmatpush.msra.mxu0 0.0
        %887 = vmatpush.msra.mxu0 0.0
        %888 = vmatpush.msra.mxu0 0.0
        %889 = vmatpush.msra.mxu0 0.0
        %890 = vmatpush.msra.mxu0 0.0
        %891 = vmatpush.msra.mxu0 0.0
        %892 = vmatpush.msra.mxu0 0.0
        %893 = vmatpush.msra.mxu0 0.0
        %894 = vmatpush.msra.mxu0 0.0
        %895 = vmatpush.msra.mxu0 0.0
        %896 = vmatpush.msra.mxu0 0.0
        %897 = vmatpush.msra.mxu0 0.0
        %898 = vmatpush.msra.mxu0 %v814
        %899 = vmatmul.f32.gmra.mxu0 %v765
        %v900 = vpop.f32.mrf.mxu0
        %v901 = vadd.f32 %v681, %v900
        %902 = vmatmul.f32.gmra.mxu0 %v768
        %v903 = vpop.f32.mrf.mxu0
        %v904 = vadd.f32 %v686, %v903
        %905 = vmatmul.f32.gmra.mxu0 %v771
        %v906 = vpop.f32.mrf.mxu0
        %v907 = vadd.f32 %v691, %v906
        %908 = vmatmul.f32.gmra.mxu0 %v774
        %v909 = vpop.f32.mrf.mxu0
        %v910 = vadd.f32 %v696, %v909
        %911 = vmatmul.f32.gmra.mxu0 %v777
        %v912 = vpop.f32.mrf.mxu0
        %v913 = vadd.f32 %v701, %v912
        %914 = vmatmul.f32.gmra.mxu0 %v780
        %v915 = vpop.f32.mrf.mxu0
        %v916 = vadd.f32 %v706, %v915
        %917 = vmatmul.f32.gmra.mxu0 %v783
        %v918 = vpop.f32.mrf.mxu0
        %v919 = vadd.f32 %v711, %v918
        %920 = vmatmul.f32.gmra.mxu0 %v786
        %v921 = vpop.f32.mrf.mxu0
        %v922 = vadd.f32 %v716, %v921
        %923 = vmatmul.f32.gmra.mxu0 %v789
        %v924 = vpop.f32.mrf.mxu0
        %v925 = vadd.f32 %v721, %v924
        %926 = vmatmul.f32.gmra.mxu0 %v792
        %v927 = vpop.f32.mrf.mxu0
        %v928 = vadd.f32 %v726, %v927
        %929 = vmatmul.f32.gmra.mxu0 %v795
        %v930 = vpop.f32.mrf.mxu0
        %v931 = vadd.f32 %v731, %v930
        %932 = vmatmul.f32.gmra.mxu0 %v798
        %v933 = vpop.f32.mrf.mxu0
        %v934 = vadd.f32 %v736, %v933
        %935 = vmatmul.f32.gmra.mxu0 %v801
        %v936 = vpop.f32.mrf.mxu0
        %v937 = vadd.f32 %v741, %v936
        %938 = vmatmul.f32.gmra.mxu0 %v804
        %v939 = vpop.f32.mrf.mxu0
        %v940 = vadd.f32 %v746, %v939
        %941 = vmatmul.f32.gmra.mxu0 %v807
        %v942 = vpop.f32.mrf.mxu0
        %v943 = vadd.f32 %v751, %v942
        %944 = vmatmul.f32.gmra.mxu0 %v810
        %v945 = vpop.f32.mrf.mxu0
        %v946 = vadd.f32 %v756, %v945
        %947 = vdwg.mxu0
        %948 = vmatpush.msra.mxu0 0.0
        %949 = vmatpush.msra.mxu0 0.0
        %950 = vmatpush.msra.mxu0 0.0
        %951 = vmatpush.msra.mxu0 0.0
        %952 = vmatpush.msra.mxu0 0.0
        %953 = vmatpush.msra.mxu0 0.0
        %954 = vmatpush.msra.mxu0 0.0
        %955 = vmatpush.msra.mxu0 0.0
        %956 = vmatpush.msra.mxu0 0.0
        %957 = vmatpush.msra.mxu0 0.0
        %958 = vmatpush.msra.mxu0 0.0
        %959 = vmatpush.msra.mxu0 0.0
        %960 = vmatpush.msra.mxu0 0.0
        %961 = vmatpush.msra.mxu0 0.0
        %962 = vmatpush.msra.mxu0 0.0
        %963 = vmatpush.msra.mxu0 %v816
        %964 = vmatmul.f32.gmra.mxu0 %v765
        %v965 = vpop.f32.mrf.mxu0
        %v966 = vadd.f32 %v681, %v965
        %967 = vmatmul.f32.gmra.mxu0 %v768
        %v968 = vpop.f32.mrf.mxu0
        %v969 = vadd.f32 %v686, %v968
        %970 = vmatmul.f32.gmra.mxu0 %v771
        %v971 = vpop.f32.mrf.mxu0
        %v972 = vadd.f32 %v691, %v971
        %973 = vmatmul.f32.gmra.mxu0 %v774
        %v974 = vpop.f32.mrf.mxu0
        %v975 = vadd.f32 %v696, %v974
        %976 = vmatmul.f32.gmra.mxu0 %v777
        %v977 = vpop.f32.mrf.mxu0
        %v978 = vadd.f32 %v701, %v977
        %979 = vmatmul.f32.gmra.mxu0 %v780
        %v980 = vpop.f32.mrf.mxu0
        %v981 = vadd.f32 %v706, %v980
        %982 = vmatmul.f32.gmra.mxu0 %v783
        %v983 = vpop.f32.mrf.mxu0
        %v984 = vadd.f32 %v711, %v983
        %985 = vmatmul.f32.gmra.mxu0 %v786
        %v986 = vpop.f32.mrf.mxu0
        %v987 = vadd.f32 %v716, %v986
        %988 = vmatmul.f32.gmra.mxu0 %v789
        %v989 = vpop.f32.mrf.mxu0
        %v990 = vadd.f32 %v721, %v989
        %991 = vmatmul.f32.gmra.mxu0 %v792
        %v992 = vpop.f32.mrf.mxu0
        %v993 = vadd.f32 %v726, %v992
        %994 = vmatmul.f32.gmra.mxu0 %v795
        %v995 = vpop.f32.mrf.mxu0
        %v996 = vadd.f32 %v731, %v995
        %997 = vmatmul.f32.gmra.mxu0 %v798
        %v998 = vpop.f32.mrf.mxu0
        %v999 = vadd.f32 %v736, %v998
        %1000 = vmatmul.f32.gmra.mxu0 %v801
        %v1001 = vpop.f32.mrf.mxu0
        %v1002 = vadd.f32 %v741, %v1001
        %1003 = vmatmul.f32.gmra.mxu0 %v804
        %v1004 = vpop.f32.mrf.mxu0
        %v1005 = vadd.f32 %v746, %v1004
        %1006 = vmatmul.f32.gmra.mxu0 %v807
        %v1007 = vpop.f32.mrf.mxu0
        %v1008 = vadd.f32 %v751, %v1007
        %1009 = vmatmul.f32.gmra.mxu0 %v810
        %v1010 = vpop.f32.mrf.mxu0
        %v1011 = vadd.f32 %v756, %v1010
        %1012 = vdwg.mxu0
        %v1013 = vmax.f32 %v836, 0.0
        %v1014 = vmax.f32 %v901, 0.0
        %v1015 = vmax.f32 %v966, 0.0
        %v1016 = vmax.f32 %v839, 0.0
        %v1017 = vmax.f32 %v904, 0.0
        %v1018 = vmax.f32 %v969, 0.0
        %v1019 = vmax.f32 %v842, 0.0
        %v1020 = vmax.f32 %v907, 0.0
        %v1021 = vmax.f32 %v972, 0.0
        %v1022 = vmax.f32 %v845, 0.0
        %v1023 = vmax.f32 %v910, 0.0
        %v1024 = vmax.f32 %v975, 0.0
        %v1025 = vmax.f32 %v848, 0.0
        %v1026 = vmax.f32 %v913, 0.0
        %v1027 = vmax.f32 %v978, 0.0
        %v1028 = vmax.f32 %v851, 0.0
        %v1029 = vmax.f32 %v916, 0.0
        %v1030 = vmax.f32 %v981, 0.0
        %v1031 = vmax.f32 %v854, 0.0
        %v1032 = vmax.f32 %v919, 0.0
        %v1033 = vmax.f32 %v984, 0.0
        %v1034 = vmax.f32 %v857, 0.0
        %v1035 = vmax.f32 %v922, 0.0
        %v1036 = vmax.f32 %v987, 0.0
        %v1037 = vmax.f32 %v860, 0.0
        %v1038 = vmax.f32 %v925, 0.0
        %v1039 = vmax.f32 %v990, 0.0
        %v1040 = vmax.f32 %v863, 0.0
        %v1041 = vmax.f32 %v928, 0.0
        %v1042 = vmax.f32 %v993, 0.0
        %v1043 = vmax.f32 %v866, 0.0
        %v1044 = vmax.f32 %v931, 0.0
        %v1045 = vmax.f32 %v996, 0.0
        %v1046 = vmax.f32 %v869, 0.0
        %v1047 = vmax.f32 %v934, 0.0
        %v1048 = vmax.f32 %v999, 0.0
        %v1049 = vmax.f32 %v872, 0.0
        %v1050 = vmax.f32 %v937, 0.0
        %v1051 = vmax.f32 %v1002, 0.0
        %v1052 = vmax.f32 %v875, 0.0
        %v1053 = vmax.f32 %v940, 0.0
        %v1054 = vmax.f32 %v1005, 0.0
        %v1055 = vmax.f32 %v878, 0.0
        %v1056 = vmax.f32 %v943, 0.0
        %v1057 = vmax.f32 %v1008, 0.0
        %v1058 = vmax.f32 %v881, 0.0
        %v1059 = vmax.f32 %v946, 0.0
        %v1060 = vmax.f32 %v1011, 0.0
        %v1061 = vld [vmem:[%s3 + $0x1] sm:$0x1]
        %1062 = vmatpush.msra.mxu0 %v1058
        %1063 = vmatpush.msra.mxu0 %v1055
        %1064 = vmatpush.msra.mxu0 %v1052
        %1065 = vmatpush.msra.mxu0 %v1049
        %1066 = vmatpush.msra.mxu0 %v1046
        %1067 = vmatpush.msra.mxu0 %v1043
        %1068 = vmatpush.msra.mxu0 %v1040
        %1069 = vmatpush.msra.mxu0 %v1037
        %1070 = vmatpush.msra.mxu0 %v1034
        %1071 = vmatpush.msra.mxu0 %v1031
        %1072 = vmatpush.msra.mxu0 %v1028
        %1073 = vmatpush.msra.mxu0 %v1025
        %1074 = vmatpush.msra.mxu0 %v1022
        %1075 = vmatpush.msra.mxu0 %v1019
        %1076 = vmatpush.msra.mxu0 %v1016
        %1077 = vmatpush.msra.mxu0 %v1013
        %1078 = vmatmul.f32.gmra.mxu0 %v1061
        %v1079 = vpop.f32.mrf.mxu0
        %v1080 = vadd.f32 0.0, %v1079
        %1081 = vdwg.mxu0
        %1082 = vmatpush.msra.mxu0 %v1059
        %1083 = vmatpush.msra.mxu0 %v1056
        %1084 = vmatpush.msra.mxu0 %v1053
        %1085 = vmatpush.msra.mxu0 %v1050
        %1086 = vmatpush.msra.mxu0 %v1047
        %1087 = vmatpush.msra.mxu0 %v1044
        %1088 = vmatpush.msra.mxu0 %v1041
        %1089 = vmatpush.msra.mxu0 %v1038
        %1090 = vmatpush.msra.mxu0 %v1035
        %1091 = vmatpush.msra.mxu0 %v1032
        %1092 = vmatpush.msra.mxu0 %v1029
        %1093 = vmatpush.msra.mxu0 %v1026
        %1094 = vmatpush.msra.mxu0 %v1023
        %1095 = vmatpush.msra.mxu0 %v1020
        %1096 = vmatpush.msra.mxu0 %v1017
        %1097 = vmatpush.msra.mxu0 %v1014
        %1098 = vmatmul.f32.gmra.mxu0 %v1061
        %v1099 = vpop.f32.mrf.mxu0
        %v1100 = vadd.f32 0.0, %v1099
        %1101 = vdwg.mxu0
        %1102 = vmatpush.msra.mxu0 %v1060
        %1103 = vmatpush.msra.mxu0 %v1057
        %1104 = vmatpush.msra.mxu0 %v1054
        %1105 = vmatpush.msra.mxu0 %v1051
        %1106 = vmatpush.msra.mxu0 %v1048
        %1107 = vmatpush.msra.mxu0 %v1045
        %1108 = vmatpush.msra.mxu0 %v1042
        %1109 = vmatpush.msra.mxu0 %v1039
        %1110 = vmatpush.msra.mxu0 %v1036
        %1111 = vmatpush.msra.mxu0 %v1033
        %1112 = vmatpush.msra.mxu0 %v1030
        %1113 = vmatpush.msra.mxu0 %v1027
        %1114 = vmatpush.msra.mxu0 %v1024
        %1115 = vmatpush.msra.mxu0 %v1021
        %1116 = vmatpush.msra.mxu0 %v1018
        %1117 = vmatpush.msra.mxu0 %v1015
        %1118 = vmatmul.f32.gmra.mxu0 %v1061
        %v1119 = vpop.f32.mrf.mxu0
        %v1120 = vadd.f32 0.0, %v1119
        %1121 = vdwg.mxu0
        %1122 = vmatpush.msra.mxu0 %v642
        %1123 = vmatpush.msra.mxu0 %v639
        %1124 = vmatpush.msra.mxu0 %v636
        %1125 = vmatpush.msra.mxu0 %v633
        %1126 = vmatpush.msra.mxu0 %v630
        %1127 = vmatpush.msra.mxu0 %v627
        %1128 = vmatpush.msra.mxu0 %v624
        %1129 = vmatpush.msra.mxu0 %v621
        %1130 = vmatpush.msra.mxu0 %v618
        %1131 = vmatpush.msra.mxu0 %v615
        %1132 = vmatpush.msra.mxu0 %v612
        %1133 = vmatpush.msra.mxu0 %v609
        %1134 = vmatpush.msra.mxu0 %v606
        %1135 = vmatpush.msra.mxu0 %v603
        %1136 = vmatpush.msra.mxu0 %v600
        %1137 = vmatpush.msra.mxu0 %v597
        %1138 = vmatmul.f32.gmra.mxu0 %v645
        %v1139 = vpop.f32.mrf.mxu0
        %v1140 = vadd.f32 %v1080, %v1139
        %1141 = vdwg.mxu0
        %1142 = vmatpush.msra.mxu0 %v643
        %1143 = vmatpush.msra.mxu0 %v640
        %1144 = vmatpush.msra.mxu0 %v637
        %1145 = vmatpush.msra.mxu0 %v634
        %1146 = vmatpush.msra.mxu0 %v631
        %1147 = vmatpush.msra.mxu0 %v628
        %1148 = vmatpush.msra.mxu0 %v625
        %1149 = vmatpush.msra.mxu0 %v622
        %1150 = vmatpush.msra.mxu0 %v619
        %1151 = vmatpush.msra.mxu0 %v616
        %1152 = vmatpush.msra.mxu0 %v613
        %1153 = vmatpush.msra.mxu0 %v610
        %1154 = vmatpush.msra.mxu0 %v607
        %1155 = vmatpush.msra.mxu0 %v604
        %1156 = vmatpush.msra.mxu0 %v601
        %1157 = vmatpush.msra.mxu0 %v598
        %1158 = vmatmul.f32.gmra.mxu0 %v645
        %v1159 = vpop.f32.mrf.mxu0
        %v1160 = vadd.f32 %v1100, %v1159
        %1161 = vdwg.mxu0
        %1162 = vmatpush.msra.mxu0 %v644
        %1163 = vmatpush.msra.mxu0 %v641
        %1164 = vmatpush.msra.mxu0 %v638
        %1165 = vmatpush.msra.mxu0 %v635
        %1166 = vmatpush.msra.mxu0 %v632
        %1167 = vmatpush.msra.mxu0 %v629
        %1168 = vmatpush.msra.mxu0 %v626
        %1169 = vmatpush.msra.mxu0 %v623
        %1170 = vmatpush.msra.mxu0 %v620
        %1171 = vmatpush.msra.mxu0 %v617
        %1172 = vmatpush.msra.mxu0 %v614
        %1173 = vmatpush.msra.mxu0 %v611
        %1174 = vmatpush.msra.mxu0 %v608
        %1175 = vmatpush.msra.mxu0 %v605
        %1176 = vmatpush.msra.mxu0 %v602
        %1177 = vmatpush.msra.mxu0 %v599
        %1178 = vmatmul.f32.gmra.mxu0 %v645
        %v1179 = vpop.f32.mrf.mxu0
        %v1180 = vadd.f32 %v1120, %v1179
        %1181 = vdwg.mxu0
        %v1182 = vld [vmem:[%s1 + $0x100] sm:$0xff]
        %v1183 = vld [vmem:[%s1 + $0x108] sm:$0xff]
        %v1184 = vld [vmem:[%s1 + $0x110] sm:$0xff]
        %v1185 = vld [vmem:[%s1 + $0x118] sm:$0xff]
        %v1186 = vld [vmem:[%s1 + $0x120] sm:$0xff]
        %v1187 = vld [vmem:[%s1 + $0x128] sm:$0xff]
        %v1188 = vld [vmem:[%s1 + $0x130] sm:$0xff]
        %v1189 = vld [vmem:[%s1 + $0x138] sm:$0xff]
        %v1190 = vld [vmem:[%s1 + $0x140] sm:$0xff]
        %v1191 = vld [vmem:[%s1 + $0x148] sm:$0xff]
        %v1192 = vld [vmem:[%s1 + $0x150] sm:$0xff]
        %v1193 = vld [vmem:[%s1 + $0x158] sm:$0xff]
        %v1194 = vld [vmem:[%s1 + $0x160] sm:$0xff]
        %v1195 = vld [vmem:[%s1 + $0x168] sm:$0xff]
        %v1196 = vld [vmem:[%s1 + $0x170] sm:$0xff]
        %v1197 = vld [vmem:[%s1 + $0x178] sm:$0xff]
        %v1198 = vld [vmem:[%s2 + $0x100] sm:$0xff]
        %v1199 = vld [vmem:[%s2 + $0x108] sm:$0xff]
        %v1200 = vld [vmem:[%s2 + $0x110] sm:$0xff]
        %v1201 = vld [vmem:[%s2 + $0x118] sm:$0xff]
        %v1202 = vld [vmem:[%s2 + $0x120] sm:$0xff]
        %v1203 = vld [vmem:[%s2 + $0x128] sm:$0xff]
        %v1204 = vld [vmem:[%s2 + $0x130] sm:$0xff]
        %v1205 = vld [vmem:[%s2 + $0x138] sm:$0xff]
        %v1206 = vld [vmem:[%s2 + $0x140] sm:$0xff]
        %v1207 = vld [vmem:[%s2 + $0x148] sm:$0xff]
        %v1208 = vld [vmem:[%s2 + $0x150] sm:$0xff]
        %v1209 = vld [vmem:[%s2 + $0x158] sm:$0xff]
        %v1210 = vld [vmem:[%s2 + $0x160] sm:$0xff]
        %v1211 = vld [vmem:[%s2 + $0x168] sm:$0xff]
        %v1212 = vld [vmem:[%s2 + $0x170] sm:$0xff]
        %v1213 = vld [vmem:[%s2 + $0x178] sm:$0xff]
        %1215 = vset.pattern.permute.xlu0 0
        %1216 = vperm.xlu0 %1215, %v1198
        %v1217 = vpop.permute.xlu0 %1216
        %1220 = vset.pattern.permute.xlu0 0
        %1221 = vperm.xlu0 %1220, %v1199
        %v1222 = vpop.permute.xlu0 %1221
        %1225 = vset.pattern.permute.xlu0 0
        %1226 = vperm.xlu0 %1225, %v1200
        %v1227 = vpop.permute.xlu0 %1226
        %1230 = vset.pattern.permute.xlu0 0
        %1231 = vperm.xlu0 %1230, %v1201
        %v1232 = vpop.permute.xlu0 %1231
        %1235 = vset.pattern.permute.xlu0 0
        %1236 = vperm.xlu0 %1235, %v1202
        %v1237 = vpop.permute.xlu0 %1236
        %1240 = vset.pattern.permute.xlu0 0
        %1241 = vperm.xlu0 %1240, %v1203
        %v1242 = vpop.permute.xlu0 %1241
        %1245 = vset.pattern.permute.xlu0 0
        %1246 = vperm.xlu0 %1245, %v1204
        %v1247 = vpop.permute.xlu0 %1246
        %1250 = vset.pattern.permute.xlu0 0
        %1251 = vperm.xlu0 %1250, %v1205
        %v1252 = vpop.permute.xlu0 %1251
        %1255 = vset.pattern.permute.xlu0 0
        %1256 = vperm.xlu0 %1255, %v1206
        %v1257 = vpop.permute.xlu0 %1256
        %1260 = vset.pattern.permute.xlu0 0
        %1261 = vperm.xlu0 %1260, %v1207
        %v1262 = vpop.permute.xlu0 %1261
        %1265 = vset.pattern.permute.xlu0 0
        %1266 = vperm.xlu0 %1265, %v1208
        %v1267 = vpop.permute.xlu0 %1266
        %1270 = vset.pattern.permute.xlu0 0
        %1271 = vperm.xlu0 %1270, %v1209
        %v1272 = vpop.permute.xlu0 %1271
        %1275 = vset.pattern.permute.xlu0 0
        %1276 = vperm.xlu0 %1275, %v1210
        %v1277 = vpop.permute.xlu0 %1276
        %1280 = vset.pattern.permute.xlu0 0
        %1281 = vperm.xlu0 %1280, %v1211
        %v1282 = vpop.permute.xlu0 %1281
        %1285 = vset.pattern.permute.xlu0 0
        %1286 = vperm.xlu0 %1285, %v1212
        %v1287 = vpop.permute.xlu0 %1286
        %1290 = vset.pattern.permute.xlu0 0
        %1291 = vperm.xlu0 %1290, %v1213
        %v1292 = vpop.permute.xlu0 %1291
        %1294 = vst [vmem:[#allocation1] ss:$2 sm:$0xff] %v224
        %s1295 = scalar_lea.vmem [#allocation1], 16
        %1296 = vst [vmem:[%s1295] ss:$2 sm:$0xff] %v225
        %v1297 = vld.sshfl [vmem:[#allocation1] sm:$0xff pattern:$0x75316420]
        %v1298 = vld.sshfl [vmem:[#allocation1 + $0x8] sm:$0xff pattern:$0x75316420]
        %v1299 = vld.sshfl [vmem:[#allocation1 + $0x10] sm:$0xff pattern:$0x75316420]
        %v1301 = vsel %vm346, %v1182, 0
        %v1304 = vsel %vm346, %v1183, 0
        %v1307 = vsel %vm346, %v1184, 0
        %v1310 = vsel %vm346, %v1185, 0
        %v1313 = vsel %vm346, %v1186, 0
        %v1316 = vsel %vm346, %v1187, 0
        %v1319 = vsel %vm346, %v1188, 0
        %v1322 = vsel %vm346, %v1189, 0
        %v1325 = vsel %vm346, %v1190, 0
        %v1328 = vsel %vm346, %v1191, 0
        %v1331 = vsel %vm346, %v1192, 0
        %v1334 = vsel %vm346, %v1193, 0
        %v1337 = vsel %vm346, %v1194, 0
        %v1340 = vsel %vm346, %v1195, 0
        %v1343 = vsel %vm346, %v1196, 0
        %v1346 = vsel %vm346, %v1197, 0
        %v1348 = vsel %vm395, %v1297, 0
        %v1350 = vsel %vm395, %v1298, 0
        %v1352 = vsel %vm395, %v1299, 0
        %1354 = vmatpush.msra.mxu0 0.0
        %1355 = vmatpush.msra.mxu0 0.0
        %1356 = vmatpush.msra.mxu0 0.0
        %1357 = vmatpush.msra.mxu0 0.0
        %1358 = vmatpush.msra.mxu0 0.0
        %1359 = vmatpush.msra.mxu0 0.0
        %1360 = vmatpush.msra.mxu0 0.0
        %1361 = vmatpush.msra.mxu0 0.0
        %1362 = vmatpush.msra.mxu0 0.0
        %1363 = vmatpush.msra.mxu0 0.0
        %1364 = vmatpush.msra.mxu0 0.0
        %1365 = vmatpush.msra.mxu0 0.0
        %1366 = vmatpush.msra.mxu0 0.0
        %1367 = vmatpush.msra.mxu0 0.0
        %1368 = vmatpush.msra.mxu0 0.0
        %1369 = vmatpush.msra.mxu0 %v1348
        %1370 = vmatmul.f32.gmra.mxu0 %v1301
        %v1371 = vpop.f32.mrf.mxu0
        %v1372 = vadd.f32 %v1217, %v1371
        %1373 = vmatmul.f32.gmra.mxu0 %v1304
        %v1374 = vpop.f32.mrf.mxu0
        %v1375 = vadd.f32 %v1222, %v1374
        %1376 = vmatmul.f32.gmra.mxu0 %v1307
        %v1377 = vpop.f32.mrf.mxu0
        %v1378 = vadd.f32 %v1227, %v1377
        %1379 = vmatmul.f32.gmra.mxu0 %v1310
        %v1380 = vpop.f32.mrf.mxu0
        %v1381 = vadd.f32 %v1232, %v1380
        %1382 = vmatmul.f32.gmra.mxu0 %v1313
        %v1383 = vpop.f32.mrf.mxu0
        %v1384 = vadd.f32 %v1237, %v1383
        %1385 = vmatmul.f32.gmra.mxu0 %v1316
        %v1386 = vpop.f32.mrf.mxu0
        %v1387 = vadd.f32 %v1242, %v1386
        %1388 = vmatmul.f32.gmra.mxu0 %v1319
        %v1389 = vpop.f32.mrf.mxu0
        %v1390 = vadd.f32 %v1247, %v1389
        %1391 = vmatmul.f32.gmra.mxu0 %v1322
        %v1392 = vpop.f32.mrf.mxu0
        %v1393 = vadd.f32 %v1252, %v1392
        %1394 = vmatmul.f32.gmra.mxu0 %v1325
        %v1395 = vpop.f32.mrf.mxu0
        %v1396 = vadd.f32 %v1257, %v1395
        %1397 = vmatmul.f32.gmra.mxu0 %v1328
        %v1398 = vpop.f32.mrf.mxu0
        %v1399 = vadd.f32 %v1262, %v1398
        %1400 = vmatmul.f32.gmra.mxu0 %v1331
        %v1401 = vpop.f32.mrf.mxu0
        %v1402 = vadd.f32 %v1267, %v1401
        %1403 = vmatmul.f32.gmra.mxu0 %v1334
        %v1404 = vpop.f32.mrf.mxu0
        %v1405 = vadd.f32 %v1272, %v1404
        %1406 = vmatmul.f32.gmra.mxu0 %v1337
        %v1407 = vpop.f32.mrf.mxu0
        %v1408 = vadd.f32 %v1277, %v1407
        %1409 = vmatmul.f32.gmra.mxu0 %v1340
        %v1410 = vpop.f32.mrf.mxu0
        %v1411 = vadd.f32 %v1282, %v1410
        %1412 = vmatmul.f32.gmra.mxu0 %v1343
        %v1413 = vpop.f32.mrf.mxu0
        %v1414 = vadd.f32 %v1287, %v1413
        %1415 = vmatmul.f32.gmra.mxu0 %v1346
        %v1416 = vpop.f32.mrf.mxu0
        %v1417 = vadd.f32 %v1292, %v1416
        %1418 = vdwg.mxu0
        %1419 = vmatpush.msra.mxu0 0.0
        %1420 = vmatpush.msra.mxu0 0.0
        %1421 = vmatpush.msra.mxu0 0.0
        %1422 = vmatpush.msra.mxu0 0.0
        %1423 = vmatpush.msra.mxu0 0.0
        %1424 = vmatpush.msra.mxu0 0.0
        %1425 = vmatpush.msra.mxu0 0.0
        %1426 = vmatpush.msra.mxu0 0.0
        %1427 = vmatpush.msra.mxu0 0.0
        %1428 = vmatpush.msra.mxu0 0.0
        %1429 = vmatpush.msra.mxu0 0.0
        %1430 = vmatpush.msra.mxu0 0.0
        %1431 = vmatpush.msra.mxu0 0.0
        %1432 = vmatpush.msra.mxu0 0.0
        %1433 = vmatpush.msra.mxu0 0.0
        %1434 = vmatpush.msra.mxu0 %v1350
        %1435 = vmatmul.f32.gmra.mxu0 %v1301
        %v1436 = vpop.f32.mrf.mxu0
        %v1437 = vadd.f32 %v1217, %v1436
        %1438 = vmatmul.f32.gmra.mxu0 %v1304
        %v1439 = vpop.f32.mrf.mxu0
        %v1440 = vadd.f32 %v1222, %v1439
        %1441 = vmatmul.f32.gmra.mxu0 %v1307
        %v1442 = vpop.f32.mrf.mxu0
        %v1443 = vadd.f32 %v1227, %v1442
        %1444 = vmatmul.f32.gmra.mxu0 %v1310
        %v1445 = vpop.f32.mrf.mxu0
        %v1446 = vadd.f32 %v1232, %v1445
        %1447 = vmatmul.f32.gmra.mxu0 %v1313
        %v1448 = vpop.f32.mrf.mxu0
        %v1449 = vadd.f32 %v1237, %v1448
        %1450 = vmatmul.f32.gmra.mxu0 %v1316
        %v1451 = vpop.f32.mrf.mxu0
        %v1452 = vadd.f32 %v1242, %v1451
        %1453 = vmatmul.f32.gmra.mxu0 %v1319
        %v1454 = vpop.f32.mrf.mxu0
        %v1455 = vadd.f32 %v1247, %v1454
        %1456 = vmatmul.f32.gmra.mxu0 %v1322
        %v1457 = vpop.f32.mrf.mxu0
        %v1458 = vadd.f32 %v1252, %v1457
        %1459 = vmatmul.f32.gmra.mxu0 %v1325
        %v1460 = vpop.f32.mrf.mxu0
        %v1461 = vadd.f32 %v1257, %v1460
        %1462 = vmatmul.f32.gmra.mxu0 %v1328
        %v1463 = vpop.f32.mrf.mxu0
        %v1464 = vadd.f32 %v1262, %v1463
        %1465 = vmatmul.f32.gmra.mxu0 %v1331
        %v1466 = vpop.f32.mrf.mxu0
        %v1467 = vadd.f32 %v1267, %v1466
        %1468 = vmatmul.f32.gmra.mxu0 %v1334
        %v1469 = vpop.f32.mrf.mxu0
        %v1470 = vadd.f32 %v1272, %v1469
        %1471 = vmatmul.f32.gmra.mxu0 %v1337
        %v1472 = vpop.f32.mrf.mxu0
        %v1473 = vadd.f32 %v1277, %v1472
        %1474 = vmatmul.f32.gmra.mxu0 %v1340
        %v1475 = vpop.f32.mrf.mxu0
        %v1476 = vadd.f32 %v1282, %v1475
        %1477 = vmatmul.f32.gmra.mxu0 %v1343
        %v1478 = vpop.f32.mrf.mxu0
        %v1479 = vadd.f32 %v1287, %v1478
        %1480 = vmatmul.f32.gmra.mxu0 %v1346
        %v1481 = vpop.f32.mrf.mxu0
        %v1482 = vadd.f32 %v1292, %v1481
        %1483 = vdwg.mxu0
        %1484 = vmatpush.msra.mxu0 0.0
        %1485 = vmatpush.msra.mxu0 0.0
        %1486 = vmatpush.msra.mxu0 0.0
        %1487 = vmatpush.msra.mxu0 0.0
        %1488 = vmatpush.msra.mxu0 0.0
        %1489 = vmatpush.msra.mxu0 0.0
        %1490 = vmatpush.msra.mxu0 0.0
        %1491 = vmatpush.msra.mxu0 0.0
        %1492 = vmatpush.msra.mxu0 0.0
        %1493 = vmatpush.msra.mxu0 0.0
        %1494 = vmatpush.msra.mxu0 0.0
        %1495 = vmatpush.msra.mxu0 0.0
        %1496 = vmatpush.msra.mxu0 0.0
        %1497 = vmatpush.msra.mxu0 0.0
        %1498 = vmatpush.msra.mxu0 0.0
        %1499 = vmatpush.msra.mxu0 %v1352
        %1500 = vmatmul.f32.gmra.mxu0 %v1301
        %v1501 = vpop.f32.mrf.mxu0
        %v1502 = vadd.f32 %v1217, %v1501
        %1503 = vmatmul.f32.gmra.mxu0 %v1304
        %v1504 = vpop.f32.mrf.mxu0
        %v1505 = vadd.f32 %v1222, %v1504
        %1506 = vmatmul.f32.gmra.mxu0 %v1307
        %v1507 = vpop.f32.mrf.mxu0
        %v1508 = vadd.f32 %v1227, %v1507
        %1509 = vmatmul.f32.gmra.mxu0 %v1310
        %v1510 = vpop.f32.mrf.mxu0
        %v1511 = vadd.f32 %v1232, %v1510
        %1512 = vmatmul.f32.gmra.mxu0 %v1313
        %v1513 = vpop.f32.mrf.mxu0
        %v1514 = vadd.f32 %v1237, %v1513
        %1515 = vmatmul.f32.gmra.mxu0 %v1316
        %v1516 = vpop.f32.mrf.mxu0
        %v1517 = vadd.f32 %v1242, %v1516
        %1518 = vmatmul.f32.gmra.mxu0 %v1319
        %v1519 = vpop.f32.mrf.mxu0
        %v1520 = vadd.f32 %v1247, %v1519
        %1521 = vmatmul.f32.gmra.mxu0 %v1322
        %v1522 = vpop.f32.mrf.mxu0
        %v1523 = vadd.f32 %v1252, %v1522
        %1524 = vmatmul.f32.gmra.mxu0 %v1325
        %v1525 = vpop.f32.mrf.mxu0
        %v1526 = vadd.f32 %v1257, %v1525
        %1527 = vmatmul.f32.gmra.mxu0 %v1328
        %v1528 = vpop.f32.mrf.mxu0
        %v1529 = vadd.f32 %v1262, %v1528
        %1530 = vmatmul.f32.gmra.mxu0 %v1331
        %v1531 = vpop.f32.mrf.mxu0
        %v1532 = vadd.f32 %v1267, %v1531
        %1533 = vmatmul.f32.gmra.mxu0 %v1334
        %v1534 = vpop.f32.mrf.mxu0
        %v1535 = vadd.f32 %v1272, %v1534
        %1536 = vmatmul.f32.gmra.mxu0 %v1337
        %v1537 = vpop.f32.mrf.mxu0
        %v1538 = vadd.f32 %v1277, %v1537
        %1539 = vmatmul.f32.gmra.mxu0 %v1340
        %v1540 = vpop.f32.mrf.mxu0
        %v1541 = vadd.f32 %v1282, %v1540
        %1542 = vmatmul.f32.gmra.mxu0 %v1343
        %v1543 = vpop.f32.mrf.mxu0
        %v1544 = vadd.f32 %v1287, %v1543
        %1545 = vmatmul.f32.gmra.mxu0 %v1346
        %v1546 = vpop.f32.mrf.mxu0
        %v1547 = vadd.f32 %v1292, %v1546
        %1548 = vdwg.mxu0
        %v1549 = vmax.f32 %v1372, 0.0
        %v1550 = vmax.f32 %v1437, 0.0
        %v1551 = vmax.f32 %v1502, 0.0
        %v1552 = vmax.f32 %v1375, 0.0
        %v1553 = vmax.f32 %v1440, 0.0
        %v1554 = vmax.f32 %v1505, 0.0
        %v1555 = vmax.f32 %v1378, 0.0
        %v1556 = vmax.f32 %v1443, 0.0
        %v1557 = vmax.f32 %v1508, 0.0
        %v1558 = vmax.f32 %v1381, 0.0
        %v1559 = vmax.f32 %v1446, 0.0
        %v1560 = vmax.f32 %v1511, 0.0
        %v1561 = vmax.f32 %v1384, 0.0
        %v1562 = vmax.f32 %v1449, 0.0
        %v1563 = vmax.f32 %v1514, 0.0
        %v1564 = vmax.f32 %v1387, 0.0
        %v1565 = vmax.f32 %v1452, 0.0
        %v1566 = vmax.f32 %v1517, 0.0
        %v1567 = vmax.f32 %v1390, 0.0
        %v1568 = vmax.f32 %v1455, 0.0
        %v1569 = vmax.f32 %v1520, 0.0
        %v1570 = vmax.f32 %v1393, 0.0
        %v1571 = vmax.f32 %v1458, 0.0
        %v1572 = vmax.f32 %v1523, 0.0
        %v1573 = vmax.f32 %v1396, 0.0
        %v1574 = vmax.f32 %v1461, 0.0
        %v1575 = vmax.f32 %v1526, 0.0
        %v1576 = vmax.f32 %v1399, 0.0
        %v1577 = vmax.f32 %v1464, 0.0
        %v1578 = vmax.f32 %v1529, 0.0
        %v1579 = vmax.f32 %v1402, 0.0
        %v1580 = vmax.f32 %v1467, 0.0
        %v1581 = vmax.f32 %v1532, 0.0
        %v1582 = vmax.f32 %v1405, 0.0
        %v1583 = vmax.f32 %v1470, 0.0
        %v1584 = vmax.f32 %v1535, 0.0
        %v1585 = vmax.f32 %v1408, 0.0
        %v1586 = vmax.f32 %v1473, 0.0
        %v1587 = vmax.f32 %v1538, 0.0
        %v1588 = vmax.f32 %v1411, 0.0
        %v1589 = vmax.f32 %v1476, 0.0
        %v1590 = vmax.f32 %v1541, 0.0
        %v1591 = vmax.f32 %v1414, 0.0
        %v1592 = vmax.f32 %v1479, 0.0
        %v1593 = vmax.f32 %v1544, 0.0
        %v1594 = vmax.f32 %v1417, 0.0
        %v1595 = vmax.f32 %v1482, 0.0
        %v1596 = vmax.f32 %v1547, 0.0
        %v1597 = vld [vmem:[%s3 + $0x2] sm:$0x1]
        %1598 = vmatpush.msra.mxu0 %v1594
        %1599 = vmatpush.msra.mxu0 %v1591
        %1600 = vmatpush.msra.mxu0 %v1588
        %1601 = vmatpush.msra.mxu0 %v1585
        %1602 = vmatpush.msra.mxu0 %v1582
        %1603 = vmatpush.msra.mxu0 %v1579
        %1604 = vmatpush.msra.mxu0 %v1576
        %1605 = vmatpush.msra.mxu0 %v1573
        %1606 = vmatpush.msra.mxu0 %v1570
        %1607 = vmatpush.msra.mxu0 %v1567
        %1608 = vmatpush.msra.mxu0 %v1564
        %1609 = vmatpush.msra.mxu0 %v1561
        %1610 = vmatpush.msra.mxu0 %v1558
        %1611 = vmatpush.msra.mxu0 %v1555
        %1612 = vmatpush.msra.mxu0 %v1552
        %1613 = vmatpush.msra.mxu0 %v1549
        %1614 = vmatmul.f32.gmra.mxu0 %v1597
        %v1615 = vpop.f32.mrf.mxu0
        %v1616 = vadd.f32 0.0, %v1615
        %1617 = vdwg.mxu0
        %1618 = vmatpush.msra.mxu0 %v1595
        %1619 = vmatpush.msra.mxu0 %v1592
        %1620 = vmatpush.msra.mxu0 %v1589
        %1621 = vmatpush.msra.mxu0 %v1586
        %1622 = vmatpush.msra.mxu0 %v1583
        %1623 = vmatpush.msra.mxu0 %v1580
        %1624 = vmatpush.msra.mxu0 %v1577
        %1625 = vmatpush.msra.mxu0 %v1574
        %1626 = vmatpush.msra.mxu0 %v1571
        %1627 = vmatpush.msra.mxu0 %v1568
        %1628 = vmatpush.msra.mxu0 %v1565
        %1629 = vmatpush.msra.mxu0 %v1562
        %1630 = vmatpush.msra.mxu0 %v1559
        %1631 = vmatpush.msra.mxu0 %v1556
        %1632 = vmatpush.msra.mxu0 %v1553
        %1633 = vmatpush.msra.mxu0 %v1550
        %1634 = vmatmul.f32.gmra.mxu0 %v1597
        %v1635 = vpop.f32.mrf.mxu0
        %v1636 = vadd.f32 0.0, %v1635
        %1637 = vdwg.mxu0
        %1638 = vmatpush.msra.mxu0 %v1596
        %1639 = vmatpush.msra.mxu0 %v1593
        %1640 = vmatpush.msra.mxu0 %v1590
        %1641 = vmatpush.msra.mxu0 %v1587
        %1642 = vmatpush.msra.mxu0 %v1584
        %1643 = vmatpush.msra.mxu0 %v1581
        %1644 = vmatpush.msra.mxu0 %v1578
        %1645 = vmatpush.msra.mxu0 %v1575
        %1646 = vmatpush.msra.mxu0 %v1572
        %1647 = vmatpush.msra.mxu0 %v1569
        %1648 = vmatpush.msra.mxu0 %v1566
        %1649 = vmatpush.msra.mxu0 %v1563
        %1650 = vmatpush.msra.mxu0 %v1560
        %1651 = vmatpush.msra.mxu0 %v1557
        %1652 = vmatpush.msra.mxu0 %v1554
        %1653 = vmatpush.msra.mxu0 %v1551
        %1654 = vmatmul.f32.gmra.mxu0 %v1597
        %v1655 = vpop.f32.mrf.mxu0
        %v1656 = vadd.f32 0.0, %v1655
        %1657 = vdwg.mxu0
        %v1658 = vadd.f32 %v1140, %v1616
        %v1659 = vadd.f32 %v1160, %v1636
        %v1660 = vadd.f32 %v1180, %v1656
        %v1661 = vld [vmem:[%s1 + $0x180] sm:$0xff]
        %v1662 = vld [vmem:[%s1 + $0x188] sm:$0xff]
        %v1663 = vld [vmem:[%s1 + $0x190] sm:$0xff]
        %v1664 = vld [vmem:[%s1 + $0x198] sm:$0xff]
        %v1665 = vld [vmem:[%s1 + $0x1a0] sm:$0xff]
        %v1666 = vld [vmem:[%s1 + $0x1a8] sm:$0xff]
        %v1667 = vld [vmem:[%s1 + $0x1b0] sm:$0xff]
        %v1668 = vld [vmem:[%s1 + $0x1b8] sm:$0xff]
        %v1669 = vld [vmem:[%s1 + $0x1c0] sm:$0xff]
        %v1670 = vld [vmem:[%s1 + $0x1c8] sm:$0xff]
        %v1671 = vld [vmem:[%s1 + $0x1d0] sm:$0xff]
        %v1672 = vld [vmem:[%s1 + $0x1d8] sm:$0xff]
        %v1673 = vld [vmem:[%s1 + $0x1e0] sm:$0xff]
        %v1674 = vld [vmem:[%s1 + $0x1e8] sm:$0xff]
        %v1675 = vld [vmem:[%s1 + $0x1f0] sm:$0xff]
        %v1676 = vld [vmem:[%s1 + $0x1f8] sm:$0xff]
        %v1677 = vld [vmem:[%s2 + $0x180] sm:$0xff]
        %v1678 = vld [vmem:[%s2 + $0x188] sm:$0xff]
        %v1679 = vld [vmem:[%s2 + $0x190] sm:$0xff]
        %v1680 = vld [vmem:[%s2 + $0x198] sm:$0xff]
        %v1681 = vld [vmem:[%s2 + $0x1a0] sm:$0xff]
        %v1682 = vld [vmem:[%s2 + $0x1a8] sm:$0xff]
        %v1683 = vld [vmem:[%s2 + $0x1b0] sm:$0xff]
        %v1684 = vld [vmem:[%s2 + $0x1b8] sm:$0xff]
        %v1685 = vld [vmem:[%s2 + $0x1c0] sm:$0xff]
        %v1686 = vld [vmem:[%s2 + $0x1c8] sm:$0xff]
        %v1687 = vld [vmem:[%s2 + $0x1d0] sm:$0xff]
        %v1688 = vld [vmem:[%s2 + $0x1d8] sm:$0xff]
        %v1689 = vld [vmem:[%s2 + $0x1e0] sm:$0xff]
        %v1690 = vld [vmem:[%s2 + $0x1e8] sm:$0xff]
        %v1691 = vld [vmem:[%s2 + $0x1f0] sm:$0xff]
        %v1692 = vld [vmem:[%s2 + $0x1f8] sm:$0xff]
        %1694 = vset.pattern.permute.xlu0 0
        %1695 = vperm.xlu0 %1694, %v1677
        %v1696 = vpop.permute.xlu0 %1695
        %1699 = vset.pattern.permute.xlu0 0
        %1700 = vperm.xlu0 %1699, %v1678
        %v1701 = vpop.permute.xlu0 %1700
        %1704 = vset.pattern.permute.xlu0 0
        %1705 = vperm.xlu0 %1704, %v1679
        %v1706 = vpop.permute.xlu0 %1705
        %1709 = vset.pattern.permute.xlu0 0
        %1710 = vperm.xlu0 %1709, %v1680
        %v1711 = vpop.permute.xlu0 %1710
        %1714 = vset.pattern.permute.xlu0 0
        %1715 = vperm.xlu0 %1714, %v1681
        %v1716 = vpop.permute.xlu0 %1715
        %1719 = vset.pattern.permute.xlu0 0
        %1720 = vperm.xlu0 %1719, %v1682
        %v1721 = vpop.permute.xlu0 %1720
        %1724 = vset.pattern.permute.xlu0 0
        %1725 = vperm.xlu0 %1724, %v1683
        %v1726 = vpop.permute.xlu0 %1725
        %1729 = vset.pattern.permute.xlu0 0
        %1730 = vperm.xlu0 %1729, %v1684
        %v1731 = vpop.permute.xlu0 %1730
        %1734 = vset.pattern.permute.xlu0 0
        %1735 = vperm.xlu0 %1734, %v1685
        %v1736 = vpop.permute.xlu0 %1735
        %1739 = vset.pattern.permute.xlu0 0
        %1740 = vperm.xlu0 %1739, %v1686
        %v1741 = vpop.permute.xlu0 %1740
        %1744 = vset.pattern.permute.xlu0 0
        %1745 = vperm.xlu0 %1744, %v1687
        %v1746 = vpop.permute.xlu0 %1745
        %1749 = vset.pattern.permute.xlu0 0
        %1750 = vperm.xlu0 %1749, %v1688
        %v1751 = vpop.permute.xlu0 %1750
        %1754 = vset.pattern.permute.xlu0 0
        %1755 = vperm.xlu0 %1754, %v1689
        %v1756 = vpop.permute.xlu0 %1755
        %1759 = vset.pattern.permute.xlu0 0
        %1760 = vperm.xlu0 %1759, %v1690
        %v1761 = vpop.permute.xlu0 %1760
        %1764 = vset.pattern.permute.xlu0 0
        %1765 = vperm.xlu0 %1764, %v1691
        %v1766 = vpop.permute.xlu0 %1765
        %1769 = vset.pattern.permute.xlu0 0
        %1770 = vperm.xlu0 %1769, %v1692
        %v1771 = vpop.permute.xlu0 %1770
        %1773 = vst [vmem:[#allocation1] ss:$2 sm:$0xff] %v224
        %s1774 = scalar_lea.vmem [#allocation1], 16
        %1775 = vst [vmem:[%s1774] ss:$2 sm:$0xff] %v225
        %v1776 = vld.sshfl [vmem:[#allocation1] sm:$0xff pattern:$0x75316420]
        %v1777 = vld.sshfl [vmem:[#allocation1 + $0x8] sm:$0xff pattern:$0x75316420]
        %v1778 = vld.sshfl [vmem:[#allocation1 + $0x10] sm:$0xff pattern:$0x75316420]
        %v1780 = vsel %vm346, %v1661, 0
        %v1783 = vsel %vm346, %v1662, 0
        %v1786 = vsel %vm346, %v1663, 0
        %v1789 = vsel %vm346, %v1664, 0
        %v1792 = vsel %vm346, %v1665, 0
        %v1795 = vsel %vm346, %v1666, 0
        %v1798 = vsel %vm346, %v1667, 0
        %v1801 = vsel %vm346, %v1668, 0
        %v1804 = vsel %vm346, %v1669, 0
        %v1807 = vsel %vm346, %v1670, 0
        %v1810 = vsel %vm346, %v1671, 0
        %v1813 = vsel %vm346, %v1672, 0
        %v1816 = vsel %vm346, %v1673, 0
        %v1819 = vsel %vm346, %v1674, 0
        %v1822 = vsel %vm346, %v1675, 0
        %v1825 = vsel %vm346, %v1676, 0
        %v1827 = vsel %vm395, %v1776, 0
        %v1829 = vsel %vm395, %v1777, 0
        %v1831 = vsel %vm395, %v1778, 0
        %1833 = vmatpush.msra.mxu0 0.0
        %1834 = vmatpush.msra.mxu0 0.0
        %1835 = vmatpush.msra.mxu0 0.0
        %1836 = vmatpush.msra.mxu0 0.0
        %1837 = vmatpush.msra.mxu0 0.0
        %1838 = vmatpush.msra.mxu0 0.0
        %1839 = vmatpush.msra.mxu0 0.0
        %1840 = vmatpush.msra.mxu0 0.0
        %1841 = vmatpush.msra.mxu0 0.0
        %1842 = vmatpush.msra.mxu0 0.0
        %1843 = vmatpush.msra.mxu0 0.0
        %1844 = vmatpush.msra.mxu0 0.0
        %1845 = vmatpush.msra.mxu0 0.0
        %1846 = vmatpush.msra.mxu0 0.0
        %1847 = vmatpush.msra.mxu0 0.0
        %1848 = vmatpush.msra.mxu0 %v1827
        %1849 = vmatmul.f32.gmra.mxu0 %v1780
        %v1850 = vpop.f32.mrf.mxu0
        %v1851 = vadd.f32 %v1696, %v1850
        %1852 = vmatmul.f32.gmra.mxu0 %v1783
        %v1853 = vpop.f32.mrf.mxu0
        %v1854 = vadd.f32 %v1701, %v1853
        %1855 = vmatmul.f32.gmra.mxu0 %v1786
        %v1856 = vpop.f32.mrf.mxu0
        %v1857 = vadd.f32 %v1706, %v1856
        %1858 = vmatmul.f32.gmra.mxu0 %v1789
        %v1859 = vpop.f32.mrf.mxu0
        %v1860 = vadd.f32 %v1711, %v1859
        %1861 = vmatmul.f32.gmra.mxu0 %v1792
        %v1862 = vpop.f32.mrf.mxu0
        %v1863 = vadd.f32 %v1716, %v1862
        %1864 = vmatmul.f32.gmra.mxu0 %v1795
        %v1865 = vpop.f32.mrf.mxu0
        %v1866 = vadd.f32 %v1721, %v1865
        %1867 = vmatmul.f32.gmra.mxu0 %v1798
        %v1868 = vpop.f32.mrf.mxu0
        %v1869 = vadd.f32 %v1726, %v1868
        %1870 = vmatmul.f32.gmra.mxu0 %v1801
        %v1871 = vpop.f32.mrf.mxu0
        %v1872 = vadd.f32 %v1731, %v1871
        %1873 = vmatmul.f32.gmra.mxu0 %v1804
        %v1874 = vpop.f32.mrf.mxu0
        %v1875 = vadd.f32 %v1736, %v1874
        %1876 = vmatmul.f32.gmra.mxu0 %v1807
        %v1877 = vpop.f32.mrf.mxu0
        %v1878 = vadd.f32 %v1741, %v1877
        %1879 = vmatmul.f32.gmra.mxu0 %v1810
        %v1880 = vpop.f32.mrf.mxu0
        %v1881 = vadd.f32 %v1746, %v1880
        %1882 = vmatmul.f32.gmra.mxu0 %v1813
        %v1883 = vpop.f32.mrf.mxu0
        %v1884 = vadd.f32 %v1751, %v1883
        %1885 = vmatmul.f32.gmra.mxu0 %v1816
        %v1886 = vpop.f32.mrf.mxu0
        %v1887 = vadd.f32 %v1756, %v1886
        %1888 = vmatmul.f32.gmra.mxu0 %v1819
        %v1889 = vpop.f32.mrf.mxu0
        %v1890 = vadd.f32 %v1761, %v1889
        %1891 = vmatmul.f32.gmra.mxu0 %v1822
        %v1892 = vpop.f32.mrf.mxu0
        %v1893 = vadd.f32 %v1766, %v1892
        %1894 = vmatmul.f32.gmra.mxu0 %v1825
        %v1895 = vpop.f32.mrf.mxu0
        %v1896 = vadd.f32 %v1771, %v1895
        %1897 = vdwg.mxu0
        %1898 = vmatpush.msra.mxu0 0.0
        %1899 = vmatpush.msra.mxu0 0.0
        %1900 = vmatpush.msra.mxu0 0.0
        %1901 = vmatpush.msra.mxu0 0.0
        %1902 = vmatpush.msra.mxu0 0.0
        %1903 = vmatpush.msra.mxu0 0.0
        %1904 = vmatpush.msra.mxu0 0.0
        %1905 = vmatpush.msra.mxu0 0.0
        %1906 = vmatpush.msra.mxu0 0.0
        %1907 = vmatpush.msra.mxu0 0.0
        %1908 = vmatpush.msra.mxu0 0.0
        %1909 = vmatpush.msra.mxu0 0.0
        %1910 = vmatpush.msra.mxu0 0.0
        %1911 = vmatpush.msra.mxu0 0.0
        %1912 = vmatpush.msra.mxu0 0.0
        %1913 = vmatpush.msra.mxu0 %v1829
        %1914 = vmatmul.f32.gmra.mxu0 %v1780
        %v1915 = vpop.f32.mrf.mxu0
        %v1916 = vadd.f32 %v1696, %v1915
        %1917 = vmatmul.f32.gmra.mxu0 %v1783
        %v1918 = vpop.f32.mrf.mxu0
        %v1919 = vadd.f32 %v1701, %v1918
        %1920 = vmatmul.f32.gmra.mxu0 %v1786
        %v1921 = vpop.f32.mrf.mxu0
        %v1922 = vadd.f32 %v1706, %v1921
        %1923 = vmatmul.f32.gmra.mxu0 %v1789
        %v1924 = vpop.f32.mrf.mxu0
        %v1925 = vadd.f32 %v1711, %v1924
        %1926 = vmatmul.f32.gmra.mxu0 %v1792
        %v1927 = vpop.f32.mrf.mxu0
        %v1928 = vadd.f32 %v1716, %v1927
        %1929 = vmatmul.f32.gmra.mxu0 %v1795
        %v1930 = vpop.f32.mrf.mxu0
        %v1931 = vadd.f32 %v1721, %v1930
        %1932 = vmatmul.f32.gmra.mxu0 %v1798
        %v1933 = vpop.f32.mrf.mxu0
        %v1934 = vadd.f32 %v1726, %v1933
        %1935 = vmatmul.f32.gmra.mxu0 %v1801
        %v1936 = vpop.f32.mrf.mxu0
        %v1937 = vadd.f32 %v1731, %v1936
        %1938 = vmatmul.f32.gmra.mxu0 %v1804
        %v1939 = vpop.f32.mrf.mxu0
        %v1940 = vadd.f32 %v1736, %v1939
        %1941 = vmatmul.f32.gmra.mxu0 %v1807
        %v1942 = vpop.f32.mrf.mxu0
        %v1943 = vadd.f32 %v1741, %v1942
        %1944 = vmatmul.f32.gmra.mxu0 %v1810
        %v1945 = vpop.f32.mrf.mxu0
        %v1946 = vadd.f32 %v1746, %v1945
        %1947 = vmatmul.f32.gmra.mxu0 %v1813
        %v1948 = vpop.f32.mrf.mxu0
        %v1949 = vadd.f32 %v1751, %v1948
        %1950 = vmatmul.f32.gmra.mxu0 %v1816
        %v1951 = vpop.f32.mrf.mxu0
        %v1952 = vadd.f32 %v1756, %v1951
        %1953 = vmatmul.f32.gmra.mxu0 %v1819
        %v1954 = vpop.f32.mrf.mxu0
        %v1955 = vadd.f32 %v1761, %v1954
        %1956 = vmatmul.f32.gmra.mxu0 %v1822
        %v1957 = vpop.f32.mrf.mxu0
        %v1958 = vadd.f32 %v1766, %v1957
        %1959 = vmatmul.f32.gmra.mxu0 %v1825
        %v1960 = vpop.f32.mrf.mxu0
        %v1961 = vadd.f32 %v1771, %v1960
        %1962 = vdwg.mxu0
        %1963 = vmatpush.msra.mxu0 0.0
        %1964 = vmatpush.msra.mxu0 0.0
        %1965 = vmatpush.msra.mxu0 0.0
        %1966 = vmatpush.msra.mxu0 0.0
        %1967 = vmatpush.msra.mxu0 0.0
        %1968 = vmatpush.msra.mxu0 0.0
        %1969 = vmatpush.msra.mxu0 0.0
        %1970 = vmatpush.msra.mxu0 0.0
        %1971 = vmatpush.msra.mxu0 0.0
        %1972 = vmatpush.msra.mxu0 0.0
        %1973 = vmatpush.msra.mxu0 0.0
        %1974 = vmatpush.msra.mxu0 0.0
        %1975 = vmatpush.msra.mxu0 0.0
        %1976 = vmatpush.msra.mxu0 0.0
        %1977 = vmatpush.msra.mxu0 0.0
        %1978 = vmatpush.msra.mxu0 %v1831
        %1979 = vmatmul.f32.gmra.mxu0 %v1780
        %v1980 = vpop.f32.mrf.mxu0
        %v1981 = vadd.f32 %v1696, %v1980
        %1982 = vmatmul.f32.gmra.mxu0 %v1783
        %v1983 = vpop.f32.mrf.mxu0
        %v1984 = vadd.f32 %v1701, %v1983
        %1985 = vmatmul.f32.gmra.mxu0 %v1786
        %v1986 = vpop.f32.mrf.mxu0
        %v1987 = vadd.f32 %v1706, %v1986
        %1988 = vmatmul.f32.gmra.mxu0 %v1789
        %v1989 = vpop.f32.mrf.mxu0
        %v1990 = vadd.f32 %v1711, %v1989
        %1991 = vmatmul.f32.gmra.mxu0 %v1792
        %v1992 = vpop.f32.mrf.mxu0
        %v1993 = vadd.f32 %v1716, %v1992
        %1994 = vmatmul.f32.gmra.mxu0 %v1795
        %v1995 = vpop.f32.mrf.mxu0
        %v1996 = vadd.f32 %v1721, %v1995
        %1997 = vmatmul.f32.gmra.mxu0 %v1798
        %v1998 = vpop.f32.mrf.mxu0
        %v1999 = vadd.f32 %v1726, %v1998
        %2000 = vmatmul.f32.gmra.mxu0 %v1801
        %v2001 = vpop.f32.mrf.mxu0
        %v2002 = vadd.f32 %v1731, %v2001
        %2003 = vmatmul.f32.gmra.mxu0 %v1804
        %v2004 = vpop.f32.mrf.mxu0
        %v2005 = vadd.f32 %v1736, %v2004
        %2006 = vmatmul.f32.gmra.mxu0 %v1807
        %v2007 = vpop.f32.mrf.mxu0
        %v2008 = vadd.f32 %v1741, %v2007
        %2009 = vmatmul.f32.gmra.mxu0 %v1810
        %v2010 = vpop.f32.mrf.mxu0
        %v2011 = vadd.f32 %v1746, %v2010
        %2012 = vmatmul.f32.gmra.mxu0 %v1813
        %v2013 = vpop.f32.mrf.mxu0
        %v2014 = vadd.f32 %v1751, %v2013
        %2015 = vmatmul.f32.gmra.mxu0 %v1816
        %v2016 = vpop.f32.mrf.mxu0
        %v2017 = vadd.f32 %v1756, %v2016
        %2018 = vmatmul.f32.gmra.mxu0 %v1819
        %v2019 = vpop.f32.mrf.mxu0
        %v2020 = vadd.f32 %v1761, %v2019
        %2021 = vmatmul.f32.gmra.mxu0 %v1822
        %v2022 = vpop.f32.mrf.mxu0
        %v2023 = vadd.f32 %v1766, %v2022
        %2024 = vmatmul.f32.gmra.mxu0 %v1825
        %v2025 = vpop.f32.mrf.mxu0
        %v2026 = vadd.f32 %v1771, %v2025
        %2027 = vdwg.mxu0
        %v2028 = vmax.f32 %v1851, 0.0
        %v2029 = vmax.f32 %v1916, 0.0
        %v2030 = vmax.f32 %v1981, 0.0
        %v2031 = vmax.f32 %v1854, 0.0
        %v2032 = vmax.f32 %v1919, 0.0
        %v2033 = vmax.f32 %v1984, 0.0
        %v2034 = vmax.f32 %v1857, 0.0
        %v2035 = vmax.f32 %v1922, 0.0
        %v2036 = vmax.f32 %v1987, 0.0
        %v2037 = vmax.f32 %v1860, 0.0
        %v2038 = vmax.f32 %v1925, 0.0
        %v2039 = vmax.f32 %v1990, 0.0
        %v2040 = vmax.f32 %v1863, 0.0
        %v2041 = vmax.f32 %v1928, 0.0
        %v2042 = vmax.f32 %v1993, 0.0
        %v2043 = vmax.f32 %v1866, 0.0
        %v2044 = vmax.f32 %v1931, 0.0
        %v2045 = vmax.f32 %v1996, 0.0
        %v2046 = vmax.f32 %v1869, 0.0
        %v2047 = vmax.f32 %v1934, 0.0
        %v2048 = vmax.f32 %v1999, 0.0
        %v2049 = vmax.f32 %v1872, 0.0
        %v2050 = vmax.f32 %v1937, 0.0
        %v2051 = vmax.f32 %v2002, 0.0
        %v2052 = vmax.f32 %v1875, 0.0
        %v2053 = vmax.f32 %v1940, 0.0
        %v2054 = vmax.f32 %v2005, 0.0
        %v2055 = vmax.f32 %v1878, 0.0
        %v2056 = vmax.f32 %v1943, 0.0
        %v2057 = vmax.f32 %v2008, 0.0
        %v2058 = vmax.f32 %v1881, 0.0
        %v2059 = vmax.f32 %v1946, 0.0
        %v2060 = vmax.f32 %v2011, 0.0
        %v2061 = vmax.f32 %v1884, 0.0
        %v2062 = vmax.f32 %v1949, 0.0
        %v2063 = vmax.f32 %v2014, 0.0
        %v2064 = vmax.f32 %v1887, 0.0
        %v2065 = vmax.f32 %v1952, 0.0
        %v2066 = vmax.f32 %v2017, 0.0
        %v2067 = vmax.f32 %v1890, 0.0
        %v2068 = vmax.f32 %v1955, 0.0
        %v2069 = vmax.f32 %v2020, 0.0
        %v2070 = vmax.f32 %v1893, 0.0
        %v2071 = vmax.f32 %v1958, 0.0
        %v2072 = vmax.f32 %v2023, 0.0
        %v2073 = vmax.f32 %v1896, 0.0
        %v2074 = vmax.f32 %v1961, 0.0
        %v2075 = vmax.f32 %v2026, 0.0
        %v2076 = vld [vmem:[%s3 + $0x3] sm:$0x1]
        %2077 = vmatpush.msra.mxu0 %v2073
        %2078 = vmatpush.msra.mxu0 %v2070
        %2079 = vmatpush.msra.mxu0 %v2067
        %2080 = vmatpush.msra.mxu0 %v2064
        %2081 = vmatpush.msra.mxu0 %v2061
        %2082 = vmatpush.msra.mxu0 %v2058
        %2083 = vmatpush.msra.mxu0 %v2055
        %2084 = vmatpush.msra.mxu0 %v2052
        %2085 = vmatpush.msra.mxu0 %v2049
        %2086 = vmatpush.msra.mxu0 %v2046
        %2087 = vmatpush.msra.mxu0 %v2043
        %2088 = vmatpush.msra.mxu0 %v2040
        %2089 = vmatpush.msra.mxu0 %v2037
        %2090 = vmatpush.msra.mxu0 %v2034
        %2091 = vmatpush.msra.mxu0 %v2031
        %2092 = vmatpush.msra.mxu0 %v2028
        %2093 = vmatmul.f32.gmra.mxu0 %v2076
        %v2094 = vpop.f32.mrf.mxu0
        %v2095 = vadd.f32 0.0, %v2094
        %2096 = vdwg.mxu0
        %2097 = vmatpush.msra.mxu0 %v2074
        %2098 = vmatpush.msra.mxu0 %v2071
        %2099 = vmatpush.msra.mxu0 %v2068
        %2100 = vmatpush.msra.mxu0 %v2065
        %2101 = vmatpush.msra.mxu0 %v2062
        %2102 = vmatpush.msra.mxu0 %v2059
        %2103 = vmatpush.msra.mxu0 %v2056
        %2104 = vmatpush.msra.mxu0 %v2053
        %2105 = vmatpush.msra.mxu0 %v2050
        %2106 = vmatpush.msra.mxu0 %v2047
        %2107 = vmatpush.msra.mxu0 %v2044
        %2108 = vmatpush.msra.mxu0 %v2041
        %2109 = vmatpush.msra.mxu0 %v2038
        %2110 = vmatpush.msra.mxu0 %v2035
        %2111 = vmatpush.msra.mxu0 %v2032
        %2112 = vmatpush.msra.mxu0 %v2029
        %2113 = vmatmul.f32.gmra.mxu0 %v2076
        %v2114 = vpop.f32.mrf.mxu0
        %v2115 = vadd.f32 0.0, %v2114
        %2116 = vdwg.mxu0
        %2117 = vmatpush.msra.mxu0 %v2075
        %2118 = vmatpush.msra.mxu0 %v2072
        %2119 = vmatpush.msra.mxu0 %v2069
        %2120 = vmatpush.msra.mxu0 %v2066
        %2121 = vmatpush.msra.mxu0 %v2063
        %2122 = vmatpush.msra.mxu0 %v2060
        %2123 = vmatpush.msra.mxu0 %v2057
        %2124 = vmatpush.msra.mxu0 %v2054
        %2125 = vmatpush.msra.mxu0 %v2051
        %2126 = vmatpush.msra.mxu0 %v2048
        %2127 = vmatpush.msra.mxu0 %v2045
        %2128 = vmatpush.msra.mxu0 %v2042
        %2129 = vmatpush.msra.mxu0 %v2039
        %2130 = vmatpush.msra.mxu0 %v2036
        %2131 = vmatpush.msra.mxu0 %v2033
        %2132 = vmatpush.msra.mxu0 %v2030
        %2133 = vmatmul.f32.gmra.mxu0 %v2076
        %v2134 = vpop.f32.mrf.mxu0
        %v2135 = vadd.f32 0.0, %v2134
        %2136 = vdwg.mxu0
        %v2137 = vadd.f32 %v1658, %v2095
        %v2138 = vadd.f32 %v1659, %v2115
        %v2139 = vadd.f32 %v1660, %v2135
        %v2140 = vld [vmem:[#allocation2] sm:$0x1]
        %s2141 = vtos %v2140
        %v2142 = vstv %s2141
        %v2143 = vadd.f32 %v2137, %v2142
        %v2144 = vadd.f32 %v2138, %v2142
        %v2145 = vadd.f32 %v2139, %v2142
        %v2148 = vrot.slane %v2145, 7
        %v2149 = vrot.slane 0.0, 7
        %vm2152 = vcmask 1040384
        %v2153 = vsel %vm2152, %v2143, %v2148
        %v2154 = vsel %vm2152, %v2144, %v2149
        %v2155 = vlaneseq
        %v2156 = vand.u32 %v2155, 127
        %v2157 = vadd.s32 %v2156, 128
        %v2158 = vsel %vm2152, 256, 64
        %2159 = vset.pattern.permute.xlu0 0
        %2160 = vperm.xlu0 %2159, %v2158
        %v2161 = vpop.permute.xlu0 %2160
        %vm2162 = vcmp.lt.s32.totalorder %v2156, %v2161
        %vm2163 = vcmp.lt.s32.totalorder %v2157, %v2161
        %v2164 = vsel %vm2152, 25.0, 6.0
        %v2165 = vand.u32 2147483647, %v2153
        %v2166 = vand.u32 2147483647, %v2154
        %v2167 = vsel %vm2162, %v2165, -1.0
        %v2168 = vsel %vm2163, %v2166, -1.0
        %vm2171 = vcmp.ge.s32.totalorder %v2167, 1069547520
        %vm2172 = vcmp.ge.s32.totalorder %v2168, 1069547520
        %v2173 = vsel %vm2171, 1.0, 0.0
        %v2174 = vsel %vm2172, 1.0, 0.0
        %vm2175 = vcmask 1041408
        %v2176 = vsel %vm2175, %v2173, 0.0
        %v2177 = vsel %vm2175, %v2174, 0.0
        %v2178 = vadd.f32 %v2176, %v2177
        %2179 = vadd.xlane.f32.xlu0 %v2178
        %v2180 = vpop.xlane.xlu0 %2179
        %vm2181 = vcmp.ge.f32.partialorder %v2180, %v2164
        %v2182 = vsel %vm2181, 1069547520, 0
        %v2183 = vsel %vm2181, 2139095041, 1069547520
        %v2184 = vsub.s32 %v2183, %v2182
        %v2185 = vshra.s32 %v2184, 1
        %v2186 = vadd.s32 %v2182, %v2185
        %2187 = vset.pattern.permute.xlu0 0
        %2188 = vperm.xlu0 %2187, %v2186
        %v2189 = vpop.permute.xlu0 %2188
        %vm2190 = vcmp.ge.s32.totalorder %v2167, %v2189
        %vm2191 = vcmp.ge.s32.totalorder %v2168, %v2189
        %v2192 = vsel %vm2190, 1.0, 0.0
        %v2193 = vsel %vm2191, 1.0, 0.0
        %v2194 = vsel %vm2175, %v2192, 0.0
        %v2195 = vsel %vm2175, %v2193, 0.0
        %v2196 = vadd.f32 %v2194, %v2195
        %2197 = vadd.xlane.f32.xlu0 %v2196
        %v2198 = vpop.xlane.xlu0 %2197
        %vm2199 = vcmp.ge.f32.partialorder %v2198, %v2164
        %v2200 = vsel %vm2199, %v2186, %v2182
        %v2201 = vsel %vm2199, %v2183, %v2186
        %v2202 = vsub.s32 %v2201, %v2200
        %v2203 = vshra.s32 %v2202, 1
        %v2204 = vadd.s32 %v2200, %v2203
        %2205 = vset.pattern.permute.xlu0 0
        %2206 = vperm.xlu0 %2205, %v2204
        %v2207 = vpop.permute.xlu0 %2206
        %vm2208 = vcmp.ge.s32.totalorder %v2167, %v2207
        %vm2209 = vcmp.ge.s32.totalorder %v2168, %v2207
        %v2210 = vsel %vm2208, 1.0, 0.0
        %v2211 = vsel %vm2209, 1.0, 0.0
        %v2212 = vsel %vm2175, %v2210, 0.0
        %v2213 = vsel %vm2175, %v2211, 0.0
        %v2214 = vadd.f32 %v2212, %v2213
        %2215 = vadd.xlane.f32.xlu0 %v2214
        %v2216 = vpop.xlane.xlu0 %2215
        %vm2217 = vcmp.ge.f32.partialorder %v2216, %v2164
        %v2218 = vsel %vm2217, %v2204, %v2200
        %v2219 = vsel %vm2217, %v2201, %v2204
        %v2220 = vsub.s32 %v2219, %v2218
        %v2221 = vshra.s32 %v2220, 1
        %v2222 = vadd.s32 %v2218, %v2221
        %2223 = vset.pattern.permute.xlu0 0
        %2224 = vperm.xlu0 %2223, %v2222
        %v2225 = vpop.permute.xlu0 %2224
        %vm2226 = vcmp.ge.s32.totalorder %v2167, %v2225
        %vm2227 = vcmp.ge.s32.totalorder %v2168, %v2225
        %v2228 = vsel %vm2226, 1.0, 0.0
        %v2229 = vsel %vm2227, 1.0, 0.0
        %v2230 = vsel %vm2175, %v2228, 0.0
        %v2231 = vsel %vm2175, %v2229, 0.0
        %v2232 = vadd.f32 %v2230, %v2231
        %2233 = vadd.xlane.f32.xlu0 %v2232
        %v2234 = vpop.xlane.xlu0 %2233
        %vm2235 = vcmp.ge.f32.partialorder %v2234, %v2164
        %v2236 = vsel %vm2235, %v2222, %v2218
        %v2237 = vsel %vm2235, %v2219, %v2222
        %v2238 = vsub.s32 %v2237, %v2236
        %v2239 = vshra.s32 %v2238, 1
        %v2240 = vadd.s32 %v2236, %v2239
        %2241 = vset.pattern.permute.xlu0 0
        %2242 = vperm.xlu0 %2241, %v2240
        %v2243 = vpop.permute.xlu0 %2242
        %vm2244 = vcmp.ge.s32.totalorder %v2167, %v2243
        %vm2245 = vcmp.ge.s32.totalorder %v2168, %v2243
        %v2246 = vsel %vm2244, 1.0, 0.0
        %v2247 = vsel %vm2245, 1.0, 0.0
        %v2248 = vsel %vm2175, %v2246, 0.0
        %v2249 = vsel %vm2175, %v2247, 0.0
        %v2250 = vadd.f32 %v2248, %v2249
        %2251 = vadd.xlane.f32.xlu0 %v2250
        %v2252 = vpop.xlane.xlu0 %2251
        %vm2253 = vcmp.ge.f32.partialorder %v2252, %v2164
        %v2254 = vsel %vm2253, %v2240, %v2236
        %v2255 = vsel %vm2253, %v2237, %v2240
        %v2256 = vsub.s32 %v2255, %v2254
        %v2257 = vshra.s32 %v2256, 1
        %v2258 = vadd.s32 %v2254, %v2257
        %2259 = vset.pattern.permute.xlu0 0
        %2260 = vperm.xlu0 %2259, %v2258
        %v2261 = vpop.permute.xlu0 %2260
        %vm2262 = vcmp.ge.s32.totalorder %v2167, %v2261
        %vm2263 = vcmp.ge.s32.totalorder %v2168, %v2261
        %v2264 = vsel %vm2262, 1.0, 0.0
        %v2265 = vsel %vm2263, 1.0, 0.0
        %v2266 = vsel %vm2175, %v2264, 0.0
        %v2267 = vsel %vm2175, %v2265, 0.0
        %v2268 = vadd.f32 %v2266, %v2267
        %2269 = vadd.xlane.f32.xlu0 %v2268
        %v2270 = vpop.xlane.xlu0 %2269
        %vm2271 = vcmp.ge.f32.partialorder %v2270, %v2164
        %v2272 = vsel %vm2271, %v2258, %v2254
        %v2273 = vsel %vm2271, %v2255, %v2258
        %v2274 = vsub.s32 %v2273, %v2272
        %v2275 = vshra.s32 %v2274, 1
        %v2276 = vadd.s32 %v2272, %v2275
        %2277 = vset.pattern.permute.xlu0 0
        %2278 = vperm.xlu0 %2277, %v2276
        %v2279 = vpop.permute.xlu0 %2278
        %vm2280 = vcmp.ge.s32.totalorder %v2167, %v2279
        %vm2281 = vcmp.ge.s32.totalorder %v2168, %v2279
        %v2282 = vsel %vm2280, 1.0, 0.0
        %v2283 = vsel %vm2281, 1.0, 0.0
        %v2284 = vsel %vm2175, %v2282, 0.0
        %v2285 = vsel %vm2175, %v2283, 0.0
        %v2286 = vadd.f32 %v2284, %v2285
        %2287 = vadd.xlane.f32.xlu0 %v2286
        %v2288 = vpop.xlane.xlu0 %2287
        %vm2289 = vcmp.ge.f32.partialorder %v2288, %v2164
        %v2290 = vsel %vm2289, %v2276, %v2272
        %v2291 = vsel %vm2289, %v2273, %v2276
        %v2292 = vsub.s32 %v2291, %v2290
        %v2293 = vshra.s32 %v2292, 1
        %v2294 = vadd.s32 %v2290, %v2293
        %2295 = vset.pattern.permute.xlu0 0
        %2296 = vperm.xlu0 %2295, %v2294
        %v2297 = vpop.permute.xlu0 %2296
        %vm2298 = vcmp.ge.s32.totalorder %v2167, %v2297
        %vm2299 = vcmp.ge.s32.totalorder %v2168, %v2297
        %v2300 = vsel %vm2298, 1.0, 0.0
        %v2301 = vsel %vm2299, 1.0, 0.0
        %v2302 = vsel %vm2175, %v2300, 0.0
        %v2303 = vsel %vm2175, %v2301, 0.0
        %v2304 = vadd.f32 %v2302, %v2303
        %2305 = vadd.xlane.f32.xlu0 %v2304
        %v2306 = vpop.xlane.xlu0 %2305
        %vm2307 = vcmp.ge.f32.partialorder %v2306, %v2164
        %v2308 = vsel %vm2307, %v2294, %v2290
        %v2309 = vsel %vm2307, %v2291, %v2294
        %v2310 = vsub.s32 %v2309, %v2308
        %v2311 = vshra.s32 %v2310, 1
        %v2312 = vadd.s32 %v2308, %v2311
        %2313 = vset.pattern.permute.xlu0 0
        %2314 = vperm.xlu0 %2313, %v2312
        %v2315 = vpop.permute.xlu0 %2314
        %vm2316 = vcmp.ge.s32.totalorder %v2167, %v2315
        %vm2317 = vcmp.ge.s32.totalorder %v2168, %v2315
        %v2318 = vsel %vm2316, 1.0, 0.0
        %v2319 = vsel %vm2317, 1.0, 0.0
        %v2320 = vsel %vm2175, %v2318, 0.0
        %v2321 = vsel %vm2175, %v2319, 0.0
        %v2322 = vadd.f32 %v2320, %v2321
        %2323 = vadd.xlane.f32.xlu0 %v2322
        %v2324 = vpop.xlane.xlu0 %2323
        %vm2325 = vcmp.ge.f32.partialorder %v2324, %v2164
        %v2326 = vsel %vm2325, %v2312, %v2308
        %v2327 = vsel %vm2325, %v2309, %v2312
        %v2328 = vsub.s32 %v2327, %v2326
        %v2329 = vshra.s32 %v2328, 1
        %v2330 = vadd.s32 %v2326, %v2329
        %2331 = vset.pattern.permute.xlu0 0
        %2332 = vperm.xlu0 %2331, %v2330
        %v2333 = vpop.permute.xlu0 %2332
        %vm2334 = vcmp.ge.s32.totalorder %v2167, %v2333
        %vm2335 = vcmp.ge.s32.totalorder %v2168, %v2333
        %v2336 = vsel %vm2334, 1.0, 0.0
        %v2337 = vsel %vm2335, 1.0, 0.0
        %v2338 = vsel %vm2175, %v2336, 0.0
        %v2339 = vsel %vm2175, %v2337, 0.0
        %v2340 = vadd.f32 %v2338, %v2339
        %2341 = vadd.xlane.f32.xlu0 %v2340
        %v2342 = vpop.xlane.xlu0 %2341
        %vm2343 = vcmp.ge.f32.partialorder %v2342, %v2164
        %v2344 = vsel %vm2343, %v2330, %v2326
        %v2345 = vsel %vm2343, %v2327, %v2330
        %v2346 = vsub.s32 %v2345, %v2344
        %v2347 = vshra.s32 %v2346, 1
        %v2348 = vadd.s32 %v2344, %v2347
        %2349 = vset.pattern.permute.xlu0 0
        %2350 = vperm.xlu0 %2349, %v2348
        %v2351 = vpop.permute.xlu0 %2350
        %vm2352 = vcmp.ge.s32.totalorder %v2167, %v2351
        %vm2353 = vcmp.ge.s32.totalorder %v2168, %v2351
        %v2354 = vsel %vm2352, 1.0, 0.0
        %v2355 = vsel %vm2353, 1.0, 0.0
        %v2356 = vsel %vm2175, %v2354, 0.0
        %v2357 = vsel %vm2175, %v2355, 0.0
        %v2358 = vadd.f32 %v2356, %v2357
        %2359 = vadd.xlane.f32.xlu0 %v2358
        %v2360 = vpop.xlane.xlu0 %2359
        %vm2361 = vcmp.ge.f32.partialorder %v2360, %v2164
        %v2362 = vsel %vm2361, %v2348, %v2344
        %v2363 = vsel %vm2361, %v2345, %v2348
        %v2364 = vsub.s32 %v2363, %v2362
        %v2365 = vshra.s32 %v2364, 1
        %v2366 = vadd.s32 %v2362, %v2365
        %2367 = vset.pattern.permute.xlu0 0
        %2368 = vperm.xlu0 %2367, %v2366
        %v2369 = vpop.permute.xlu0 %2368
        %vm2370 = vcmp.ge.s32.totalorder %v2167, %v2369
        %vm2371 = vcmp.ge.s32.totalorder %v2168, %v2369
        %v2372 = vsel %vm2370, 1.0, 0.0
        %v2373 = vsel %vm2371, 1.0, 0.0
        %v2374 = vsel %vm2175, %v2372, 0.0
        %v2375 = vsel %vm2175, %v2373, 0.0
        %v2376 = vadd.f32 %v2374, %v2375
        %2377 = vadd.xlane.f32.xlu0 %v2376
        %v2378 = vpop.xlane.xlu0 %2377
        %vm2379 = vcmp.ge.f32.partialorder %v2378, %v2164
        %v2380 = vsel %vm2379, %v2366, %v2362
        %v2381 = vsel %vm2379, %v2363, %v2366
        %v2382 = vsub.s32 %v2381, %v2380
        %v2383 = vshra.s32 %v2382, 1
        %v2384 = vadd.s32 %v2380, %v2383
        %2385 = vset.pattern.permute.xlu0 0
        %2386 = vperm.xlu0 %2385, %v2384
        %v2387 = vpop.permute.xlu0 %2386
        %vm2388 = vcmp.ge.s32.totalorder %v2167, %v2387
        %vm2389 = vcmp.ge.s32.totalorder %v2168, %v2387
        %v2390 = vsel %vm2388, 1.0, 0.0
        %v2391 = vsel %vm2389, 1.0, 0.0
        %v2392 = vsel %vm2175, %v2390, 0.0
        %v2393 = vsel %vm2175, %v2391, 0.0
        %v2394 = vadd.f32 %v2392, %v2393
        %2395 = vadd.xlane.f32.xlu0 %v2394
        %v2396 = vpop.xlane.xlu0 %2395
        %vm2397 = vcmp.ge.f32.partialorder %v2396, %v2164
        %v2398 = vsel %vm2397, %v2384, %v2380
        %v2399 = vsel %vm2397, %v2381, %v2384
        %v2400 = vsub.s32 %v2399, %v2398
        %v2401 = vshra.s32 %v2400, 1
        %v2402 = vadd.s32 %v2398, %v2401
        %2403 = vset.pattern.permute.xlu0 0
        %2404 = vperm.xlu0 %2403, %v2402
        %v2405 = vpop.permute.xlu0 %2404
        %vm2406 = vcmp.ge.s32.totalorder %v2167, %v2405
        %vm2407 = vcmp.ge.s32.totalorder %v2168, %v2405
        %v2408 = vsel %vm2406, 1.0, 0.0
        %v2409 = vsel %vm2407, 1.0, 0.0
        %v2410 = vsel %vm2175, %v2408, 0.0
        %v2411 = vsel %vm2175, %v2409, 0.0
        %v2412 = vadd.f32 %v2410, %v2411
        %2413 = vadd.xlane.f32.xlu0 %v2412
        %v2414 = vpop.xlane.xlu0 %2413
        %vm2415 = vcmp.ge.f32.partialorder %v2414, %v2164
        %v2416 = vsel %vm2415, %v2402, %v2398
        %v2417 = vsel %vm2415, %v2399, %v2402
        %v2418 = vsub.s32 %v2417, %v2416
        %v2419 = vshra.s32 %v2418, 1
        %v2420 = vadd.s32 %v2416, %v2419
        %2421 = vset.pattern.permute.xlu0 0
        %2422 = vperm.xlu0 %2421, %v2420
        %v2423 = vpop.permute.xlu0 %2422
        %vm2424 = vcmp.ge.s32.totalorder %v2167, %v2423
        %vm2425 = vcmp.ge.s32.totalorder %v2168, %v2423
        %v2426 = vsel %vm2424, 1.0, 0.0
        %v2427 = vsel %vm2425, 1.0, 0.0
        %v2428 = vsel %vm2175, %v2426, 0.0
        %v2429 = vsel %vm2175, %v2427, 0.0
        %v2430 = vadd.f32 %v2428, %v2429
        %2431 = vadd.xlane.f32.xlu0 %v2430
        %v2432 = vpop.xlane.xlu0 %2431
        %vm2433 = vcmp.ge.f32.partialorder %v2432, %v2164
        %v2434 = vsel %vm2433, %v2420, %v2416
        %v2435 = vsel %vm2433, %v2417, %v2420
        %v2436 = vsub.s32 %v2435, %v2434
        %v2437 = vshra.s32 %v2436, 1
        %v2438 = vadd.s32 %v2434, %v2437
        %2439 = vset.pattern.permute.xlu0 0
        %2440 = vperm.xlu0 %2439, %v2438
        %v2441 = vpop.permute.xlu0 %2440
        %vm2442 = vcmp.ge.s32.totalorder %v2167, %v2441
        %vm2443 = vcmp.ge.s32.totalorder %v2168, %v2441
        %v2444 = vsel %vm2442, 1.0, 0.0
        %v2445 = vsel %vm2443, 1.0, 0.0
        %v2446 = vsel %vm2175, %v2444, 0.0
        %v2447 = vsel %vm2175, %v2445, 0.0
        %v2448 = vadd.f32 %v2446, %v2447
        %2449 = vadd.xlane.f32.xlu0 %v2448
        %v2450 = vpop.xlane.xlu0 %2449
        %vm2451 = vcmp.ge.f32.partialorder %v2450, %v2164
        %v2452 = vsel %vm2451, %v2438, %v2434
        %v2453 = vsel %vm2451, %v2435, %v2438
        %v2454 = vsub.s32 %v2453, %v2452
        %v2455 = vshra.s32 %v2454, 1
        %v2456 = vadd.s32 %v2452, %v2455
        %2457 = vset.pattern.permute.xlu0 0
        %2458 = vperm.xlu0 %2457, %v2456
        %v2459 = vpop.permute.xlu0 %2458
        %vm2460 = vcmp.ge.s32.totalorder %v2167, %v2459
        %vm2461 = vcmp.ge.s32.totalorder %v2168, %v2459
        %v2462 = vsel %vm2460, 1.0, 0.0
        %v2463 = vsel %vm2461, 1.0, 0.0
        %v2464 = vsel %vm2175, %v2462, 0.0
        %v2465 = vsel %vm2175, %v2463, 0.0
        %v2466 = vadd.f32 %v2464, %v2465
        %2467 = vadd.xlane.f32.xlu0 %v2466
        %v2468 = vpop.xlane.xlu0 %2467
        %vm2469 = vcmp.ge.f32.partialorder %v2468, %v2164
        %v2470 = vsel %vm2469, %v2456, %v2452
        %v2471 = vsel %vm2469, %v2453, %v2456
        %v2472 = vsub.s32 %v2471, %v2470
        %v2473 = vshra.s32 %v2472, 1
        %v2474 = vadd.s32 %v2470, %v2473
        %2475 = vset.pattern.permute.xlu0 0
        %2476 = vperm.xlu0 %2475, %v2474
        %v2477 = vpop.permute.xlu0 %2476
        %vm2478 = vcmp.ge.s32.totalorder %v2167, %v2477
        %vm2479 = vcmp.ge.s32.totalorder %v2168, %v2477
        %v2480 = vsel %vm2478, 1.0, 0.0
        %v2481 = vsel %vm2479, 1.0, 0.0
        %v2482 = vsel %vm2175, %v2480, 0.0
        %v2483 = vsel %vm2175, %v2481, 0.0
        %v2484 = vadd.f32 %v2482, %v2483
        %2485 = vadd.xlane.f32.xlu0 %v2484
        %v2486 = vpop.xlane.xlu0 %2485
        %vm2487 = vcmp.ge.f32.partialorder %v2486, %v2164
        %v2488 = vsel %vm2487, %v2474, %v2470
        %v2489 = vsel %vm2487, %v2471, %v2474
        %v2490 = vsub.s32 %v2489, %v2488
        %v2491 = vshra.s32 %v2490, 1
        %v2492 = vadd.s32 %v2488, %v2491
        %2493 = vset.pattern.permute.xlu0 0
        %2494 = vperm.xlu0 %2493, %v2492
        %v2495 = vpop.permute.xlu0 %2494
        %vm2496 = vcmp.ge.s32.totalorder %v2167, %v2495
        %vm2497 = vcmp.ge.s32.totalorder %v2168, %v2495
        %v2498 = vsel %vm2496, 1.0, 0.0
        %v2499 = vsel %vm2497, 1.0, 0.0
        %v2500 = vsel %vm2175, %v2498, 0.0
        %v2501 = vsel %vm2175, %v2499, 0.0
        %v2502 = vadd.f32 %v2500, %v2501
        %2503 = vadd.xlane.f32.xlu0 %v2502
        %v2504 = vpop.xlane.xlu0 %2503
        %vm2505 = vcmp.ge.f32.partialorder %v2504, %v2164
        %v2506 = vsel %vm2505, %v2492, %v2488
        %v2507 = vsel %vm2505, %v2489, %v2492
        %v2508 = vsub.s32 %v2507, %v2506
        %v2509 = vshra.s32 %v2508, 1
        %v2510 = vadd.s32 %v2506, %v2509
        %2511 = vset.pattern.permute.xlu0 0
        %2512 = vperm.xlu0 %2511, %v2510
        %v2513 = vpop.permute.xlu0 %2512
        %vm2514 = vcmp.ge.s32.totalorder %v2167, %v2513
        %vm2515 = vcmp.ge.s32.totalorder %v2168, %v2513
        %v2516 = vsel %vm2514, 1.0, 0.0
        %v2517 = vsel %vm2515, 1.0, 0.0
        %v2518 = vsel %vm2175, %v2516, 0.0
        %v2519 = vsel %vm2175, %v2517, 0.0
        %v2520 = vadd.f32 %v2518, %v2519
        %2521 = vadd.xlane.f32.xlu0 %v2520
        %v2522 = vpop.xlane.xlu0 %2521
        %vm2523 = vcmp.ge.f32.partialorder %v2522, %v2164
        %v2524 = vsel %vm2523, %v2510, %v2506
        %v2525 = vsel %vm2523, %v2507, %v2510
        %v2526 = vsub.s32 %v2525, %v2524
        %v2527 = vshra.s32 %v2526, 1
        %v2528 = vadd.s32 %v2524, %v2527
        %2529 = vset.pattern.permute.xlu0 0
        %2530 = vperm.xlu0 %2529, %v2528
        %v2531 = vpop.permute.xlu0 %2530
        %vm2532 = vcmp.ge.s32.totalorder %v2167, %v2531
        %vm2533 = vcmp.ge.s32.totalorder %v2168, %v2531
        %v2534 = vsel %vm2532, 1.0, 0.0
        %v2535 = vsel %vm2533, 1.0, 0.0
        %v2536 = vsel %vm2175, %v2534, 0.0
        %v2537 = vsel %vm2175, %v2535, 0.0
        %v2538 = vadd.f32 %v2536, %v2537
        %2539 = vadd.xlane.f32.xlu0 %v2538
        %v2540 = vpop.xlane.xlu0 %2539
        %vm2541 = vcmp.ge.f32.partialorder %v2540, %v2164
        %v2542 = vsel %vm2541, %v2528, %v2524
        %v2543 = vsel %vm2541, %v2525, %v2528
        %v2544 = vsub.s32 %v2543, %v2542
        %v2545 = vshra.s32 %v2544, 1
        %v2546 = vadd.s32 %v2542, %v2545
        %2547 = vset.pattern.permute.xlu0 0
        %2548 = vperm.xlu0 %2547, %v2546
        %v2549 = vpop.permute.xlu0 %2548
        %vm2550 = vcmp.ge.s32.totalorder %v2167, %v2549
        %vm2551 = vcmp.ge.s32.totalorder %v2168, %v2549
        %v2552 = vsel %vm2550, 1.0, 0.0
        %v2553 = vsel %vm2551, 1.0, 0.0
        %v2554 = vsel %vm2175, %v2552, 0.0
        %v2555 = vsel %vm2175, %v2553, 0.0
        %v2556 = vadd.f32 %v2554, %v2555
        %2557 = vadd.xlane.f32.xlu0 %v2556
        %v2558 = vpop.xlane.xlu0 %2557
        %vm2559 = vcmp.ge.f32.partialorder %v2558, %v2164
        %v2560 = vsel %vm2559, %v2546, %v2542
        %v2561 = vsel %vm2559, %v2543, %v2546
        %v2562 = vsub.s32 %v2561, %v2560
        %v2563 = vshra.s32 %v2562, 1
        %v2564 = vadd.s32 %v2560, %v2563
        %2565 = vset.pattern.permute.xlu0 0
        %2566 = vperm.xlu0 %2565, %v2564
        %v2567 = vpop.permute.xlu0 %2566
        %vm2568 = vcmp.ge.s32.totalorder %v2167, %v2567
        %vm2569 = vcmp.ge.s32.totalorder %v2168, %v2567
        %v2570 = vsel %vm2568, 1.0, 0.0
        %v2571 = vsel %vm2569, 1.0, 0.0
        %v2572 = vsel %vm2175, %v2570, 0.0
        %v2573 = vsel %vm2175, %v2571, 0.0
        %v2574 = vadd.f32 %v2572, %v2573
        %2575 = vadd.xlane.f32.xlu0 %v2574
        %v2576 = vpop.xlane.xlu0 %2575
        %vm2577 = vcmp.ge.f32.partialorder %v2576, %v2164
        %v2578 = vsel %vm2577, %v2564, %v2560
        %v2579 = vsel %vm2577, %v2561, %v2564
        %v2580 = vsub.s32 %v2579, %v2578
        %v2581 = vshra.s32 %v2580, 1
        %v2582 = vadd.s32 %v2578, %v2581
        %2583 = vset.pattern.permute.xlu0 0
        %2584 = vperm.xlu0 %2583, %v2582
        %v2585 = vpop.permute.xlu0 %2584
        %vm2586 = vcmp.ge.s32.totalorder %v2167, %v2585
        %vm2587 = vcmp.ge.s32.totalorder %v2168, %v2585
        %v2588 = vsel %vm2586, 1.0, 0.0
        %v2589 = vsel %vm2587, 1.0, 0.0
        %v2590 = vsel %vm2175, %v2588, 0.0
        %v2591 = vsel %vm2175, %v2589, 0.0
        %v2592 = vadd.f32 %v2590, %v2591
        %2593 = vadd.xlane.f32.xlu0 %v2592
        %v2594 = vpop.xlane.xlu0 %2593
        %vm2595 = vcmp.ge.f32.partialorder %v2594, %v2164
        %v2596 = vsel %vm2595, %v2582, %v2578
        %v2597 = vsel %vm2595, %v2579, %v2582
        %v2598 = vsub.s32 %v2597, %v2596
        %v2599 = vshra.s32 %v2598, 1
        %v2600 = vadd.s32 %v2596, %v2599
        %2601 = vset.pattern.permute.xlu0 0
        %2602 = vperm.xlu0 %2601, %v2600
        %v2603 = vpop.permute.xlu0 %2602
        %vm2604 = vcmp.ge.s32.totalorder %v2167, %v2603
        %vm2605 = vcmp.ge.s32.totalorder %v2168, %v2603
        %v2606 = vsel %vm2604, 1.0, 0.0
        %v2607 = vsel %vm2605, 1.0, 0.0
        %v2608 = vsel %vm2175, %v2606, 0.0
        %v2609 = vsel %vm2175, %v2607, 0.0
        %v2610 = vadd.f32 %v2608, %v2609
        %2611 = vadd.xlane.f32.xlu0 %v2610
        %v2612 = vpop.xlane.xlu0 %2611
        %vm2613 = vcmp.ge.f32.partialorder %v2612, %v2164
        %v2614 = vsel %vm2613, %v2600, %v2596
        %v2615 = vsel %vm2613, %v2597, %v2600
        %v2616 = vsub.s32 %v2615, %v2614
        %v2617 = vshra.s32 %v2616, 1
        %v2618 = vadd.s32 %v2614, %v2617
        %2619 = vset.pattern.permute.xlu0 0
        %2620 = vperm.xlu0 %2619, %v2618
        %v2621 = vpop.permute.xlu0 %2620
        %vm2622 = vcmp.ge.s32.totalorder %v2167, %v2621
        %vm2623 = vcmp.ge.s32.totalorder %v2168, %v2621
        %v2624 = vsel %vm2622, 1.0, 0.0
        %v2625 = vsel %vm2623, 1.0, 0.0
        %v2626 = vsel %vm2175, %v2624, 0.0
        %v2627 = vsel %vm2175, %v2625, 0.0
        %v2628 = vadd.f32 %v2626, %v2627
        %2629 = vadd.xlane.f32.xlu0 %v2628
        %v2630 = vpop.xlane.xlu0 %2629
        %vm2631 = vcmp.ge.f32.partialorder %v2630, %v2164
        %v2632 = vsel %vm2631, %v2618, %v2614
        %v2633 = vsel %vm2631, %v2615, %v2618
        %v2634 = vsub.s32 %v2633, %v2632
        %v2635 = vshra.s32 %v2634, 1
        %v2636 = vadd.s32 %v2632, %v2635
        %2637 = vset.pattern.permute.xlu0 0
        %2638 = vperm.xlu0 %2637, %v2636
        %v2639 = vpop.permute.xlu0 %2638
        %vm2640 = vcmp.ge.s32.totalorder %v2167, %v2639
        %vm2641 = vcmp.ge.s32.totalorder %v2168, %v2639
        %v2642 = vsel %vm2640, 1.0, 0.0
        %v2643 = vsel %vm2641, 1.0, 0.0
        %v2644 = vsel %vm2175, %v2642, 0.0
        %v2645 = vsel %vm2175, %v2643, 0.0
        %v2646 = vadd.f32 %v2644, %v2645
        %2647 = vadd.xlane.f32.xlu0 %v2646
        %v2648 = vpop.xlane.xlu0 %2647
        %vm2649 = vcmp.ge.f32.partialorder %v2648, %v2164
        %v2650 = vsel %vm2649, %v2636, %v2632
        %v2651 = vsel %vm2649, %v2633, %v2636
        %v2652 = vsub.s32 %v2651, %v2650
        %v2653 = vshra.s32 %v2652, 1
        %v2654 = vadd.s32 %v2650, %v2653
        %2655 = vset.pattern.permute.xlu0 0
        %2656 = vperm.xlu0 %2655, %v2654
        %v2657 = vpop.permute.xlu0 %2656
        %vm2658 = vcmp.ge.s32.totalorder %v2167, %v2657
        %vm2659 = vcmp.ge.s32.totalorder %v2168, %v2657
        %v2660 = vsel %vm2658, 1.0, 0.0
        %v2661 = vsel %vm2659, 1.0, 0.0
        %v2662 = vsel %vm2175, %v2660, 0.0
        %v2663 = vsel %vm2175, %v2661, 0.0
        %v2664 = vadd.f32 %v2662, %v2663
        %2665 = vadd.xlane.f32.xlu0 %v2664
        %v2666 = vpop.xlane.xlu0 %2665
        %vm2667 = vcmp.ge.f32.partialorder %v2666, %v2164
        %v2668 = vsel %vm2667, %v2654, %v2650
        %v2669 = vsel %vm2667, %v2651, %v2654
        %v2670 = vsub.s32 %v2669, %v2668
        %v2671 = vshra.s32 %v2670, 1
        %v2672 = vadd.s32 %v2668, %v2671
        %2673 = vset.pattern.permute.xlu0 0
        %2674 = vperm.xlu0 %2673, %v2672
        %v2675 = vpop.permute.xlu0 %2674
        %vm2676 = vcmp.ge.s32.totalorder %v2167, %v2675
        %vm2677 = vcmp.ge.s32.totalorder %v2168, %v2675
        %v2678 = vsel %vm2676, 1.0, 0.0
        %v2679 = vsel %vm2677, 1.0, 0.0
        %v2680 = vsel %vm2175, %v2678, 0.0
        %v2681 = vsel %vm2175, %v2679, 0.0
        %v2682 = vadd.f32 %v2680, %v2681
        %2683 = vadd.xlane.f32.xlu0 %v2682
        %v2684 = vpop.xlane.xlu0 %2683
        %vm2685 = vcmp.ge.f32.partialorder %v2684, %v2164
        %v2686 = vsel %vm2685, %v2672, %v2668
        %v2687 = vsel %vm2685, %v2669, %v2672
        %v2688 = vsub.s32 %v2687, %v2686
        %v2689 = vshra.s32 %v2688, 1
        %v2690 = vadd.s32 %v2686, %v2689
        %2691 = vset.pattern.permute.xlu0 0
        %2692 = vperm.xlu0 %2691, %v2690
        %v2693 = vpop.permute.xlu0 %2692
        %vm2694 = vcmp.ge.s32.totalorder %v2167, %v2693
        %vm2695 = vcmp.ge.s32.totalorder %v2168, %v2693
        %v2696 = vsel %vm2694, 1.0, 0.0
        %v2697 = vsel %vm2695, 1.0, 0.0
        %v2698 = vsel %vm2175, %v2696, 0.0
        %v2699 = vsel %vm2175, %v2697, 0.0
        %v2700 = vadd.f32 %v2698, %v2699
        %2701 = vadd.xlane.f32.xlu0 %v2700
        %v2702 = vpop.xlane.xlu0 %2701
        %vm2703 = vcmp.ge.f32.partialorder %v2702, %v2164
        %v2704 = vsel %vm2703, %v2690, %v2686
        %v2705 = vsel %vm2703, %v2687, %v2690
        %v2706 = vsub.s32 %v2705, %v2704
        %v2707 = vshra.s32 %v2706, 1
        %v2708 = vadd.s32 %v2704, %v2707
        %2709 = vset.pattern.permute.xlu0 0
        %2710 = vperm.xlu0 %2709, %v2708
        %v2711 = vpop.permute.xlu0 %2710
        %vm2712 = vcmp.ge.s32.totalorder %v2167, %v2711
        %vm2713 = vcmp.ge.s32.totalorder %v2168, %v2711
        %v2714 = vsel %vm2712, 1.0, 0.0
        %v2715 = vsel %vm2713, 1.0, 0.0
        %v2716 = vsel %vm2175, %v2714, 0.0
        %v2717 = vsel %vm2175, %v2715, 0.0
        %v2718 = vadd.f32 %v2716, %v2717
        %2719 = vadd.xlane.f32.xlu0 %v2718
        %v2720 = vpop.xlane.xlu0 %2719
        %vm2721 = vcmp.ge.f32.partialorder %v2720, %v2164
        %v2722 = vsel %vm2721, %v2708, %v2704
        %2724 = vset.pattern.permute.xlu0 0
        %2725 = vperm.xlu0 %2724, %v2722
        %v2726 = vpop.permute.xlu0 %2725
        %vm2728 = vcmp.gt.f32.partialorder %v2167, %v2726
        %vm2729 = vcmp.gt.f32.partialorder %v2168, %v2726
        %v2730 = vsel %vm2728, 1.0, 0.0
        %v2731 = vsel %vm2729, 1.0, 0.0
        %v2732 = vsel %vm2175, %v2730, 0.0
        %v2733 = vsel %vm2175, %v2731, 0.0
        %v2734 = vadd.f32 %v2732, %v2733
        %2735 = vadd.xlane.f32.xlu0 %v2734
        %v2736 = vpop.xlane.xlu0 %2735
        %v2737 = vsel %vm2728, %v2167, 0.0
        %v2738 = vsel %vm2729, %v2168, 0.0
        %v2739 = vsel %vm2175, %v2737, 0.0
        %v2740 = vsel %vm2175, %v2738, 0.0
        %v2741 = vadd.f32 %v2739, %v2740
        %2742 = vadd.xlane.f32.xlu0 %v2741
        %v2743 = vpop.xlane.xlu0 %2742
        %v2744 = vsub.f32 %v2164, %v2736
        %v2745 = vmul.f32 %v2744, %v2722
        %v2746 = vadd.f32 %v2743, %v2745
        %v2747 = vrcp.pop %v2164
        %v2748 = vmul.f32 %v2164, %v2747
        %v2749 = vsub.f32 1.0, %v2748
        %v2750 = vmul.f32 %v2747, %v2749
        %v2751 = vadd.f32 %v2747, %v2750
        %vm2752 = vweird.f32 %v2164
        %vm2753 = vweird.f32 %v2747
        %vm2754 = vmor %vm2752, %vm2753
        %v2755 = vsel %vm2754, %v2747, %v2751
        %v2756 = vand.u32 2147483647, %v2164
        %vm2757 = vcmp.eq.f32.partialorder %v2756, 8.507059e+37
        %v2758 = vand.u32 %v2164, 2147483648
        %v2759 = vor.u32 1.1754944e-38, %v2758
        %v2760 = vsel %vm2757, %v2759, %v2755
        %v2761 = vmul.f32 %v2746, %v2760
        %vm2762 = vcmask 1024
        %v2763 = vsel %vm2762, %v2761, 0.0
        %v2764 = vrot.slane %v2763, 4
        %v2765 = vadd.f32 %v2763, %v2764
        %v2766 = vrot.slane %v2765, 2
        %v2767 = vadd.f32 %v2765, %v2766
        %v2768 = vrot.slane %v2767, 1
        %v2769 = vadd.f32 %v2767, %v2768
        %v2770 = vmul.f32 %v2769, 0.5
        %2772 = vset.pattern.permute.xlu0 0
        %2773 = vperm.xlu0 %2772, %v2770
        %v2774 = vpop.permute.xlu0 %2773
        %2776 = vst [vmem:[%s218] sm:$0x1] %v2774
        %s2777 = sand.u32 %s139, 1
        %s2778 = scalar_lea.sflag [#allocation4], %s2777
        %s2779 = sand.u32 %s139, 1
        %s2780 = scalar_lea.vmem [#allocation3], %s2779
        // Predicated region
        $region41: #{tpu_custom_call.1} parent=39 // pred_check
          %p2781 = pneg %p149
        $region42: #{tpu_custom_call.1} parent=39 // pred_check_branch
          %2783 = sbr.rel (%p2781) target = $region44
        $region43: #{tpu_custom_call.1} parent=39 // pred_region
          %2785 = vsyncadd %s2778, 0
          %s2786 = scalar_lea.hbm %s5, %s21
          %s2788 = sshll.u32 %s2780, 4
          %s2789 = int_to_ptr.vmem [resolvable:$true] %s2788
          %s2790 = sshll.u32 %s2786, 4
          %s2791 = int_to_ptr.hbm [resolvable:$true] %s2790
          %2793 = dma.vmem_to_hbm [thread:$0]  %s2789, 16, %s2791, %s2778
        $region44: #{tpu_custom_call.1} parent=39 // pred_fallthru
          _
      $region40: #{tpu_custom_call.1} parent=5 // pred_fallthru
        _
      %p2794 = scmp.le.s32.totalorder 2, %s16
      // Predicated region
      $region45: #{tpu_custom_call.1} parent=5 // pred_check
        %p2795 = pneg %p2794
      $region46: #{tpu_custom_call.1} parent=5 // pred_check_branch
        %2797 = sbr.rel (%p2795) target = $region48
      $region47: #{tpu_custom_call.1} parent=5 // pred_region
        %s2798 = ssub.s32 %s16, 2
        // Predicated region
        $region49: #{tpu_custom_call.1} parent=47 // pred_check
          %p2799 = pneg %p155
        $region50: #{tpu_custom_call.1} parent=47 // pred_check_branch
          %2801 = sbr.rel (%p2799) target = $region52
        $region51: #{tpu_custom_call.1} parent=47 // pred_region
          %s2802 = sand.u32 %s140, 1
          %s2803 = scalar_lea.sflag [#allocation4], %s2802
          %s2804 = sand.u32 %s140, 1
          %s2805 = scalar_lea.vmem [#allocation3], %s2804
          %2807 = dma.done %s2803, 16
        $region52: #{tpu_custom_call.1} parent=47 // pred_fallthru
          _
      $region48: #{tpu_custom_call.1} parent=5 // pred_fallthru
        _
    $region6: #{tpu_custom_call.1} parent=1 // loop_footer
      %s20 = sadd.s32 1, %s16
    $region7: #{tpu_custom_call.1} parent=1 // loop_footer_branch
      %15 = sbr.rel target = $region3
    $region8: #{tpu_custom_call.1} parent=1 // loop_exit
      _
    %2808 = vsyncpa [#allocation4], 1
    %s2809 = scalar_lea.sflag [#allocation4], 1
    %2810 = vsyncpa %s2809, 1

</llo_original>
